<compile_context>
chip_gen: v5e
topology: v5e:2x2
jax: 0.10.0
libtpu: 0.0.40
codegen_flags: <defaults>
</compile_context>

<pallas_src>
import functools

import jax
import jax.numpy as jnp
from jax import lax
from jax.experimental import pallas as pl
from jax.experimental.pallas import tpu as pltpu

NUM_HEADS = 4


def _cross_modal_kernel(xa_ref, xb_ref,
                        qaw_ref, qab_ref, kvw_ref, kvb_ref,
                        caw_ref, cab_ref, ow_ref, ob_ref, gw_ref, gb_ref,
                        out_ref, o_scr, *, num_heads, q_chunk, compute_dtype):
    f32 = jnp.float32
    NN = ((1,), (0,))   # (M,K) @ (K,N)
    TN = ((0,), (0,))   # contract sublane dims of both (scores)
    NT = ((1,), (1,))   # contract lane dims of both (P @ V)

    def mm(a, b, dims=NN):
        # Operands are pre-cast to compute_dtype (hoisted); accumulate in f32.
        return lax.dot_general(a, b, dimension_numbers=(dims, ((), ())),
                               preferred_element_type=f32)

    c, hw = out_ref.shape
    d = c // num_heads

    # --- projections (conv_a folded into Q, conv_b folded into stacked K/V) --
    q = (mm(qaw_ref[...], xa_ref[...].astype(compute_dtype))
         + qab_ref[...]).astype(compute_dtype)                       # (C, HW)
    kv = (mm(kvw_ref[...], xb_ref[...].astype(compute_dtype))
          + kvb_ref[...]).astype(compute_dtype)                      # (2C, HW)

    # Spatial mean of x_a for the gate's feat_a branch:
    # mean(conv_a(x_a)) == conv_a_w @ mean(x_a) + conv_a_b.
    mean_xa = jnp.mean(xa_ref[...].astype(f32), axis=1,
                       keepdims=True).astype(compute_dtype)          # (C, 1)

    ones_row = jnp.ones((1, hw), compute_dtype)                      # hoisted

    # --- attention (head-sliced, query-chunked), results -> VMEM scratch ----
    for h in range(num_heads):                                       # static: 4
        kh = kv[h * d:(h + 1) * d, :]                                # (d, HW)
        vh_ext = jnp.concatenate(
            [kv[c + h * d:c + (h + 1) * d, :], ones_row], axis=0)    # (d+1, HW)
        qh = q[h * d:(h + 1) * d, :]                                 # (d, HW)
        # TODO(synk): for HW/q_chunk >> 8 turn this static unroll into a
        # pl.loop with pl.ds(+pl.multiple_of) dynamic lane slices.
        for c0 in range(0, hw, q_chunk):
            qc = qh[:, c0:c0 + q_chunk]                              # (d, TQ)
            s = mm(qc, kh, TN)                                       # (TQ, HW) f32
            s = s - jnp.max(s, axis=-1, keepdims=True)
            # exp in compute_dtype: bf16 EUP path on v6e/v7x; pass
            # compute_dtype=jnp.float32 on v5e if the exp slot dominates.
            p = jnp.exp(s.astype(compute_dtype))                     # (TQ, HW)
            # P@V and the softmax row-sum in one NT matmul (ones row of vh_ext)
            oe = mm(vh_ext, p, NT)                                   # (d+1, TQ) f32
            inv = pl.reciprocal(oe[d:d + 1, :], approx=False)        # exact 1/rowsum
            o_scr[h * d:(h + 1) * d, c0:c0 + q_chunk] = (
                oe[:d, :] * inv).astype(o_scr.dtype)

    # --- output projection, fusion gate, residual ----------------------------
    attn = mm(ow_ref[...], o_scr[...]) + ob_ref[...]                 # (C, HW) f32

    mean_fa = (mm(caw_ref[...], mean_xa) + cab_ref[...]).astype(compute_dtype)
    mean_attn = jnp.mean(attn, axis=1, keepdims=True).astype(compute_dtype)
    gin = jnp.concatenate([mean_fa, mean_attn], axis=0)              # (2C, 1)
    gate = jax.nn.sigmoid(mm(gw_ref[...], gin) + gb_ref[...])        # (C, 1) f32

    # Re-read x_a here (instead of keeping an f32 copy live through attention).
    out_ref[...] = (xa_ref[...].astype(f32) + gate * attn).astype(out_ref.dtype)


def _fold_params(params, compute_dtype):
    """Host-side (f32) algebraic folding of the 1x1 convs into the projections.

    q(x_a)   = s*(Wq (Wca x_a + bca) + bq) -> (s Wq Wca) x_a + s (Wq bca + bq)
    k/v(x_b) = Wk (Wcb x_b + bcb) + bk     -> (Wk Wcb)  x_b + (Wk bcb + bk)
    K/V are stacked into one (2C, C) weight.  conv_a is still passed (tiny)
    for the gate's spatial-mean branch.
    """
    f32 = jnp.float32
    caw, cab = params["conv_a_w"].astype(f32), params["conv_a_b"].astype(f32)
    cbw, cbb = params["conv_b_w"].astype(f32), params["conv_b_b"].astype(f32)
    qw, qb = params["q_w"].astype(f32), params["q_b"].astype(f32)
    kw, kb = params["k_w"].astype(f32), params["k_b"].astype(f32)
    vw, vb = params["v_w"].astype(f32), params["v_b"].astype(f32)
    c = caw.shape[0]
    scale = 1.0 / float(c // NUM_HEADS) ** 0.5

    qa_w = scale * (qw @ caw)
    qa_b = scale * (qw @ cab + qb)
    kv_w = jnp.concatenate([kw @ cbw, vw @ cbw], axis=0)
    kv_b = jnp.concatenate([kw @ cbb + kb, vw @ cbb + vb], axis=0)

    col = lambda b: b.reshape(-1, 1)
    cd = compute_dtype
    # Weight matrices in compute_dtype (halves their VMEM copies at bf16);
    # biases stay f32 since they are added to f32 accumulators.
    return [qa_w.astype(cd), col(qa_b),
            kv_w.astype(cd), col(kv_b),
            caw.astype(cd), col(cab),
            params["out_w"].astype(cd), col(params["out_b"].astype(f32)),
            params["gate_w"].astype(cd), col(params["gate_b"].astype(f32))]


def _tpu_vmem_capacity_bytes():
    try:
        return int(pltpu.get_tpu_info().vmem_capacity_bytes)
    except Exception:
        return 64 << 20          # conservative fallback (v7x per-core VMEM)


def _pick_q_chunk(hw, vmem_cap):
    # Smaller score tiles on v7x (64 MiB VMEM); larger on v5e/v6e (128 MiB).
    prefs = (512, 256, 128) if vmem_cap > (96 << 20) else (256, 128, 512)
    for cand in prefs:
        if hw % cand == 0:
            return cand
    # TODO(synk): non-multiple-of-128 HW (e.g. 14x14) falls back to a full
    # (HW, HW) score tile with masked lanes; pad HW upstream for such shapes.
    return hw


def cross_modal_interaction(x_a, x_b, params, *, compute_dtype=jnp.bfloat16,
                            q_chunk=None):
    """x_a, x_b: NCHW float arrays.  Returns NCHW (same as the PyTorch module).

    compute_dtype sets the MXU operand dtype (accumulation is always f32).
    bf16 (default) is the native MXU dtype on v5e/v6e/v7x; pass jnp.float32
    for tight numerical parity with the f32 reference.
    """
    B, C, H, W = x_a.shape
    HW = H * W
    assert C % NUM_HEADS == 0, "channels must be divisible by num_heads=4"
    xa = x_a.reshape(B, C, HW)        # pure reshape: channels-first, no transpose
    xb = x_b.reshape(B, C, HW)

    weights = _fold_params(params, compute_dtype)

    vmem_cap = _tpu_vmem_capacity_bytes()
    if q_chunk is None:
        q_chunk = _pick_q_chunk(HW, vmem_cap)

    tok_spec = pl.BlockSpec((pl.Squeezed(), C, HW), lambda b: (b, 0, 0))
    # TODO(synk): single-buffer these constant-index weight blocks via
    # pipeline_mode=pl.Buffered(1) once confirmed supported by the local jax.
    w_specs = [pl.BlockSpec(w.shape, lambda b: (0, 0)) for w in weights]

    cost = pl.CostEstimate(
        flops=int(B * (8 * C * C * HW + 2 * (2 * C + NUM_HEADS) * HW * HW)),
        transcendentals=int(B * (NUM_HEADS * HW * HW + NUM_HEADS * HW + C)),
        bytes_accessed=int(4 * 3 * B * C * HW
                           + sum(w.size * w.dtype.itemsize for w in weights)),
    )

    kernel = functools.partial(_cross_modal_kernel, num_heads=NUM_HEADS,
                               q_chunk=q_chunk, compute_dtype=compute_dtype)

    out = pl.pallas_call(
        kernel,
        out_shape=jax.ShapeDtypeStruct((B, C, HW), x_a.dtype),
        grid_spec=pltpu.PrefetchScalarGridSpec(
            num_scalar_prefetch=0,
            grid=(B,),   # TODO(synk): add a 2nd parallel axis when B == 1 on v7x
            in_specs=[tok_spec, tok_spec] + w_specs,
            out_specs=pl.BlockSpec((pl.Squeezed(), C, HW), lambda b: (b, 0, 0)),
            scratch_shapes=[pltpu.VMEM((C, HW), compute_dtype)],
        ),
        compiler_params=pltpu.CompilerParams(
            dimension_semantics=("parallel",),
            vmem_limit_bytes=max(32 << 20, int(0.8 * vmem_cap))),
        cost_estimate=cost,
    )(xa, xb, *weights)

    return out.reshape(B, C, H, W)    # pure reshape back to NCHW


def _reference(x_a, x_b, params):
    """Pure-JAX reference mirroring the PyTorch forward (f32, unfolded weights)."""
    B, C, H, W = x_a.shape
    HW = H * W
    xa = x_a.reshape(B, C, HW).transpose(0, 2, 1)
    xb = x_b.reshape(B, C, HW).transpose(0, 2, 1)
    feat_a = xa @ params["conv_a_w"].T + params["conv_a_b"]
    feat_b = xb @ params["conv_b_w"].T + params["conv_b_b"]
    q = feat_a @ params["q_w"].T + params["q_b"]
    k = feat_b @ params["k_w"].T + params["k_b"]
    v = feat_b @ params["v_w"].T + params["v_b"]
    d = C // NUM_HEADS

    def heads(t):  # (B, HW, C) -> (B, NH, HW, D)
        return t.reshape(B, HW, NUM_HEADS, d).transpose(0, 2, 1, 3)

    qh, kh, vh = heads(q), heads(k), heads(v)
    s = jnp.einsum("bnqd,bnkd->bnqk", qh, kh) / (d ** 0.5)
    p = jax.nn.softmax(s, axis=-1)
    o = jnp.einsum("bnqk,bnkd->bnqd", p, vh)
    o = o.transpose(0, 2, 1, 3).reshape(B, HW, C)
    attn = o @ params["out_w"].T + params["out_b"]
    gin = jnp.concatenate([feat_a.mean(axis=1), attn.mean(axis=1)], axis=-1)
    gate = jax.nn.sigmoid(gin @ params["gate_w"].T + params["gate_b"])
    out = xa + gate[:, None, :] * attn
    return out.transpose(0, 2, 1).reshape(B, C, H, W)


def make_params(key, channels):
    c = channels
    ks = jax.random.split(key, 14)

    def w(k, shape, scale=0.1):
        return (scale * jax.random.normal(k, shape)).astype(jnp.float32)

    return {
        # nn.Conv2d(c, c, 1): weight (c, c, 1, 1) squeezed to (c, c), bias (c,)
        "conv_a_w": w(ks[0], (c, c)), "conv_a_b": w(ks[1], (c,)),
        "conv_b_w": w(ks[2], (c, c)), "conv_b_b": w(ks[3], (c,)),
        # nn.MultiheadAttention in_proj (q/k/v) and out_proj
        "q_w": w(ks[4], (c, c)), "q_b": w(ks[5], (c,)),
        "k_w": w(ks[6], (c, c)), "k_b": w(ks[7], (c,)),
        "v_w": w(ks[8], (c, c)), "v_b": w(ks[9], (c,)),
        # fusion gate Linear(2c -> c)
        "out_w": w(ks[10], (c, c)), "out_b": w(ks[11], (c,)),
        "gate_w": w(ks[12], (c, 2 * c)), "gate_b": w(ks[13], (c,)),
    }


if __name__ == "__main__":
    key = jax.random.PRNGKey(0)
    B, C, H, W = 2, 8, 16, 16          # channels divisible by num_heads=4
    k1, k2, k3 = jax.random.split(key, 3)
    x_a = jax.random.normal(k1, (B, C, H, W), dtype=jnp.float32)
    x_b = jax.random.normal(k2, (B, C, H, W), dtype=jnp.float32)
    params = make_params(k3, C)

    ref = _reference(x_a, x_b, params)

    # f32 compute path: tight parity with the PyTorch-equivalent reference
    # (differences are only matmul-association rounding from the folding).
    out_f32 = jax.block_until_ready(
        cross_modal_interaction(x_a, x_b, params, compute_dtype=jnp.float32))
    assert out_f32.shape == (B, C, H, W)
    err_f32 = float(jnp.max(jnp.abs(out_f32 - ref)))
    assert jnp.allclose(out_f32, ref, atol=1e-3, rtol=1e-3), err_f32

    # Default bf16 MXU-operand path (f32 accumulation): looser tolerance from
    # bf16 operand/exp rounding, documented and expected.
    out_bf16 = jax.block_until_ready(cross_modal_interaction(x_a, x_b, params))
    err_bf16 = float(jnp.max(jnp.abs(out_bf16 - ref)))
    assert jnp.allclose(out_bf16, ref, atol=3e-2, rtol=3e-2), err_bf16

    print("KERNEL_OK")
</pallas_src>

<mosaic_0001>
module attributes {stable_mosaic.version = 11 : i64} {
  func.func @_cross_modal_kernel(%arg0: i32, %arg1: memref<1x8x256xf32, #tpu.memory_space<vmem>>, %arg2: memref<1x8x256xf32, #tpu.memory_space<vmem>>, %arg3: memref<8x8xf32, #tpu.memory_space<vmem>>, %arg4: memref<8x1xf32, #tpu.memory_space<vmem>>, %arg5: memref<16x8xf32, #tpu.memory_space<vmem>>, %arg6: memref<16x1xf32, #tpu.memory_space<vmem>>, %arg7: memref<8x8xf32, #tpu.memory_space<vmem>>, %arg8: memref<8x1xf32, #tpu.memory_space<vmem>>, %arg9: memref<8x8xf32, #tpu.memory_space<vmem>>, %arg10: memref<8x1xf32, #tpu.memory_space<vmem>>, %arg11: memref<8x16xf32, #tpu.memory_space<vmem>>, %arg12: memref<8x1xf32, #tpu.memory_space<vmem>>, %arg13: memref<1x8x256xf32, #tpu.memory_space<vmem>>, %arg14: memref<8x256xf32, #tpu.memory_space<vmem>>) attributes {dimension_semantics = [#tpu.dimension_semantics<parallel>], iteration_bounds = array<i64: 2>, scalar_prefetch = 0 : i64, scratch_operands = 1 : i64, tpu.core_type = #tpu.core_type<tc>, window_params = [{transform_indices = @transform_0, window_bounds = array<i64: 1, 8, 256>}, {transform_indices = @transform_1, window_bounds = array<i64: 1, 8, 256>}, {pipeline_mode = #tpu.pipeline_mode<synchronous>, transform_indices = @transform_2, window_bounds = array<i64: 8, 8>}, {pipeline_mode = #tpu.pipeline_mode<synchronous>, transform_indices = @transform_3, window_bounds = array<i64: 8, 1>}, {pipeline_mode = #tpu.pipeline_mode<synchronous>, transform_indices = @transform_4, window_bounds = array<i64: 16, 8>}, {pipeline_mode = #tpu.pipeline_mode<synchronous>, transform_indices = @transform_5, window_bounds = array<i64: 16, 1>}, {pipeline_mode = #tpu.pipeline_mode<synchronous>, transform_indices = @transform_6, window_bounds = array<i64: 8, 8>}, {pipeline_mode = #tpu.pipeline_mode<synchronous>, transform_indices = @transform_7, window_bounds = array<i64: 8, 1>}, {pipeline_mode = #tpu.pipeline_mode<synchronous>, transform_indices = @transform_8, window_bounds = array<i64: 8, 8>}, {pipeline_mode = #tpu.pipeline_mode<synchronous>, transform_indices = @transform_9, window_bounds = array<i64: 8, 1>}, {pipeline_mode = #tpu.pipeline_mode<synchronous>, transform_indices = @transform_10, window_bounds = array<i64: 8, 16>}, {pipeline_mode = #tpu.pipeline_mode<synchronous>, transform_indices = @transform_11, window_bounds = array<i64: 8, 1>}, {transform_indices = @transform_12, window_bounds = array<i64: 1, 8, 256>}]} {
    %c0 = arith.constant 0 : index
    %c0_0 = arith.constant 0 : index
    %0 = vector.load %arg3[%c0, %c0_0] : memref<8x8xf32, #tpu.memory_space<vmem>>, vector<8x8xf32>
    %c0_1 = arith.constant 0 : index
    %c0_2 = arith.constant 0 : index
    %c0_3 = arith.constant 0 : index
    %1 = vector.load %arg1[%c0_1, %c0_2, %c0_3] : memref<1x8x256xf32, #tpu.memory_space<vmem>>, vector<1x8x256xf32>
    %2 = vector.shape_cast %1 : vector<1x8x256xf32> to vector<8x256xf32>
    %cst = arith.constant dense<0.000000e+00> : vector<8x256xf32>
    %3 = tpu.matmul %0, %2, %cst {dimension_numbers = #tpu.dot_dimension_numbers<[1], [0], [0], [1], [0, 0, 1, 1], [], []>} : vector<8x8xf32>, vector<8x256xf32>, vector<8x256xf32> -> vector<8x256xf32>
    %c0_4 = arith.constant 0 : index
    %c0_5 = arith.constant 0 : index
    %4 = vector.load %arg4[%c0_4, %c0_5] : memref<8x1xf32, #tpu.memory_space<vmem>>, vector<8x1xf32>
    %5 = vector.broadcast %4 : vector<8x1xf32> to vector<8x256xf32>
    %6 = arith.addf %3, %5 : vector<8x256xf32>
    %c0_6 = arith.constant 0 : index
    %c0_7 = arith.constant 0 : index
    %7 = vector.load %arg5[%c0_6, %c0_7] : memref<16x8xf32, #tpu.memory_space<vmem>>, vector<16x8xf32>
    %c0_8 = arith.constant 0 : index
    %c0_9 = arith.constant 0 : index
    %c0_10 = arith.constant 0 : index
    %8 = vector.load %arg2[%c0_8, %c0_9, %c0_10] : memref<1x8x256xf32, #tpu.memory_space<vmem>>, vector<1x8x256xf32>
    %9 = vector.shape_cast %8 : vector<1x8x256xf32> to vector<8x256xf32>
    %cst_11 = arith.constant dense<0.000000e+00> : vector<16x256xf32>
    %10 = tpu.matmul %7, %9, %cst_11 {dimension_numbers = #tpu.dot_dimension_numbers<[1], [0], [0], [1], [0, 0, 1, 1], [], []>} : vector<16x8xf32>, vector<8x256xf32>, vector<16x256xf32> -> vector<16x256xf32>
    %c0_12 = arith.constant 0 : index
    %c0_13 = arith.constant 0 : index
    %11 = vector.load %arg6[%c0_12, %c0_13] : memref<16x1xf32, #tpu.memory_space<vmem>>, vector<16x1xf32>
    %12 = vector.broadcast %11 : vector<16x1xf32> to vector<16x256xf32>
    %13 = arith.addf %10, %12 : vector<16x256xf32>
    %c0_14 = arith.constant 0 : index
    %c0_15 = arith.constant 0 : index
    %c0_16 = arith.constant 0 : index
    %14 = vector.load %arg1[%c0_14, %c0_15, %c0_16] : memref<1x8x256xf32, #tpu.memory_space<vmem>>, vector<1x8x256xf32>
    %15 = vector.shape_cast %14 : vector<1x8x256xf32> to vector<8x256xf32>
    %cst_17 = arith.constant dense<0.000000e+00> : vector<8xf32>
    %16 = vector.multi_reduction <add>, %15, %cst_17 [1] : vector<8x256xf32> to vector<8xf32>
    %17 = vector.shape_cast %16 : vector<8xf32> to vector<8x1xf32>
    %cst_18 = arith.constant 2.560000e+02 : f32
    %18 = vector.broadcast %cst_18 : f32 to vector<8x1xf32>
    %19 = arith.divf %17, %18 : vector<8x1xf32>
    %cst_19 = arith.constant 1.000000e+00 : f32
    %20 = vector.broadcast %cst_19 : f32 to vector<1x256xf32>
    %21 = vector.extract_strided_slice %13 {offsets = [0, 0], sizes = [2, 256], strides = [1, 1]} : vector<16x256xf32> to vector<2x256xf32>
    %22 = vector.extract_strided_slice %13 {offsets = [8, 0], sizes = [2, 256], strides = [1, 1]} : vector<16x256xf32> to vector<2x256xf32>
    %23 = tpu.concatenate %22, %20 in 0 : vector<2x256xf32>, vector<1x256xf32> -> vector<3x256xf32>
    %24 = vector.extract_strided_slice %6 {offsets = [0, 0], sizes = [2, 256], strides = [1, 1]} : vector<8x256xf32> to vector<2x256xf32>
    %cst_20 = arith.constant dense<0.000000e+00> : vector<256x256xf32>
    %25 = tpu.matmul %24, %21, %cst_20 {dimension_numbers = #tpu.dot_dimension_numbers<[0], [0], [1], [1], [0, 1, 1, 1], [], []>} : vector<2x256xf32>, vector<2x256xf32>, vector<256x256xf32> -> vector<256x256xf32>
    %cst_21 = arith.constant dense<0xFF800000> : vector<256xf32>
    %26 = vector.multi_reduction <maximumf>, %25, %cst_21 [1] : vector<256x256xf32> to vector<256xf32>
    %27 = vector.shape_cast %26 : vector<256xf32> to vector<256x1xf32>
    %28 = vector.broadcast %27 : vector<256x1xf32> to vector<256x256xf32>
    %29 = arith.subf %25, %28 : vector<256x256xf32>
    %30 = math.exp %29 : vector<256x256xf32>
    %cst_22 = arith.constant dense<0.000000e+00> : vector<3x256xf32>
    %31 = tpu.matmul %23, %30, %cst_22 {dimension_numbers = #tpu.dot_dimension_numbers<[1], [1], [0], [0], [0, 0, 1, 0], [], []>} : vector<3x256xf32>, vector<256x256xf32>, vector<3x256xf32> -> vector<3x256xf32>
    %32 = vector.extract_strided_slice %31 {offsets = [2, 0], sizes = [1, 256], strides = [1, 1]} : vector<3x256xf32> to vector<1x256xf32>
    %33 = tpu.reciprocal %32 : vector<1x256xf32> -> vector<1x256xf32>
    %34 = vector.extract_strided_slice %31 {offsets = [0, 0], sizes = [2, 256], strides = [1, 1]} : vector<3x256xf32> to vector<2x256xf32>
    %35 = vector.broadcast %33 : vector<1x256xf32> to vector<2x256xf32>
    %36 = arith.mulf %34, %35 : vector<2x256xf32>
    %c0_23 = arith.constant 0 : index
    %c0_24 = arith.constant 0 : index
    %37 = vector.load %arg14[%c0_23, %c0_24] : memref<8x256xf32, #tpu.memory_space<vmem>>, vector<2x256xf32>
    tpu.vector_store %arg14[%c0_23, %c0_24], %36 {strides = array<i32>} : memref<8x256xf32, #tpu.memory_space<vmem>>, vector<2x256xf32>,
    %38 = vector.extract_strided_slice %13 {offsets = [2, 0], sizes = [2, 256], strides = [1, 1]} : vector<16x256xf32> to vector<2x256xf32>
    %39 = vector.extract_strided_slice %13 {offsets = [10, 0], sizes = [2, 256], strides = [1, 1]} : vector<16x256xf32> to vector<2x256xf32>
    %40 = tpu.concatenate %39, %20 in 0 : vector<2x256xf32>, vector<1x256xf32> -> vector<3x256xf32>
    %41 = vector.extract_strided_slice %6 {offsets = [2, 0], sizes = [2, 256], strides = [1, 1]} : vector<8x256xf32> to vector<2x256xf32>
    %cst_25 = arith.constant dense<0.000000e+00> : vector<256x256xf32>
    %42 = tpu.matmul %41, %38, %cst_25 {dimension_numbers = #tpu.dot_dimension_numbers<[0], [0], [1], [1], [0, 1, 1, 1], [], []>} : vector<2x256xf32>, vector<2x256xf32>, vector<256x256xf32> -> vector<256x256xf32>
    %cst_26 = arith.constant dense<0xFF800000> : vector<256xf32>
    %43 = vector.multi_reduction <maximumf>, %42, %cst_26 [1] : vector<256x256xf32> to vector<256xf32>
    %44 = vector.shape_cast %43 : vector<256xf32> to vector<256x1xf32>
    %45 = vector.broadcast %44 : vector<256x1xf32> to vector<256x256xf32>
    %46 = arith.subf %42, %45 : vector<256x256xf32>
    %47 = math.exp %46 : vector<256x256xf32>
    %cst_27 = arith.constant dense<0.000000e+00> : vector<3x256xf32>
    %48 = tpu.matmul %40, %47, %cst_27 {dimension_numbers = #tpu.dot_dimension_numbers<[1], [1], [0], [0], [0, 0, 1, 0], [], []>} : vector<3x256xf32>, vector<256x256xf32>, vector<3x256xf32> -> vector<3x256xf32>
    %49 = vector.extract_strided_slice %48 {offsets = [2, 0], sizes = [1, 256], strides = [1, 1]} : vector<3x256xf32> to vector<1x256xf32>
    %50 = tpu.reciprocal %49 : vector<1x256xf32> -> vector<1x256xf32>
    %51 = vector.extract_strided_slice %48 {offsets = [0, 0], sizes = [2, 256], strides = [1, 1]} : vector<3x256xf32> to vector<2x256xf32>
    %52 = vector.broadcast %50 : vector<1x256xf32> to vector<2x256xf32>
    %53 = arith.mulf %51, %52 : vector<2x256xf32>
    %c2 = arith.constant 2 : index
    %c0_28 = arith.constant 0 : index
    %54 = vector.load %arg14[%c2, %c0_28] : memref<8x256xf32, #tpu.memory_space<vmem>>, vector<2x256xf32>
    tpu.vector_store %arg14[%c2, %c0_28], %53 {strides = array<i32>} : memref<8x256xf32, #tpu.memory_space<vmem>>, vector<2x256xf32>,
    %55 = vector.extract_strided_slice %13 {offsets = [4, 0], sizes = [2, 256], strides = [1, 1]} : vector<16x256xf32> to vector<2x256xf32>
    %56 = vector.extract_strided_slice %13 {offsets = [12, 0], sizes = [2, 256], strides = [1, 1]} : vector<16x256xf32> to vector<2x256xf32>
    %57 = tpu.concatenate %56, %20 in 0 : vector<2x256xf32>, vector<1x256xf32> -> vector<3x256xf32>
    %58 = vector.extract_strided_slice %6 {offsets = [4, 0], sizes = [2, 256], strides = [1, 1]} : vector<8x256xf32> to vector<2x256xf32>
    %cst_29 = arith.constant dense<0.000000e+00> : vector<256x256xf32>
    %59 = tpu.matmul %58, %55, %cst_29 {dimension_numbers = #tpu.dot_dimension_numbers<[0], [0], [1], [1], [0, 1, 1, 1], [], []>} : vector<2x256xf32>, vector<2x256xf32>, vector<256x256xf32> -> vector<256x256xf32>
    %cst_30 = arith.constant dense<0xFF800000> : vector<256xf32>
    %60 = vector.multi_reduction <maximumf>, %59, %cst_30 [1] : vector<256x256xf32> to vector<256xf32>
    %61 = vector.shape_cast %60 : vector<256xf32> to vector<256x1xf32>
    %62 = vector.broadcast %61 : vector<256x1xf32> to vector<256x256xf32>
    %63 = arith.subf %59, %62 : vector<256x256xf32>
    %64 = math.exp %63 : vector<256x256xf32>
    %cst_31 = arith.constant dense<0.000000e+00> : vector<3x256xf32>
    %65 = tpu.matmul %57, %64, %cst_31 {dimension_numbers = #tpu.dot_dimension_numbers<[1], [1], [0], [0], [0, 0, 1, 0], [], []>} : vector<3x256xf32>, vector<256x256xf32>, vector<3x256xf32> -> vector<3x256xf32>
    %66 = vector.extract_strided_slice %65 {offsets = [2, 0], sizes = [1, 256], strides = [1, 1]} : vector<3x256xf32> to vector<1x256xf32>
    %67 = tpu.reciprocal %66 : vector<1x256xf32> -> vector<1x256xf32>
    %68 = vector.extract_strided_slice %65 {offsets = [0, 0], sizes = [2, 256], strides = [1, 1]} : vector<3x256xf32> to vector<2x256xf32>
    %69 = vector.broadcast %67 : vector<1x256xf32> to vector<2x256xf32>
    %70 = arith.mulf %68, %69 : vector<2x256xf32>
    %c4 = arith.constant 4 : index
    %c0_32 = arith.constant 0 : index
    %71 = vector.load %arg14[%c4, %c0_32] : memref<8x256xf32, #tpu.memory_space<vmem>>, vector<2x256xf32>
    tpu.vector_store %arg14[%c4, %c0_32], %70 {strides = array<i32>} : memref<8x256xf32, #tpu.memory_space<vmem>>, vector<2x256xf32>,
    %72 = vector.extract_strided_slice %13 {offsets = [6, 0], sizes = [2, 256], strides = [1, 1]} : vector<16x256xf32> to vector<2x256xf32>
    %73 = vector.extract_strided_slice %13 {offsets = [14, 0], sizes = [2, 256], strides = [1, 1]} : vector<16x256xf32> to vector<2x256xf32>
    %74 = tpu.concatenate %73, %20 in 0 : vector<2x256xf32>, vector<1x256xf32> -> vector<3x256xf32>
    %75 = vector.extract_strided_slice %6 {offsets = [6, 0], sizes = [2, 256], strides = [1, 1]} : vector<8x256xf32> to vector<2x256xf32>
    %cst_33 = arith.constant dense<0.000000e+00> : vector<256x256xf32>
    %76 = tpu.matmul %75, %72, %cst_33 {dimension_numbers = #tpu.dot_dimension_numbers<[0], [0], [1], [1], [0, 1, 1, 1], [], []>} : vector<2x256xf32>, vector<2x256xf32>, vector<256x256xf32> -> vector<256x256xf32>
    %cst_34 = arith.constant dense<0xFF800000> : vector<256xf32>
    %77 = vector.multi_reduction <maximumf>, %76, %cst_34 [1] : vector<256x256xf32> to vector<256xf32>
    %78 = vector.shape_cast %77 : vector<256xf32> to vector<256x1xf32>
    %79 = vector.broadcast %78 : vector<256x1xf32> to vector<256x256xf32>
    %80 = arith.subf %76, %79 : vector<256x256xf32>
    %81 = math.exp %80 : vector<256x256xf32>
    %cst_35 = arith.constant dense<0.000000e+00> : vector<3x256xf32>
    %82 = tpu.matmul %74, %81, %cst_35 {dimension_numbers = #tpu.dot_dimension_numbers<[1], [1], [0], [0], [0, 0, 1, 0], [], []>} : vector<3x256xf32>, vector<256x256xf32>, vector<3x256xf32> -> vector<3x256xf32>
    %83 = vector.extract_strided_slice %82 {offsets = [2, 0], sizes = [1, 256], strides = [1, 1]} : vector<3x256xf32> to vector<1x256xf32>
    %84 = tpu.reciprocal %83 : vector<1x256xf32> -> vector<1x256xf32>
    %85 = vector.extract_strided_slice %82 {offsets = [0, 0], sizes = [2, 256], strides = [1, 1]} : vector<3x256xf32> to vector<2x256xf32>
    %86 = vector.broadcast %84 : vector<1x256xf32> to vector<2x256xf32>
    %87 = arith.mulf %85, %86 : vector<2x256xf32>
    %c6 = arith.constant 6 : index
    %c0_36 = arith.constant 0 : index
    %88 = vector.load %arg14[%c6, %c0_36] : memref<8x256xf32, #tpu.memory_space<vmem>>, vector<2x256xf32>
    tpu.vector_store %arg14[%c6, %c0_36], %87 {strides = array<i32>} : memref<8x256xf32, #tpu.memory_space<vmem>>, vector<2x256xf32>,
    %c0_37 = arith.constant 0 : index
    %c0_38 = arith.constant 0 : index
    %89 = vector.load %arg9[%c0_37, %c0_38] : memref<8x8xf32, #tpu.memory_space<vmem>>, vector<8x8xf32>
    %c0_39 = arith.constant 0 : index
    %c0_40 = arith.constant 0 : index
    %90 = vector.load %arg14[%c0_39, %c0_40] : memref<8x256xf32, #tpu.memory_space<vmem>>, vector<8x256xf32>
    %cst_41 = arith.constant dense<0.000000e+00> : vector<8x256xf32>
    %91 = tpu.matmul %89, %90, %cst_41 {dimension_numbers = #tpu.dot_dimension_numbers<[1], [0], [0], [1], [0, 0, 1, 1], [], []>} : vector<8x8xf32>, vector<8x256xf32>, vector<8x256xf32> -> vector<8x256xf32>
    %c0_42 = arith.constant 0 : index
    %c0_43 = arith.constant 0 : index
    %92 = vector.load %arg10[%c0_42, %c0_43] : memref<8x1xf32, #tpu.memory_space<vmem>>, vector<8x1xf32>
    %93 = vector.broadcast %92 : vector<8x1xf32> to vector<8x256xf32>
    %94 = arith.addf %91, %93 : vector<8x256xf32>
    %c0_44 = arith.constant 0 : index
    %c0_45 = arith.constant 0 : index
    %95 = vector.load %arg7[%c0_44, %c0_45] : memref<8x8xf32, #tpu.memory_space<vmem>>, vector<8x8xf32>
    %cst_46 = arith.constant dense<0.000000e+00> : vector<8x1xf32>
    %96 = tpu.matmul %95, %19, %cst_46 {dimension_numbers = #tpu.dot_dimension_numbers<[1], [0], [0], [1], [0, 0, 1, 1], [], []>} : vector<8x8xf32>, vector<8x1xf32>, vector<8x1xf32> -> vector<8x1xf32>
    %c0_47 = arith.constant 0 : index
    %c0_48 = arith.constant 0 : index
    %97 = vector.load %arg8[%c0_47, %c0_48] : memref<8x1xf32, #tpu.memory_space<vmem>>, vector<8x1xf32>
    %98 = arith.addf %96, %97 : vector<8x1xf32>
    %cst_49 = arith.constant dense<0.000000e+00> : vector<8xf32>
    %99 = vector.multi_reduction <add>, %94, %cst_49 [1] : vector<8x256xf32> to vector<8xf32>
    %100 = vector.shape_cast %99 : vector<8xf32> to vector<8x1xf32>
    %cst_50 = arith.constant 2.560000e+02 : f32
    %101 = vector.broadcast %cst_50 : f32 to vector<8x1xf32>
    %102 = arith.divf %100, %101 : vector<8x1xf32>
    %103 = tpu.concatenate %98, %102 in 0 : vector<8x1xf32>, vector<8x1xf32> -> vector<16x1xf32>
    %c0_51 = arith.constant 0 : index
    %c0_52 = arith.constant 0 : index
    %104 = vector.load %arg11[%c0_51, %c0_52] : memref<8x16xf32, #tpu.memory_space<vmem>>, vector<8x16xf32>
    %cst_53 = arith.constant dense<0.000000e+00> : vector<8x1xf32>
    %105 = tpu.matmul %104, %103, %cst_53 {dimension_numbers = #tpu.dot_dimension_numbers<[1], [0], [0], [1], [0, 0, 1, 1], [], []>} : vector<8x16xf32>, vector<16x1xf32>, vector<8x1xf32> -> vector<8x1xf32>
    %c0_54 = arith.constant 0 : index
    %c0_55 = arith.constant 0 : index
    %106 = vector.load %arg12[%c0_54, %c0_55] : memref<8x1xf32, #tpu.memory_space<vmem>>, vector<8x1xf32>
    %107 = arith.addf %105, %106 : vector<8x1xf32>
    %108 = arith.negf %107 : vector<8x1xf32>
    %109 = math.exp %108 : vector<8x1xf32>
    %cst_56 = arith.constant 1.000000e+00 : f32
    %110 = vector.broadcast %cst_56 : f32 to vector<8x1xf32>
    %111 = arith.addf %110, %109 : vector<8x1xf32>
    %112 = arith.divf %110, %111 : vector<8x1xf32>
    %c0_57 = arith.constant 0 : index
    %c0_58 = arith.constant 0 : index
    %c0_59 = arith.constant 0 : index
    %113 = vector.load %arg1[%c0_57, %c0_58, %c0_59] : memref<1x8x256xf32, #tpu.memory_space<vmem>>, vector<1x8x256xf32>
    %114 = vector.shape_cast %113 : vector<1x8x256xf32> to vector<8x256xf32>
    %115 = vector.broadcast %112 : vector<8x1xf32> to vector<8x256xf32>
    %116 = arith.mulf %115, %94 : vector<8x256xf32>
    %117 = arith.addf %114, %116 : vector<8x256xf32>
    %c0_60 = arith.constant 0 : index
    %c0_61 = arith.constant 0 : index
    %c0_62 = arith.constant 0 : index
    %118 = vector.load %arg13[%c0_60, %c0_61, %c0_62] : memref<1x8x256xf32, #tpu.memory_space<vmem>>, vector<1x8x256xf32>
    %119 = vector.shape_cast %118 : vector<1x8x256xf32> to vector<8x256xf32>
    %120 = vector.shape_cast %117 : vector<8x256xf32> to vector<1x8x256xf32>
    tpu.vector_store %arg13[%c0_60, %c0_61, %c0_62], %120 {strides = array<i32>} : memref<1x8x256xf32, #tpu.memory_space<vmem>>, vector<1x8x256xf32>,
    return
  }
  func.func @transform_0(%arg0: i32) -> (i32, i32, i32) {
    %c0_i32 = arith.constant 0 : i32
    %c0_i32_0 = arith.constant 0 : i32
    %c0_i32_1 = arith.constant 0 : i32
    return %arg0, %c0_i32, %c0_i32_0 : i32, i32, i32
  }
  func.func @transform_1(%arg0: i32) -> (i32, i32, i32) {
    %c0_i32 = arith.constant 0 : i32
    %c0_i32_0 = arith.constant 0 : i32
    %c0_i32_1 = arith.constant 0 : i32
    return %arg0, %c0_i32, %c0_i32_0 : i32, i32, i32
  }
  func.func @transform_2(%arg0: i32) -> (i32, i32) {
    %c0_i32 = arith.constant 0 : i32
    %c0_i32_0 = arith.constant 0 : i32
    %c0_i32_1 = arith.constant 0 : i32
    return %c0_i32, %c0_i32_0 : i32, i32
  }
  func.func @transform_3(%arg0: i32) -> (i32, i32) {
    %c0_i32 = arith.constant 0 : i32
    %c0_i32_0 = arith.constant 0 : i32
    %c0_i32_1 = arith.constant 0 : i32
    return %c0_i32, %c0_i32_0 : i32, i32
  }
  func.func @transform_4(%arg0: i32) -> (i32, i32) {
    %c0_i32 = arith.constant 0 : i32
    %c0_i32_0 = arith.constant 0 : i32
    %c0_i32_1 = arith.constant 0 : i32
    return %c0_i32, %c0_i32_0 : i32, i32
  }
  func.func @transform_5(%arg0: i32) -> (i32, i32) {
    %c0_i32 = arith.constant 0 : i32
    %c0_i32_0 = arith.constant 0 : i32
    %c0_i32_1 = arith.constant 0 : i32
    return %c0_i32, %c0_i32_0 : i32, i32
  }
  func.func @transform_6(%arg0: i32) -> (i32, i32) {
    %c0_i32 = arith.constant 0 : i32
    %c0_i32_0 = arith.constant 0 : i32
    %c0_i32_1 = arith.constant 0 : i32
    return %c0_i32, %c0_i32_0 : i32, i32
  }
  func.func @transform_7(%arg0: i32) -> (i32, i32) {
    %c0_i32 = arith.constant 0 : i32
    %c0_i32_0 = arith.constant 0 : i32
    %c0_i32_1 = arith.constant 0 : i32
    return %c0_i32, %c0_i32_0 : i32, i32
  }
  func.func @transform_8(%arg0: i32) -> (i32, i32) {
    %c0_i32 = arith.constant 0 : i32
    %c0_i32_0 = arith.constant 0 : i32
    %c0_i32_1 = arith.constant 0 : i32
    return %c0_i32, %c0_i32_0 : i32, i32
  }
  func.func @transform_9(%arg0: i32) -> (i32, i32) {
    %c0_i32 = arith.constant 0 : i32
    %c0_i32_0 = arith.constant 0 : i32
    %c0_i32_1 = arith.constant 0 : i32
    return %c0_i32, %c0_i32_0 : i32, i32
  }
  func.func @transform_10(%arg0: i32) -> (i32, i32) {
    %c0_i32 = arith.constant 0 : i32
    %c0_i32_0 = arith.constant 0 : i32
    %c0_i32_1 = arith.constant 0 : i32
    return %c0_i32, %c0_i32_0 : i32, i32
  }
  func.func @transform_11(%arg0: i32) -> (i32, i32) {
    %c0_i32 = arith.constant 0 : i32
    %c0_i32_0 = arith.constant 0 : i32
    %c0_i32_1 = arith.constant 0 : i32
    return %c0_i32, %c0_i32_0 : i32, i32
  }
  func.func @transform_12(%arg0: i32) -> (i32, i32, i32) {
    %c0_i32 = arith.constant 0 : i32
    %c0_i32_0 = arith.constant 0 : i32
    %c0_i32_1 = arith.constant 0 : i32
    return %arg0, %c0_i32, %c0_i32_0 : i32, i32, i32
  }
}

</mosaic_0001>

<llo_original>
// kernel: tpu_custom_call.1
$region0: #{tpu_custom_call.1}
  #allocation0 [shape = 'u32[]', space=smem, size = 0x4, offset = 0x4, fixed_abs, tag = 'smem constant byte address 0x4 - core index']
  #allocation1 [shape = 'u32[72,128]{1,0:T(1,128)}', space=vmem, size = 0x9000, scoped, tag = 'internal scratch']
  #allocation2 [shape = 'f32[8,256]{1,0:T(8,128)}', space=vmem, size = 0x2000, scoped, tag = 'scratch operand']
  %s0 = inlined_call_operand.vmem [shape: f32[2,8,256], index: 0, kind: input, shape index: {}]
  %s1 = inlined_call_operand.hbm [shape: f32[2,8,256], index: 1, kind: input, shape index: {}]
  %s2 = inlined_call_operand.vmem [shape: f32[8,8], index: 2, kind: input, shape index: {}]
  %s3 = inlined_call_operand.vmem [shape: f32[8,1], index: 3, kind: input, shape index: {}]
  %s4 = inlined_call_operand.vmem [shape: f32[16,8], index: 4, kind: input, shape index: {}]
  %s5 = inlined_call_operand.vmem [shape: f32[16,1], index: 5, kind: input, shape index: {}]
  %s6 = inlined_call_operand.vmem [shape: f32[8,8], index: 6, kind: input, shape index: {}]
  %s7 = inlined_call_operand.vmem [shape: f32[8,1], index: 7, kind: input, shape index: {}]
  %s8 = inlined_call_operand.vmem [shape: f32[8,8], index: 8, kind: input, shape index: {}]
  %s9 = inlined_call_operand.vmem [shape: f32[8,1], index: 9, kind: input, shape index: {}]
  %s10 = inlined_call_operand.vmem [shape: f32[8,16], index: 10, kind: input, shape index: {}]
  %s11 = inlined_call_operand.vmem [shape: f32[8,1], index: 11, kind: input, shape index: {}]
  %s12 = inlined_call_operand.hbm [shape: f32[2,8,256], index: 12, kind: output, shape index: {}]
  %s13 = sld [smem:[#allocation0]]
  $region85: #{tpu_custom_call.1} parent=0
    _
  %s15 = ssub.s32 1, %s13
  %s16 = scalar_select 0, %s15, %s13
  $region1: #{tpu_custom_call.1} parent=0
    #allocation3 [shape = 'u8[16384]{0}', space=vmem, size = 0x4000, scoped, tag = 'input window, operand 1']
    #allocation4 [shape = 's32[2]{0}', space=sflag, size = 0x8, scoped, tag = 'scoped memory for tpu_custom_call.1']
    #allocation5 [shape = 's32[2]{0}', space=sflag, size = 0x8, scoped, tag = 'scoped memory for tpu_custom_call.1']
    #allocation6 [shape = 'u8[16384]{0}', space=vmem, size = 0x4000, scoped, tag = 'output window, operand 0']
    %17 = vsyncpa [#allocation4], 0
    %s18 = scalar_lea.sflag [#allocation4], 1
    %19 = vsyncpa %s18, 0
    %20 = vsyncpa [#allocation5], 0
    %s21 = scalar_lea.sflag [#allocation5], 1
    %22 = vsyncpa %s21, 0
    loop: start=0, step=1, limit=4
    $region2: #{tpu_custom_call.1} parent=1 // loop_pre_header
      _
    $region3: #{tpu_custom_call.1} parent=1 // loop_header
      %s24 = sphi 0, %s28
      %p25 = scmp.ge.s32.totalorder %s24, 4
      %s34 = sphi 0, %s36
      %s37 = sphi 0, %s34
      %s38 = sphi 0, %s37
      %s54 = sphi 0, %s38
      %s60 = sphi 0, %s62
      %s63 = sphi 0, %s60
      %s64 = sphi 0, %s63
      %s80 = sphi 0, %s64
      %s84 = sphi 0, %s84
      %s86 = sphi 0, %s84
      %s87 = sphi 0, %s86
      %s101 = sphi 0, %s87
      %s105 = sphi 0, %s105
      %s107 = sphi 0, %s105
      %s108 = sphi 0, %s107
      %s122 = sphi 0, %s108
      %s126 = sphi 0, %s126
      %s128 = sphi 0, %s126
      %s129 = sphi 0, %s128
      %s143 = sphi 0, %s129
      %s147 = sphi 0, %s147
      %s149 = sphi 0, %s147
      %s150 = sphi 0, %s149
      %s164 = sphi 0, %s150
      %s168 = sphi 0, %s168
      %s170 = sphi 0, %s168
      %s171 = sphi 0, %s170
      %s185 = sphi 0, %s171
      %s189 = sphi 0, %s189
      %s191 = sphi 0, %s189
      %s192 = sphi 0, %s191
      %s206 = sphi 0, %s192
      %s210 = sphi 0, %s210
      %s212 = sphi 0, %s210
      %s213 = sphi 0, %s212
      %s227 = sphi 0, %s213
      %s231 = sphi 0, %s231
      %s233 = sphi 0, %s231
      %s234 = sphi 0, %s233
      %s248 = sphi 0, %s234
      %s252 = sphi 0, %s252
      %s254 = sphi 0, %s252
      %s255 = sphi 0, %s254
      %s269 = sphi 0, %s255
      %s273 = sphi 0, %s273
      %s275 = sphi 0, %s273
      %s276 = sphi 0, %s275
      %s290 = sphi 0, %s276
      %s296 = sphi 0, %s298
      %s299 = sphi 0, %s296
      %s300 = sphi 0, %s299
      %s316 = sphi 0, %s300
    $region4: #{tpu_custom_call.1} parent=1 // loop_header_branch
      %27 = sbr.rel (%p25) target = $region8
    $region5: #{tpu_custom_call.1} parent=1 // loop_body
      %s29 = ssub.s32 %s24, 1
      %s30 = ssub.s32 %s24, 2
      %s31 = sadd.s32 %s24, 1
      %s32 = ssub.s32 %s24, %s31
      %p33 = scmp.eq.s32.totalorder %s32, 0
      %s35 = sadd.s32 %s34, 1
      %s36 = scalar_select %p33, %s34, %s35
      %p39 = pneg %p33
      %p40 = scmp.eq.s32.totalorder %s24, 1
      %p41 = por %p39, %p40
      %p42 = scmp.ne.s32.totalorder %s34, %s37
      %p43 = scmp.eq.s32.totalorder %s24, 0
      %p44 = por %p42, %p43
      %p45 = scmp.ne.s32.totalorder %s34, %s37
      %p46 = scmp.eq.s32.totalorder %s29, 1
      %p47 = por %p45, %p46
      %p48 = scmp.ne.s32.totalorder %s37, %s38
      %p49 = scmp.eq.s32.totalorder %s29, 0
      %p50 = por %p48, %p49
      %p51 = scmp.ne.s32.totalorder %s37, %s38
      %p52 = scmp.eq.s32.totalorder %s30, 1
      %p53 = por %p51, %p52
      %p55 = scmp.ne.s32.totalorder %s38, %s54
      %p56 = scmp.eq.s32.totalorder %s30, 0
      %p57 = por %p55, %p56
      %s58 = ssub.s32 %s24, %s31
      %p59 = scmp.eq.s32.totalorder %s58, 0
      %s61 = sadd.s32 %s60, 1
      %s62 = scalar_select %p59, %s60, %s61
      %p65 = pneg %p59
      %p66 = scmp.eq.s32.totalorder %s24, 1
      %p67 = por %p65, %p66
      %p68 = scmp.ne.s32.totalorder %s60, %s63
      %p69 = scmp.eq.s32.totalorder %s24, 0
      %p70 = por %p68, %p69
      %p71 = scmp.ne.s32.totalorder %s60, %s63
      %p72 = scmp.eq.s32.totalorder %s29, 1
      %p73 = por %p71, %p72
      %p74 = scmp.ne.s32.totalorder %s63, %s64
      %p75 = scmp.eq.s32.totalorder %s29, 0
      %p76 = por %p74, %p75
      %p77 = scmp.ne.s32.totalorder %s63, %s64
      %p78 = scmp.eq.s32.totalorder %s30, 1
      %p79 = por %p77, %p78
      %p81 = scmp.ne.s32.totalorder %s64, %s80
      %p82 = scmp.eq.s32.totalorder %s30, 0
      %p83 = por %p81, %p82
      %s85 = sadd.s32 %s84, 1
      %p88 = scmp.eq.s32.totalorder %s24, 1
      %p89 = scmp.ne.s32.totalorder %s84, %s86
      %p90 = scmp.eq.s32.totalorder %s24, 0
      %p91 = por %p89, %p90
      %p92 = scmp.ne.s32.totalorder %s84, %s86
      %p93 = scmp.eq.s32.totalorder %s29, 1
      %p94 = por %p92, %p93
      %p95 = scmp.ne.s32.totalorder %s86, %s87
      %p96 = scmp.eq.s32.totalorder %s29, 0
      %p97 = por %p95, %p96
      %p98 = scmp.ne.s32.totalorder %s86, %s87
      %p99 = scmp.eq.s32.totalorder %s30, 1
      %p100 = por %p98, %p99
      %p102 = scmp.ne.s32.totalorder %s87, %s101
      %p103 = scmp.eq.s32.totalorder %s30, 0
      %p104 = por %p102, %p103
      %s106 = sadd.s32 %s105, 1
      %p109 = scmp.eq.s32.totalorder %s24, 1
      %p110 = scmp.ne.s32.totalorder %s105, %s107
      %p111 = scmp.eq.s32.totalorder %s24, 0
      %p112 = por %p110, %p111
      %p113 = scmp.ne.s32.totalorder %s105, %s107
      %p114 = scmp.eq.s32.totalorder %s29, 1
      %p115 = por %p113, %p114
      %p116 = scmp.ne.s32.totalorder %s107, %s108
      %p117 = scmp.eq.s32.totalorder %s29, 0
      %p118 = por %p116, %p117
      %p119 = scmp.ne.s32.totalorder %s107, %s108
      %p120 = scmp.eq.s32.totalorder %s30, 1
      %p121 = por %p119, %p120
      %p123 = scmp.ne.s32.totalorder %s108, %s122
      %p124 = scmp.eq.s32.totalorder %s30, 0
      %p125 = por %p123, %p124
      %s127 = sadd.s32 %s126, 1
      %p130 = scmp.eq.s32.totalorder %s24, 1
      %p131 = scmp.ne.s32.totalorder %s126, %s128
      %p132 = scmp.eq.s32.totalorder %s24, 0
      %p133 = por %p131, %p132
      %p134 = scmp.ne.s32.totalorder %s126, %s128
      %p135 = scmp.eq.s32.totalorder %s29, 1
      %p136 = por %p134, %p135
      %p137 = scmp.ne.s32.totalorder %s128, %s129
      %p138 = scmp.eq.s32.totalorder %s29, 0
      %p139 = por %p137, %p138
      %p140 = scmp.ne.s32.totalorder %s128, %s129
      %p141 = scmp.eq.s32.totalorder %s30, 1
      %p142 = por %p140, %p141
      %p144 = scmp.ne.s32.totalorder %s129, %s143
      %p145 = scmp.eq.s32.totalorder %s30, 0
      %p146 = por %p144, %p145
      %s148 = sadd.s32 %s147, 1
      %p151 = scmp.eq.s32.totalorder %s24, 1
      %p152 = scmp.ne.s32.totalorder %s147, %s149
      %p153 = scmp.eq.s32.totalorder %s24, 0
      %p154 = por %p152, %p153
      %p155 = scmp.ne.s32.totalorder %s147, %s149
      %p156 = scmp.eq.s32.totalorder %s29, 1
      %p157 = por %p155, %p156
      %p158 = scmp.ne.s32.totalorder %s149, %s150
      %p159 = scmp.eq.s32.totalorder %s29, 0
      %p160 = por %p158, %p159
      %p161 = scmp.ne.s32.totalorder %s149, %s150
      %p162 = scmp.eq.s32.totalorder %s30, 1
      %p163 = por %p161, %p162
      %p165 = scmp.ne.s32.totalorder %s150, %s164
      %p166 = scmp.eq.s32.totalorder %s30, 0
      %p167 = por %p165, %p166
      %s169 = sadd.s32 %s168, 1
      %p172 = scmp.eq.s32.totalorder %s24, 1
      %p173 = scmp.ne.s32.totalorder %s168, %s170
      %p174 = scmp.eq.s32.totalorder %s24, 0
      %p175 = por %p173, %p174
      %p176 = scmp.ne.s32.totalorder %s168, %s170
      %p177 = scmp.eq.s32.totalorder %s29, 1
      %p178 = por %p176, %p177
      %p179 = scmp.ne.s32.totalorder %s170, %s171
      %p180 = scmp.eq.s32.totalorder %s29, 0
      %p181 = por %p179, %p180
      %p182 = scmp.ne.s32.totalorder %s170, %s171
      %p183 = scmp.eq.s32.totalorder %s30, 1
      %p184 = por %p182, %p183
      %p186 = scmp.ne.s32.totalorder %s171, %s185
      %p187 = scmp.eq.s32.totalorder %s30, 0
      %p188 = por %p186, %p187
      %s190 = sadd.s32 %s189, 1
      %p193 = scmp.eq.s32.totalorder %s24, 1
      %p194 = scmp.ne.s32.totalorder %s189, %s191
      %p195 = scmp.eq.s32.totalorder %s24, 0
      %p196 = por %p194, %p195
      %p197 = scmp.ne.s32.totalorder %s189, %s191
      %p198 = scmp.eq.s32.totalorder %s29, 1
      %p199 = por %p197, %p198
      %p200 = scmp.ne.s32.totalorder %s191, %s192
      %p201 = scmp.eq.s32.totalorder %s29, 0
      %p202 = por %p200, %p201
      %p203 = scmp.ne.s32.totalorder %s191, %s192
      %p204 = scmp.eq.s32.totalorder %s30, 1
      %p205 = por %p203, %p204
      %p207 = scmp.ne.s32.totalorder %s192, %s206
      %p208 = scmp.eq.s32.totalorder %s30, 0
      %p209 = por %p207, %p208
      %s211 = sadd.s32 %s210, 1
      %p214 = scmp.eq.s32.totalorder %s24, 1
      %p215 = scmp.ne.s32.totalorder %s210, %s212
      %p216 = scmp.eq.s32.totalorder %s24, 0
      %p217 = por %p215, %p216
      %p218 = scmp.ne.s32.totalorder %s210, %s212
      %p219 = scmp.eq.s32.totalorder %s29, 1
      %p220 = por %p218, %p219
      %p221 = scmp.ne.s32.totalorder %s212, %s213
      %p222 = scmp.eq.s32.totalorder %s29, 0
      %p223 = por %p221, %p222
      %p224 = scmp.ne.s32.totalorder %s212, %s213
      %p225 = scmp.eq.s32.totalorder %s30, 1
      %p226 = por %p224, %p225
      %p228 = scmp.ne.s32.totalorder %s213, %s227
      %p229 = scmp.eq.s32.totalorder %s30, 0
      %p230 = por %p228, %p229
      %s232 = sadd.s32 %s231, 1
      %p235 = scmp.eq.s32.totalorder %s24, 1
      %p236 = scmp.ne.s32.totalorder %s231, %s233
      %p237 = scmp.eq.s32.totalorder %s24, 0
      %p238 = por %p236, %p237
      %p239 = scmp.ne.s32.totalorder %s231, %s233
      %p240 = scmp.eq.s32.totalorder %s29, 1
      %p241 = por %p239, %p240
      %p242 = scmp.ne.s32.totalorder %s233, %s234
      %p243 = scmp.eq.s32.totalorder %s29, 0
      %p244 = por %p242, %p243
      %p245 = scmp.ne.s32.totalorder %s233, %s234
      %p246 = scmp.eq.s32.totalorder %s30, 1
      %p247 = por %p245, %p246
      %p249 = scmp.ne.s32.totalorder %s234, %s248
      %p250 = scmp.eq.s32.totalorder %s30, 0
      %p251 = por %p249, %p250
      %s253 = sadd.s32 %s252, 1
      %p256 = scmp.eq.s32.totalorder %s24, 1
      %p257 = scmp.ne.s32.totalorder %s252, %s254
      %p258 = scmp.eq.s32.totalorder %s24, 0
      %p259 = por %p257, %p258
      %p260 = scmp.ne.s32.totalorder %s252, %s254
      %p261 = scmp.eq.s32.totalorder %s29, 1
      %p262 = por %p260, %p261
      %p263 = scmp.ne.s32.totalorder %s254, %s255
      %p264 = scmp.eq.s32.totalorder %s29, 0
      %p265 = por %p263, %p264
      %p266 = scmp.ne.s32.totalorder %s254, %s255
      %p267 = scmp.eq.s32.totalorder %s30, 1
      %p268 = por %p266, %p267
      %p270 = scmp.ne.s32.totalorder %s255, %s269
      %p271 = scmp.eq.s32.totalorder %s30, 0
      %p272 = por %p270, %p271
      %s274 = sadd.s32 %s273, 1
      %p277 = scmp.eq.s32.totalorder %s24, 1
      %p278 = scmp.ne.s32.totalorder %s273, %s275
      %p279 = scmp.eq.s32.totalorder %s24, 0
      %p280 = por %p278, %p279
      %p281 = scmp.ne.s32.totalorder %s273, %s275
      %p282 = scmp.eq.s32.totalorder %s29, 1
      %p283 = por %p281, %p282
      %p284 = scmp.ne.s32.totalorder %s275, %s276
      %p285 = scmp.eq.s32.totalorder %s29, 0
      %p286 = por %p284, %p285
      %p287 = scmp.ne.s32.totalorder %s275, %s276
      %p288 = scmp.eq.s32.totalorder %s30, 1
      %p289 = por %p287, %p288
      %p291 = scmp.ne.s32.totalorder %s276, %s290
      %p292 = scmp.eq.s32.totalorder %s30, 0
      %p293 = por %p291, %p292
      %s294 = ssub.s32 %s24, %s31
      %p295 = scmp.eq.s32.totalorder %s294, 0
      %s297 = sadd.s32 %s296, 1
      %s298 = scalar_select %p295, %s296, %s297
      %p301 = pneg %p295
      %p302 = scmp.eq.s32.totalorder %s24, 1
      %p303 = por %p301, %p302
      %p304 = scmp.ne.s32.totalorder %s296, %s299
      %p305 = scmp.eq.s32.totalorder %s24, 0
      %p306 = por %p304, %p305
      %p307 = scmp.ne.s32.totalorder %s296, %s299
      %p308 = scmp.eq.s32.totalorder %s29, 1
      %p309 = por %p307, %p308
      %p310 = scmp.ne.s32.totalorder %s299, %s300
      %p311 = scmp.eq.s32.totalorder %s29, 0
      %p312 = por %p310, %p311
      %p313 = scmp.ne.s32.totalorder %s299, %s300
      %p314 = scmp.eq.s32.totalorder %s30, 1
      %p315 = por %p313, %p314
      %p317 = scmp.ne.s32.totalorder %s300, %s316
      %p318 = scmp.eq.s32.totalorder %s30, 0
      %p319 = por %p317, %p318
      %p320 = scmp.le.s32.totalorder 1, %s24
      %p321 = scmp.lt.s32.totalorder %s24, 3
      %p322 = pnand %p320, %p321
      %p323 = pneg %p322
      // Predicated region
      $region9: #{tpu_custom_call.1} parent=5 // pred_check
        _
      $region10: #{tpu_custom_call.1} parent=5 // pred_check_branch
        %325 = sbr.rel (%p322) target = $region12
      $region11: #{tpu_custom_call.1} parent=5 // pred_region
        %s326 = ssub.s32 %s24, 1
        // Predicated region
        $region13: #{tpu_custom_call.1} parent=11 // pred_check
          %p327 = pneg %p97
        $region14: #{tpu_custom_call.1} parent=11 // pred_check_branch
          %329 = sbr.rel (%p327) target = $region16
        $region15: #{tpu_custom_call.1} parent=11 // pred_region
          _
        $region16: #{tpu_custom_call.1} parent=11 // pred_fallthru
          _
        // Predicated region
        $region17: #{tpu_custom_call.1} parent=11 // pred_check
          %p330 = pneg %p118
        $region18: #{tpu_custom_call.1} parent=11 // pred_check_branch
          %332 = sbr.rel (%p330) target = $region20
        $region19: #{tpu_custom_call.1} parent=11 // pred_region
          _
        $region20: #{tpu_custom_call.1} parent=11 // pred_fallthru
          _
        // Predicated region
        $region21: #{tpu_custom_call.1} parent=11 // pred_check
          %p333 = pneg %p139
        $region22: #{tpu_custom_call.1} parent=11 // pred_check_branch
          %335 = sbr.rel (%p333) target = $region24
        $region23: #{tpu_custom_call.1} parent=11 // pred_region
          _
        $region24: #{tpu_custom_call.1} parent=11 // pred_fallthru
          _
        // Predicated region
        $region25: #{tpu_custom_call.1} parent=11 // pred_check
          %p336 = pneg %p160
        $region26: #{tpu_custom_call.1} parent=11 // pred_check_branch
          %338 = sbr.rel (%p336) target = $region28
        $region27: #{tpu_custom_call.1} parent=11 // pred_region
          _
        $region28: #{tpu_custom_call.1} parent=11 // pred_fallthru
          _
        // Predicated region
        $region29: #{tpu_custom_call.1} parent=11 // pred_check
          %p339 = pneg %p181
        $region30: #{tpu_custom_call.1} parent=11 // pred_check_branch
          %341 = sbr.rel (%p339) target = $region32
        $region31: #{tpu_custom_call.1} parent=11 // pred_region
          _
        $region32: #{tpu_custom_call.1} parent=11 // pred_fallthru
          _
        // Predicated region
        $region33: #{tpu_custom_call.1} parent=11 // pred_check
          %p342 = pneg %p202
        $region34: #{tpu_custom_call.1} parent=11 // pred_check_branch
          %344 = sbr.rel (%p342) target = $region36
        $region35: #{tpu_custom_call.1} parent=11 // pred_region
          _
        $region36: #{tpu_custom_call.1} parent=11 // pred_fallthru
          _
        // Predicated region
        $region37: #{tpu_custom_call.1} parent=11 // pred_check
          %p345 = pneg %p223
        $region38: #{tpu_custom_call.1} parent=11 // pred_check_branch
          %347 = sbr.rel (%p345) target = $region40
        $region39: #{tpu_custom_call.1} parent=11 // pred_region
          _
        $region40: #{tpu_custom_call.1} parent=11 // pred_fallthru
          _
        // Predicated region
        $region41: #{tpu_custom_call.1} parent=11 // pred_check
          %p348 = pneg %p244
        $region42: #{tpu_custom_call.1} parent=11 // pred_check_branch
          %350 = sbr.rel (%p348) target = $region44
        $region43: #{tpu_custom_call.1} parent=11 // pred_region
          _
        $region44: #{tpu_custom_call.1} parent=11 // pred_fallthru
          _
        // Predicated region
        $region45: #{tpu_custom_call.1} parent=11 // pred_check
          %p351 = pneg %p265
        $region46: #{tpu_custom_call.1} parent=11 // pred_check_branch
          %353 = sbr.rel (%p351) target = $region48
        $region47: #{tpu_custom_call.1} parent=11 // pred_region
          _
        $region48: #{tpu_custom_call.1} parent=11 // pred_fallthru
          _
        // Predicated region
        $region49: #{tpu_custom_call.1} parent=11 // pred_check
          %p354 = pneg %p286
        $region50: #{tpu_custom_call.1} parent=11 // pred_check_branch
          %356 = sbr.rel (%p354) target = $region52
        $region51: #{tpu_custom_call.1} parent=11 // pred_region
          _
        $region52: #{tpu_custom_call.1} parent=11 // pred_fallthru
          _
      $region12: #{tpu_custom_call.1} parent=5 // pred_fallthru
        _
      %p357 = scmp.lt.s32.totalorder %s24, 2
      // Predicated region
      $region53: #{tpu_custom_call.1} parent=5 // pred_check
        %p358 = pneg %p357
      $region54: #{tpu_custom_call.1} parent=5 // pred_check_branch
        %360 = sbr.rel (%p358) target = $region56
      $region55: #{tpu_custom_call.1} parent=5 // pred_region
        // Predicated region
        $region57: #{tpu_custom_call.1} parent=55 // pred_check
          %p361 = pneg %p44
        $region58: #{tpu_custom_call.1} parent=55 // pred_check_branch
          %363 = sbr.rel (%p361) target = $region60
        $region59: #{tpu_custom_call.1} parent=55 // pred_region
          %p364 = scmp.lt.s32.totalorder %s24, 1
          %s365 = scalar_select %p364, %s24, 1
          %s366 = smul.addr %s365, 2
          %s367 = smul.addr %s366, 8
          %s368 = scalar_lea.vmem %s0, %s367
        $region60: #{tpu_custom_call.1} parent=55 // pred_fallthru
          _
        // Predicated region
        $region61: #{tpu_custom_call.1} parent=55 // pred_check
          %p369 = pneg %p70
        $region62: #{tpu_custom_call.1} parent=55 // pred_check_branch
          %371 = sbr.rel (%p369) target = $region64
        $region63: #{tpu_custom_call.1} parent=55 // pred_region
          %s372 = sand.u32 %s60, 1
          %s373 = scalar_lea.sflag [#allocation4], %s372
          %s374 = sand.u32 %s60, 1
          %s375 = smul.addr %s374, 16
          %s376 = scalar_lea.vmem [#allocation3], %s375
          %378 = vsyncadd %s373, 0
          %s379 = smul.addr %s24, 2
          %s380 = smul.addr %s379, 8
          %s381 = scalar_lea.hbm %s1, %s380
          %s383 = sshll.u32 %s381, 4
          %s384 = int_to_ptr.hbm [resolvable:$true] %s383
          %s385 = sshll.u32 %s376, 4
          %s386 = int_to_ptr.vmem [resolvable:$true] %s385
          %388 = dma.hbm_to_vmem [thread:$0]  %s384, 256, %s386, %s373
        $region64: #{tpu_custom_call.1} parent=55 // pred_fallthru
          _
      $region56: #{tpu_custom_call.1} parent=5 // pred_fallthru
        _
      %p389 = scmp.le.s32.totalorder 1, %s24
      %p390 = scmp.lt.s32.totalorder %s24, 3
      %p391 = pnand %p389, %p390
      %p392 = pneg %p391
      // Predicated region
      $region65: #{tpu_custom_call.1} parent=5 // pred_check
        _
      $region66: #{tpu_custom_call.1} parent=5 // pred_check_branch
        %394 = sbr.rel (%p391) target = $region68
      $region67: #{tpu_custom_call.1} parent=5 // pred_region
        %s395 = ssub.s32 %s24, 1
        %s396 = sand.u32 %s63, 1
        %s397 = scalar_lea.sflag [#allocation4], %s396
        %s398 = sand.u32 %s63, 1
        %s399 = smul.addr %s398, 16
        %s400 = scalar_lea.vmem [#allocation3], %s399
        // Predicated region
        $region69: #{tpu_custom_call.1} parent=67 // pred_check
          %p401 = pneg %p76
        $region70: #{tpu_custom_call.1} parent=67 // pred_check_branch
          %403 = sbr.rel (%p401) target = $region72
        $region71: #{tpu_custom_call.1} parent=67 // pred_region
          %405 = dma.done %s397, 256
        $region72: #{tpu_custom_call.1} parent=67 // pred_fallthru
          _
        %p406 = scmp.lt.s32.totalorder %s29, 1
        %s407 = scalar_select %p406, %s29, 1
        %s408 = smul.addr %s407, 2
        %s409 = smul.addr %s408, 8
        %s410 = scalar_lea.vmem %s0, %s409
        %p411 = pneg %p50
        %p412 = pneg %p47
        %s413 = sand.u32 %s63, 1
        %s414 = scalar_lea.sflag [#allocation4], %s413
        %s415 = sand.u32 %s63, 1
        %s416 = smul.addr %s415, 16
        %s417 = scalar_lea.vmem [#allocation3], %s416
        %p418 = pneg %p76
        %p419 = pneg %p73
        %p420 = pneg %p97
        %p421 = pneg %p94
        %p422 = pneg %p118
        %p423 = pneg %p115
        %p424 = pneg %p139
        %p425 = pneg %p136
        %p426 = pneg %p160
        %p427 = pneg %p157
        %p428 = pneg %p181
        %p429 = pneg %p178
        %p430 = pneg %p202
        %p431 = pneg %p199
        %p432 = pneg %p223
        %p433 = pneg %p220
        %p434 = pneg %p244
        %p435 = pneg %p241
        %p436 = pneg %p265
        %p437 = pneg %p262
        %p438 = pneg %p286
        %p439 = pneg %p283
        %p440 = pneg %p312
        %p441 = pneg %p309
        %s442 = sand.u32 %s299, 1
        %s443 = scalar_lea.sflag [#allocation5], %s442
        %s444 = sand.u32 %s299, 1
        %s445 = smul.addr %s444, 16
        %s446 = scalar_lea.vmem [#allocation6], %s445
        %p447 = scmp.lt.s32.totalorder %s29, 1
        %s448 = scalar_select %p447, %s29, 1
        %s449 = smul.addr %s448, 2
        %s450 = smul.addr %s449, 8
        %s451 = scalar_lea.vmem %s0, %s450
        %v452 = vld [vmem:[%s2] sm:$0xff]
        %v453 = vld [vmem:[%s451] sm:$0xff]
        %v454 = vld [vmem:[%s451 + $0x8] sm:$0xff]
        %v455 = vld [vmem:[%s3] sm:$0xff]
        %457 = vset.pattern.permute.xlu0 0
        %458 = vperm.xlu0 %457, %v455
        %v459 = vpop.permute.xlu0 %458
        %vm461 = vcmask 64512
        %v463 = vsel %vm461, %v452, 0
        %465 = vmatpush.msra.mxu0 0.0
        %466 = vmatpush.msra.mxu0 0.0
        %467 = vmatpush.msra.mxu0 0.0
        %468 = vmatpush.msra.mxu0 0.0
        %469 = vmatpush.msra.mxu0 0.0
        %470 = vmatpush.msra.mxu0 0.0
        %471 = vmatpush.msra.mxu0 0.0
        %472 = vmatpush.msra.mxu0 0.0
        %473 = vmatpush.msra.mxu0 0.0
        %474 = vmatpush.msra.mxu0 0.0
        %475 = vmatpush.msra.mxu0 0.0
        %476 = vmatpush.msra.mxu0 0.0
        %477 = vmatpush.msra.mxu0 0.0
        %478 = vmatpush.msra.mxu0 0.0
        %479 = vmatpush.msra.mxu0 0.0
        %480 = vmatpush.msra.mxu0 %v453
        %481 = vmatmul.f32.gmra.mxu0 %v463
        %v482 = vpop.f32.mrf.mxu0
        %v483 = vadd.f32 %v459, %v482
        %484 = vdwg.mxu0
        %485 = vmatpush.msra.mxu0 0.0
        %486 = vmatpush.msra.mxu0 0.0
        %487 = vmatpush.msra.mxu0 0.0
        %488 = vmatpush.msra.mxu0 0.0
        %489 = vmatpush.msra.mxu0 0.0
        %490 = vmatpush.msra.mxu0 0.0
        %491 = vmatpush.msra.mxu0 0.0
        %492 = vmatpush.msra.mxu0 0.0
        %493 = vmatpush.msra.mxu0 0.0
        %494 = vmatpush.msra.mxu0 0.0
        %495 = vmatpush.msra.mxu0 0.0
        %496 = vmatpush.msra.mxu0 0.0
        %497 = vmatpush.msra.mxu0 0.0
        %498 = vmatpush.msra.mxu0 0.0
        %499 = vmatpush.msra.mxu0 0.0
        %500 = vmatpush.msra.mxu0 %v454
        %501 = vmatmul.f32.gmra.mxu0 %v463
        %v502 = vpop.f32.mrf.mxu0
        %v503 = vadd.f32 %v459, %v502
        %504 = vdwg.mxu0
        %v505 = vld [vmem:[%s4] sm:$0xff]
        %v506 = vld [vmem:[%s4 + $0x8] sm:$0xff]
        %v507 = vld [vmem:[%s400] sm:$0xff]
        %v508 = vld [vmem:[%s400 + $0x8] sm:$0xff]
        %v509 = vld [vmem:[%s5] sm:$0xff]
        %v510 = vld [vmem:[%s5 + $0x8] sm:$0xff]
        %512 = vset.pattern.permute.xlu0 0
        %513 = vperm.xlu0 %512, %v509
        %v514 = vpop.permute.xlu0 %513
        %517 = vset.pattern.permute.xlu0 0
        %518 = vperm.xlu0 %517, %v510
        %v519 = vpop.permute.xlu0 %518
        %v522 = vsel %vm461, %v505, 0
        %v525 = vsel %vm461, %v506, 0
        %527 = vmatpush.msra.mxu0 0.0
        %528 = vmatpush.msra.mxu0 0.0
        %529 = vmatpush.msra.mxu0 0.0
        %530 = vmatpush.msra.mxu0 0.0
        %531 = vmatpush.msra.mxu0 0.0
        %532 = vmatpush.msra.mxu0 0.0
        %533 = vmatpush.msra.mxu0 0.0
        %534 = vmatpush.msra.mxu0 0.0
        %535 = vmatpush.msra.mxu0 0.0
        %536 = vmatpush.msra.mxu0 0.0
        %537 = vmatpush.msra.mxu0 0.0
        %538 = vmatpush.msra.mxu0 0.0
        %539 = vmatpush.msra.mxu0 0.0
        %540 = vmatpush.msra.mxu0 0.0
        %541 = vmatpush.msra.mxu0 0.0
        %542 = vmatpush.msra.mxu0 %v507
        %543 = vmatmul.f32.gmra.mxu0 %v522
        %v544 = vpop.f32.mrf.mxu0
        %v545 = vadd.f32 %v514, %v544
        %546 = vmatmul.f32.gmra.mxu0 %v525
        %v547 = vpop.f32.mrf.mxu0
        %v548 = vadd.f32 %v519, %v547
        %549 = vdwg.mxu0
        %550 = vmatpush.msra.mxu0 0.0
        %551 = vmatpush.msra.mxu0 0.0
        %552 = vmatpush.msra.mxu0 0.0
        %553 = vmatpush.msra.mxu0 0.0
        %554 = vmatpush.msra.mxu0 0.0
        %555 = vmatpush.msra.mxu0 0.0
        %556 = vmatpush.msra.mxu0 0.0
        %557 = vmatpush.msra.mxu0 0.0
        %558 = vmatpush.msra.mxu0 0.0
        %559 = vmatpush.msra.mxu0 0.0
        %560 = vmatpush.msra.mxu0 0.0
        %561 = vmatpush.msra.mxu0 0.0
        %562 = vmatpush.msra.mxu0 0.0
        %563 = vmatpush.msra.mxu0 0.0
        %564 = vmatpush.msra.mxu0 0.0
        %565 = vmatpush.msra.mxu0 %v508
        %566 = vmatmul.f32.gmra.mxu0 %v522
        %v567 = vpop.f32.mrf.mxu0
        %v568 = vadd.f32 %v514, %v567
        %569 = vmatmul.f32.gmra.mxu0 %v525
        %v570 = vpop.f32.mrf.mxu0
        %v571 = vadd.f32 %v519, %v570
        %572 = vdwg.mxu0
        %v573 = vadd.f32 %v453, %v454
        %574 = vadd.xlane.f32.xlu0 %v573
        %v575 = vpop.xlane.xlu0 %574
        %v576 = vrcp.pop 256.0
        %v577 = vmul.f32 256.0, %v576
        %v578 = vsub.f32 1.0, %v577
        %v579 = vmul.f32 %v576, %v578
        %v580 = vadd.f32 %v576, %v579
        %vm581 = vweird.f32 %v576
        %v582 = vsel %vm581, %v576, %v580
        %v583 = vmul.f32 %v575, %v582
        %vm584 = vcmask 1041408
        %v585 = vsel %vm584, %v548, 1.0
        %v586 = vsel %vm584, %v571, 1.0
        %587 = vxpose.xlu0.b32.start [1/16] %v483, 128
        %588 = vxpose.xlu0.b32.cont [2/16] 0.0, 128
        %589 = vxpose.xlu0.b32.cont [3/16] 0.0, 128
        %590 = vxpose.xlu0.b32.cont [4/16] 0.0, 128
        %591 = vxpose.xlu0.b32.cont [5/16] 0.0, 128
        %592 = vxpose.xlu0.b32.cont [6/16] 0.0, 128
        %593 = vxpose.xlu0.b32.cont [7/16] 0.0, 128
        %594 = vxpose.xlu0.b32.cont [8/16] 0.0, 128
        %595 = vxpose.xlu0.b32.cont [9/16] 0.0, 128
        %596 = vxpose.xlu0.b32.cont [10/16] 0.0, 128
        %597 = vxpose.xlu0.b32.cont [11/16] 0.0, 128
        %598 = vxpose.xlu0.b32.cont [12/16] 0.0, 128
        %599 = vxpose.xlu0.b32.cont [13/16] 0.0, 128
        %600 = vxpose.xlu0.b32.cont [14/16] 0.0, 128
        %601 = vxpose.xlu0.b32.cont [15/16] 0.0, 128
        %602 = vxpose.xlu0.b32.end [16/16] 0.0, 128
        %v603 = vpop.trf.xlu0
        %v604 = vpop.trf.xlu0
        %v605 = vpop.trf.xlu0
        %v606 = vpop.trf.xlu0
        %v607 = vpop.trf.xlu0
        %v608 = vpop.trf.xlu0
        %v609 = vpop.trf.xlu0
        %v610 = vpop.trf.xlu0
        %v611 = vpop.trf.xlu0
        %v612 = vpop.trf.xlu0
        %v613 = vpop.trf.xlu0
        %v614 = vpop.trf.xlu0
        %v615 = vpop.trf.xlu0
        %v616 = vpop.trf.xlu0
        %v617 = vpop.trf.xlu0
        %v618 = vpop.trf.xlu0
        %619 = vxpose.xlu0.b32.start [1/16] %v503, 128
        %620 = vxpose.xlu0.b32.cont [2/16] 0.0, 128
        %621 = vxpose.xlu0.b32.cont [3/16] 0.0, 128
        %622 = vxpose.xlu0.b32.cont [4/16] 0.0, 128
        %623 = vxpose.xlu0.b32.cont [5/16] 0.0, 128
        %624 = vxpose.xlu0.b32.cont [6/16] 0.0, 128
        %625 = vxpose.xlu0.b32.cont [7/16] 0.0, 128
        %626 = vxpose.xlu0.b32.cont [8/16] 0.0, 128
        %627 = vxpose.xlu0.b32.cont [9/16] 0.0, 128
        %628 = vxpose.xlu0.b32.cont [10/16] 0.0, 128
        %629 = vxpose.xlu0.b32.cont [11/16] 0.0, 128
        %630 = vxpose.xlu0.b32.cont [12/16] 0.0, 128
        %631 = vxpose.xlu0.b32.cont [13/16] 0.0, 128
        %632 = vxpose.xlu0.b32.cont [14/16] 0.0, 128
        %633 = vxpose.xlu0.b32.cont [15/16] 0.0, 128
        %634 = vxpose.xlu0.b32.end [16/16] 0.0, 128
        %v635 = vpop.trf.xlu0
        %v636 = vpop.trf.xlu0
        %v637 = vpop.trf.xlu0
        %v638 = vpop.trf.xlu0
        %v639 = vpop.trf.xlu0
        %v640 = vpop.trf.xlu0
        %v641 = vpop.trf.xlu0
        %v642 = vpop.trf.xlu0
        %v643 = vpop.trf.xlu0
        %v644 = vpop.trf.xlu0
        %v645 = vpop.trf.xlu0
        %v646 = vpop.trf.xlu0
        %v647 = vpop.trf.xlu0
        %v648 = vpop.trf.xlu0
        %v649 = vpop.trf.xlu0
        %v650 = vpop.trf.xlu0
        %vm651 = vcmask 15360
        %v653 = vsel %vm651, %v603, 0
        %v656 = vsel %vm651, %v604, 0
        %v659 = vsel %vm651, %v605, 0
        %v662 = vsel %vm651, %v606, 0
        %v665 = vsel %vm651, %v607, 0
        %v668 = vsel %vm651, %v608, 0
        %v671 = vsel %vm651, %v609, 0
        %v674 = vsel %vm651, %v610, 0
        %v677 = vsel %vm651, %v611, 0
        %v680 = vsel %vm651, %v612, 0
        %v683 = vsel %vm651, %v613, 0
        %v686 = vsel %vm651, %v614, 0
        %v689 = vsel %vm651, %v615, 0
        %v692 = vsel %vm651, %v616, 0
        %v695 = vsel %vm651, %v617, 0
        %v698 = vsel %vm651, %v618, 0
        %v701 = vsel %vm651, %v635, 0
        %v704 = vsel %vm651, %v636, 0
        %v707 = vsel %vm651, %v637, 0
        %v710 = vsel %vm651, %v638, 0
        %v713 = vsel %vm651, %v639, 0
        %v716 = vsel %vm651, %v640, 0
        %v719 = vsel %vm651, %v641, 0
        %v722 = vsel %vm651, %v642, 0
        %v725 = vsel %vm651, %v643, 0
        %v728 = vsel %vm651, %v644, 0
        %v731 = vsel %vm651, %v645, 0
        %v734 = vsel %vm651, %v646, 0
        %v737 = vsel %vm651, %v647, 0
        %v740 = vsel %vm651, %v648, 0
        %v743 = vsel %vm651, %v649, 0
        %v746 = vsel %vm651, %v650, 0
        %v749 = vsel %vm584, %v545, 0
        %v752 = vsel %vm584, %v568, 0
        %754 = vmatpush.msra.mxu0 0.0
        %755 = vmatpush.msra.mxu0 0.0
        %756 = vmatpush.msra.mxu0 0.0
        %757 = vmatpush.msra.mxu0 0.0
        %758 = vmatpush.msra.mxu0 0.0
        %759 = vmatpush.msra.mxu0 0.0
        %760 = vmatpush.msra.mxu0 0.0
        %761 = vmatpush.msra.mxu0 0.0
        %762 = vmatpush.msra.mxu0 0.0
        %763 = vmatpush.msra.mxu0 0.0
        %764 = vmatpush.msra.mxu0 0.0
        %765 = vmatpush.msra.mxu0 0.0
        %766 = vmatpush.msra.mxu0 0.0
        %767 = vmatpush.msra.mxu0 0.0
        %768 = vmatpush.msra.mxu0 0.0
        %769 = vmatpush.msra.mxu0 %v749
        %770 = vmatmul.f32.gmra.mxu0 %v653
        %v771 = vpop.f32.mrf.mxu0
        %v772 = vadd.f32 0.0, %v771
        %773 = vmatmul.f32.gmra.mxu0 %v656
        %v774 = vpop.f32.mrf.mxu0
        %v775 = vadd.f32 0.0, %v774
        %776 = vmatmul.f32.gmra.mxu0 %v659
        %v777 = vpop.f32.mrf.mxu0
        %v778 = vadd.f32 0.0, %v777
        %779 = vmatmul.f32.gmra.mxu0 %v662
        %v780 = vpop.f32.mrf.mxu0
        %v781 = vadd.f32 0.0, %v780
        %782 = vmatmul.f32.gmra.mxu0 %v665
        %v783 = vpop.f32.mrf.mxu0
        %v784 = vadd.f32 0.0, %v783
        %785 = vmatmul.f32.gmra.mxu0 %v668
        %v786 = vpop.f32.mrf.mxu0
        %v787 = vadd.f32 0.0, %v786
        %788 = vmatmul.f32.gmra.mxu0 %v671
        %v789 = vpop.f32.mrf.mxu0
        %v790 = vadd.f32 0.0, %v789
        %791 = vmatmul.f32.gmra.mxu0 %v674
        %v792 = vpop.f32.mrf.mxu0
        %v793 = vadd.f32 0.0, %v792
        %794 = vmatmul.f32.gmra.mxu0 %v677
        %v795 = vpop.f32.mrf.mxu0
        %v796 = vadd.f32 0.0, %v795
        %797 = vmatmul.f32.gmra.mxu0 %v680
        %v798 = vpop.f32.mrf.mxu0
        %v799 = vadd.f32 0.0, %v798
        %800 = vmatmul.f32.gmra.mxu0 %v683
        %v801 = vpop.f32.mrf.mxu0
        %v802 = vadd.f32 0.0, %v801
        %803 = vmatmul.f32.gmra.mxu0 %v686
        %v804 = vpop.f32.mrf.mxu0
        %v805 = vadd.f32 0.0, %v804
        %806 = vmatmul.f32.gmra.mxu0 %v689
        %v807 = vpop.f32.mrf.mxu0
        %v808 = vadd.f32 0.0, %v807
        %809 = vmatmul.f32.gmra.mxu0 %v692
        %v810 = vpop.f32.mrf.mxu0
        %v811 = vadd.f32 0.0, %v810
        %812 = vmatmul.f32.gmra.mxu0 %v695
        %v813 = vpop.f32.mrf.mxu0
        %v814 = vadd.f32 0.0, %v813
        %815 = vmatmul.f32.gmra.mxu0 %v698
        %v816 = vpop.f32.mrf.mxu0
        %v817 = vadd.f32 0.0, %v816
        %818 = vmatmul.f32.gmra.mxu0 %v701
        %v819 = vpop.f32.mrf.mxu0
        %v820 = vadd.f32 0.0, %v819
        %821 = vmatmul.f32.gmra.mxu0 %v704
        %v822 = vpop.f32.mrf.mxu0
        %v823 = vadd.f32 0.0, %v822
        %824 = vmatmul.f32.gmra.mxu0 %v707
        %v825 = vpop.f32.mrf.mxu0
        %v826 = vadd.f32 0.0, %v825
        %827 = vmatmul.f32.gmra.mxu0 %v710
        %v828 = vpop.f32.mrf.mxu0
        %v829 = vadd.f32 0.0, %v828
        %830 = vmatmul.f32.gmra.mxu0 %v713
        %v831 = vpop.f32.mrf.mxu0
        %v832 = vadd.f32 0.0, %v831
        %833 = vmatmul.f32.gmra.mxu0 %v716
        %v834 = vpop.f32.mrf.mxu0
        %v835 = vadd.f32 0.0, %v834
        %836 = vmatmul.f32.gmra.mxu0 %v719
        %v837 = vpop.f32.mrf.mxu0
        %v838 = vadd.f32 0.0, %v837
        %839 = vmatmul.f32.gmra.mxu0 %v722
        %v840 = vpop.f32.mrf.mxu0
        %v841 = vadd.f32 0.0, %v840
        %842 = vmatmul.f32.gmra.mxu0 %v725
        %v843 = vpop.f32.mrf.mxu0
        %v844 = vadd.f32 0.0, %v843
        %845 = vmatmul.f32.gmra.mxu0 %v728
        %v846 = vpop.f32.mrf.mxu0
        %v847 = vadd.f32 0.0, %v846
        %848 = vmatmul.f32.gmra.mxu0 %v731
        %v849 = vpop.f32.mrf.mxu0
        %v850 = vadd.f32 0.0, %v849
        %851 = vmatmul.f32.gmra.mxu0 %v734
        %v852 = vpop.f32.mrf.mxu0
        %v853 = vadd.f32 0.0, %v852
        %854 = vmatmul.f32.gmra.mxu0 %v737
        %v855 = vpop.f32.mrf.mxu0
        %v856 = vadd.f32 0.0, %v855
        %857 = vmatmul.f32.gmra.mxu0 %v740
        %v858 = vpop.f32.mrf.mxu0
        %v859 = vadd.f32 0.0, %v858
        %860 = vmatmul.f32.gmra.mxu0 %v743
        %v861 = vpop.f32.mrf.mxu0
        %v862 = vadd.f32 0.0, %v861
        %863 = vmatmul.f32.gmra.mxu0 %v746
        %v864 = vpop.f32.mrf.mxu0
        %v865 = vadd.f32 0.0, %v864
        %866 = vdwg.mxu0
        %867 = vmatpush.msra.mxu0 0.0
        %868 = vmatpush.msra.mxu0 0.0
        %869 = vmatpush.msra.mxu0 0.0
        %870 = vmatpush.msra.mxu0 0.0
        %871 = vmatpush.msra.mxu0 0.0
        %872 = vmatpush.msra.mxu0 0.0
        %873 = vmatpush.msra.mxu0 0.0
        %874 = vmatpush.msra.mxu0 0.0
        %875 = vmatpush.msra.mxu0 0.0
        %876 = vmatpush.msra.mxu0 0.0
        %877 = vmatpush.msra.mxu0 0.0
        %878 = vmatpush.msra.mxu0 0.0
        %879 = vmatpush.msra.mxu0 0.0
        %880 = vmatpush.msra.mxu0 0.0
        %881 = vmatpush.msra.mxu0 0.0
        %882 = vmatpush.msra.mxu0 %v752
        %883 = vmatmul.f32.gmra.mxu0 %v653
        %v884 = vpop.f32.mrf.mxu0
        %v885 = vadd.f32 0.0, %v884
        %886 = vmatmul.f32.gmra.mxu0 %v656
        %v887 = vpop.f32.mrf.mxu0
        %v888 = vadd.f32 0.0, %v887
        %889 = vmatmul.f32.gmra.mxu0 %v659
        %v890 = vpop.f32.mrf.mxu0
        %v891 = vadd.f32 0.0, %v890
        %892 = vmatmul.f32.gmra.mxu0 %v662
        %v893 = vpop.f32.mrf.mxu0
        %v894 = vadd.f32 0.0, %v893
        %895 = vmatmul.f32.gmra.mxu0 %v665
        %v896 = vpop.f32.mrf.mxu0
        %v897 = vadd.f32 0.0, %v896
        %898 = vmatmul.f32.gmra.mxu0 %v668
        %v899 = vpop.f32.mrf.mxu0
        %v900 = vadd.f32 0.0, %v899
        %901 = vmatmul.f32.gmra.mxu0 %v671
        %v902 = vpop.f32.mrf.mxu0
        %v903 = vadd.f32 0.0, %v902
        %904 = vmatmul.f32.gmra.mxu0 %v674
        %v905 = vpop.f32.mrf.mxu0
        %v906 = vadd.f32 0.0, %v905
        %907 = vmatmul.f32.gmra.mxu0 %v677
        %v908 = vpop.f32.mrf.mxu0
        %v909 = vadd.f32 0.0, %v908
        %910 = vmatmul.f32.gmra.mxu0 %v680
        %v911 = vpop.f32.mrf.mxu0
        %v912 = vadd.f32 0.0, %v911
        %913 = vmatmul.f32.gmra.mxu0 %v683
        %v914 = vpop.f32.mrf.mxu0
        %v915 = vadd.f32 0.0, %v914
        %916 = vmatmul.f32.gmra.mxu0 %v686
        %v917 = vpop.f32.mrf.mxu0
        %v918 = vadd.f32 0.0, %v917
        %919 = vmatmul.f32.gmra.mxu0 %v689
        %v920 = vpop.f32.mrf.mxu0
        %v921 = vadd.f32 0.0, %v920
        %922 = vmatmul.f32.gmra.mxu0 %v692
        %v923 = vpop.f32.mrf.mxu0
        %v924 = vadd.f32 0.0, %v923
        %925 = vmatmul.f32.gmra.mxu0 %v695
        %v926 = vpop.f32.mrf.mxu0
        %v927 = vadd.f32 0.0, %v926
        %928 = vmatmul.f32.gmra.mxu0 %v698
        %v929 = vpop.f32.mrf.mxu0
        %v930 = vadd.f32 0.0, %v929
        %931 = vmatmul.f32.gmra.mxu0 %v701
        %v932 = vpop.f32.mrf.mxu0
        %v933 = vadd.f32 0.0, %v932
        %934 = vmatmul.f32.gmra.mxu0 %v704
        %v935 = vpop.f32.mrf.mxu0
        %v936 = vadd.f32 0.0, %v935
        %937 = vmatmul.f32.gmra.mxu0 %v707
        %v938 = vpop.f32.mrf.mxu0
        %v939 = vadd.f32 0.0, %v938
        %940 = vmatmul.f32.gmra.mxu0 %v710
        %v941 = vpop.f32.mrf.mxu0
        %v942 = vadd.f32 0.0, %v941
        %943 = vmatmul.f32.gmra.mxu0 %v713
        %v944 = vpop.f32.mrf.mxu0
        %v945 = vadd.f32 0.0, %v944
        %946 = vmatmul.f32.gmra.mxu0 %v716
        %v947 = vpop.f32.mrf.mxu0
        %v948 = vadd.f32 0.0, %v947
        %949 = vmatmul.f32.gmra.mxu0 %v719
        %v950 = vpop.f32.mrf.mxu0
        %v951 = vadd.f32 0.0, %v950
        %952 = vmatmul.f32.gmra.mxu0 %v722
        %v953 = vpop.f32.mrf.mxu0
        %v954 = vadd.f32 0.0, %v953
        %955 = vmatmul.f32.gmra.mxu0 %v725
        %v956 = vpop.f32.mrf.mxu0
        %v957 = vadd.f32 0.0, %v956
        %958 = vmatmul.f32.gmra.mxu0 %v728
        %v959 = vpop.f32.mrf.mxu0
        %v960 = vadd.f32 0.0, %v959
        %961 = vmatmul.f32.gmra.mxu0 %v731
        %v962 = vpop.f32.mrf.mxu0
        %v963 = vadd.f32 0.0, %v962
        %964 = vmatmul.f32.gmra.mxu0 %v734
        %v965 = vpop.f32.mrf.mxu0
        %v966 = vadd.f32 0.0, %v965
        %967 = vmatmul.f32.gmra.mxu0 %v737
        %v968 = vpop.f32.mrf.mxu0
        %v969 = vadd.f32 0.0, %v968
        %970 = vmatmul.f32.gmra.mxu0 %v740
        %v971 = vpop.f32.mrf.mxu0
        %v972 = vadd.f32 0.0, %v971
        %973 = vmatmul.f32.gmra.mxu0 %v743
        %v974 = vpop.f32.mrf.mxu0
        %v975 = vadd.f32 0.0, %v974
        %976 = vmatmul.f32.gmra.mxu0 %v746
        %v977 = vpop.f32.mrf.mxu0
        %v978 = vadd.f32 0.0, %v977
        %979 = vdwg.mxu0
        %v980 = vmax.f32 %v772, %v885
        %981 = vmax.xlane.f32.xlu0 %v980
        %v982 = vpop.xlane.xlu0 %981
        %v983 = vmax.f32 %v775, %v888
        %984 = vmax.xlane.f32.xlu0 %v983
        %v985 = vpop.xlane.xlu0 %984
        %v986 = vmax.f32 %v778, %v891
        %987 = vmax.xlane.f32.xlu0 %v986
        %v988 = vpop.xlane.xlu0 %987
        %v989 = vmax.f32 %v781, %v894
        %990 = vmax.xlane.f32.xlu0 %v989
        %v991 = vpop.xlane.xlu0 %990
        %v992 = vmax.f32 %v784, %v897
        %993 = vmax.xlane.f32.xlu0 %v992
        %v994 = vpop.xlane.xlu0 %993
        %v995 = vmax.f32 %v787, %v900
        %996 = vmax.xlane.f32.xlu0 %v995
        %v997 = vpop.xlane.xlu0 %996
        %v998 = vmax.f32 %v790, %v903
        %999 = vmax.xlane.f32.xlu0 %v998
        %v1000 = vpop.xlane.xlu0 %999
        %v1001 = vmax.f32 %v793, %v906
        %1002 = vmax.xlane.f32.xlu0 %v1001
        %v1003 = vpop.xlane.xlu0 %1002
        %v1004 = vmax.f32 %v796, %v909
        %1005 = vmax.xlane.f32.xlu0 %v1004
        %v1006 = vpop.xlane.xlu0 %1005
        %v1007 = vmax.f32 %v799, %v912
        %1008 = vmax.xlane.f32.xlu0 %v1007
        %v1009 = vpop.xlane.xlu0 %1008
        %v1010 = vmax.f32 %v802, %v915
        %1011 = vmax.xlane.f32.xlu0 %v1010
        %v1012 = vpop.xlane.xlu0 %1011
        %v1013 = vmax.f32 %v805, %v918
        %1014 = vmax.xlane.f32.xlu0 %v1013
        %v1015 = vpop.xlane.xlu0 %1014
        %v1016 = vmax.f32 %v808, %v921
        %1017 = vmax.xlane.f32.xlu0 %v1016
        %v1018 = vpop.xlane.xlu0 %1017
        %v1019 = vmax.f32 %v811, %v924
        %1020 = vmax.xlane.f32.xlu0 %v1019
        %v1021 = vpop.xlane.xlu0 %1020
        %v1022 = vmax.f32 %v814, %v927
        %1023 = vmax.xlane.f32.xlu0 %v1022
        %v1024 = vpop.xlane.xlu0 %1023
        %v1025 = vmax.f32 %v817, %v930
        %1026 = vmax.xlane.f32.xlu0 %v1025
        %v1027 = vpop.xlane.xlu0 %1026
        %v1028 = vmax.f32 %v820, %v933
        %1029 = vmax.xlane.f32.xlu0 %v1028
        %v1030 = vpop.xlane.xlu0 %1029
        %v1031 = vmax.f32 %v823, %v936
        %1032 = vmax.xlane.f32.xlu0 %v1031
        %v1033 = vpop.xlane.xlu0 %1032
        %v1034 = vmax.f32 %v826, %v939
        %1035 = vmax.xlane.f32.xlu0 %v1034
        %v1036 = vpop.xlane.xlu0 %1035
        %v1037 = vmax.f32 %v829, %v942
        %1038 = vmax.xlane.f32.xlu0 %v1037
        %v1039 = vpop.xlane.xlu0 %1038
        %v1040 = vmax.f32 %v832, %v945
        %1041 = vmax.xlane.f32.xlu0 %v1040
        %v1042 = vpop.xlane.xlu0 %1041
        %v1043 = vmax.f32 %v835, %v948
        %1044 = vmax.xlane.f32.xlu0 %v1043
        %v1045 = vpop.xlane.xlu0 %1044
        %v1046 = vmax.f32 %v838, %v951
        %1047 = vmax.xlane.f32.xlu0 %v1046
        %v1048 = vpop.xlane.xlu0 %1047
        %v1049 = vmax.f32 %v841, %v954
        %1050 = vmax.xlane.f32.xlu0 %v1049
        %v1051 = vpop.xlane.xlu0 %1050
        %v1052 = vmax.f32 %v844, %v957
        %1053 = vmax.xlane.f32.xlu0 %v1052
        %v1054 = vpop.xlane.xlu0 %1053
        %v1055 = vmax.f32 %v847, %v960
        %1056 = vmax.xlane.f32.xlu0 %v1055
        %v1057 = vpop.xlane.xlu0 %1056
        %v1058 = vmax.f32 %v850, %v963
        %1059 = vmax.xlane.f32.xlu0 %v1058
        %v1060 = vpop.xlane.xlu0 %1059
        %v1061 = vmax.f32 %v853, %v966
        %1062 = vmax.xlane.f32.xlu0 %v1061
        %v1063 = vpop.xlane.xlu0 %1062
        %v1064 = vmax.f32 %v856, %v969
        %1065 = vmax.xlane.f32.xlu0 %v1064
        %v1066 = vpop.xlane.xlu0 %1065
        %v1067 = vmax.f32 %v859, %v972
        %1068 = vmax.xlane.f32.xlu0 %v1067
        %v1069 = vpop.xlane.xlu0 %1068
        %v1070 = vmax.f32 %v862, %v975
        %1071 = vmax.xlane.f32.xlu0 %v1070
        %v1072 = vpop.xlane.xlu0 %1071
        %v1073 = vmax.f32 %v865, %v978
        %1074 = vmax.xlane.f32.xlu0 %v1073
        %v1075 = vpop.xlane.xlu0 %1074
        %v1076 = vsub.f32 %v772, %v982
        %v1077 = vsub.f32 %v885, %v982
        %v1078 = vsub.f32 %v775, %v985
        %v1079 = vsub.f32 %v888, %v985
        %v1080 = vsub.f32 %v778, %v988
        %v1081 = vsub.f32 %v891, %v988
        %v1082 = vsub.f32 %v781, %v991
        %v1083 = vsub.f32 %v894, %v991
        %v1084 = vsub.f32 %v784, %v994
        %v1085 = vsub.f32 %v897, %v994
        %v1086 = vsub.f32 %v787, %v997
        %v1087 = vsub.f32 %v900, %v997
        %v1088 = vsub.f32 %v790, %v1000
        %v1089 = vsub.f32 %v903, %v1000
        %v1090 = vsub.f32 %v793, %v1003
        %v1091 = vsub.f32 %v906, %v1003
        %v1092 = vsub.f32 %v796, %v1006
        %v1093 = vsub.f32 %v909, %v1006
        %v1094 = vsub.f32 %v799, %v1009
        %v1095 = vsub.f32 %v912, %v1009
        %v1096 = vsub.f32 %v802, %v1012
        %v1097 = vsub.f32 %v915, %v1012
        %v1098 = vsub.f32 %v805, %v1015
        %v1099 = vsub.f32 %v918, %v1015
        %v1100 = vsub.f32 %v808, %v1018
        %v1101 = vsub.f32 %v921, %v1018
        %v1102 = vsub.f32 %v811, %v1021
        %v1103 = vsub.f32 %v924, %v1021
        %v1104 = vsub.f32 %v814, %v1024
        %v1105 = vsub.f32 %v927, %v1024
        %v1106 = vsub.f32 %v817, %v1027
        %v1107 = vsub.f32 %v930, %v1027
        %v1108 = vsub.f32 %v820, %v1030
        %v1109 = vsub.f32 %v933, %v1030
        %v1110 = vsub.f32 %v823, %v1033
        %v1111 = vsub.f32 %v936, %v1033
        %v1112 = vsub.f32 %v826, %v1036
        %v1113 = vsub.f32 %v939, %v1036
        %v1114 = vsub.f32 %v829, %v1039
        %v1115 = vsub.f32 %v942, %v1039
        %v1116 = vsub.f32 %v832, %v1042
        %v1117 = vsub.f32 %v945, %v1042
        %v1118 = vsub.f32 %v835, %v1045
        %v1119 = vsub.f32 %v948, %v1045
        %v1120 = vsub.f32 %v838, %v1048
        %v1121 = vsub.f32 %v951, %v1048
        %v1122 = vsub.f32 %v841, %v1051
        %v1123 = vsub.f32 %v954, %v1051
        %v1124 = vsub.f32 %v844, %v1054
        %v1125 = vsub.f32 %v957, %v1054
        %v1126 = vsub.f32 %v847, %v1057
        %v1127 = vsub.f32 %v960, %v1057
        %v1128 = vsub.f32 %v850, %v1060
        %v1129 = vsub.f32 %v963, %v1060
        %v1130 = vsub.f32 %v853, %v1063
        %v1131 = vsub.f32 %v966, %v1063
        %v1132 = vsub.f32 %v856, %v1066
        %v1133 = vsub.f32 %v969, %v1066
        %v1134 = vsub.f32 %v859, %v1069
        %v1135 = vsub.f32 %v972, %v1069
        %v1136 = vsub.f32 %v862, %v1072
        %v1137 = vsub.f32 %v975, %v1072
        %v1138 = vsub.f32 %v865, %v1075
        %v1139 = vsub.f32 %v978, %v1075
        %v1140 = vmul.f32 %v1076, 1.442695
        %v1141 = vpow.pop %v1140
        %v1142 = vmul.f32 %v1077, 1.442695
        %v1143 = vpow.pop %v1142
        %v1144 = vmul.f32 %v1078, 1.442695
        %v1145 = vpow.pop %v1144
        %v1146 = vmul.f32 %v1079, 1.442695
        %v1147 = vpow.pop %v1146
        %v1148 = vmul.f32 %v1080, 1.442695
        %v1149 = vpow.pop %v1148
        %v1150 = vmul.f32 %v1081, 1.442695
        %v1151 = vpow.pop %v1150
        %v1152 = vmul.f32 %v1082, 1.442695
        %v1153 = vpow.pop %v1152
        %v1154 = vmul.f32 %v1083, 1.442695
        %v1155 = vpow.pop %v1154
        %v1156 = vmul.f32 %v1084, 1.442695
        %v1157 = vpow.pop %v1156
        %v1158 = vmul.f32 %v1085, 1.442695
        %v1159 = vpow.pop %v1158
        %v1160 = vmul.f32 %v1086, 1.442695
        %v1161 = vpow.pop %v1160
        %v1162 = vmul.f32 %v1087, 1.442695
        %v1163 = vpow.pop %v1162
        %v1164 = vmul.f32 %v1088, 1.442695
        %v1165 = vpow.pop %v1164
        %v1166 = vmul.f32 %v1089, 1.442695
        %v1167 = vpow.pop %v1166
        %v1168 = vmul.f32 %v1090, 1.442695
        %v1169 = vpow.pop %v1168
        %v1170 = vmul.f32 %v1091, 1.442695
        %v1171 = vpow.pop %v1170
        %v1172 = vmul.f32 %v1092, 1.442695
        %v1173 = vpow.pop %v1172
        %v1174 = vmul.f32 %v1093, 1.442695
        %v1175 = vpow.pop %v1174
        %v1176 = vmul.f32 %v1094, 1.442695
        %v1177 = vpow.pop %v1176
        %v1178 = vmul.f32 %v1095, 1.442695
        %v1179 = vpow.pop %v1178
        %v1180 = vmul.f32 %v1096, 1.442695
        %v1181 = vpow.pop %v1180
        %v1182 = vmul.f32 %v1097, 1.442695
        %v1183 = vpow.pop %v1182
        %v1184 = vmul.f32 %v1098, 1.442695
        %v1185 = vpow.pop %v1184
        %v1186 = vmul.f32 %v1099, 1.442695
        %v1187 = vpow.pop %v1186
        %v1188 = vmul.f32 %v1100, 1.442695
        %v1189 = vpow.pop %v1188
        %v1190 = vmul.f32 %v1101, 1.442695
        %v1191 = vpow.pop %v1190
        %v1192 = vmul.f32 %v1102, 1.442695
        %v1193 = vpow.pop %v1192
        %v1194 = vmul.f32 %v1103, 1.442695
        %v1195 = vpow.pop %v1194
        %v1196 = vmul.f32 %v1104, 1.442695
        %v1197 = vpow.pop %v1196
        %v1198 = vmul.f32 %v1105, 1.442695
        %v1199 = vpow.pop %v1198
        %v1200 = vmul.f32 %v1106, 1.442695
        %v1201 = vpow.pop %v1200
        %v1202 = vmul.f32 %v1107, 1.442695
        %v1203 = vpow.pop %v1202
        %v1204 = vmul.f32 %v1108, 1.442695
        %v1205 = vpow.pop %v1204
        %v1206 = vmul.f32 %v1109, 1.442695
        %v1207 = vpow.pop %v1206
        %v1208 = vmul.f32 %v1110, 1.442695
        %v1209 = vpow.pop %v1208
        %v1210 = vmul.f32 %v1111, 1.442695
        %v1211 = vpow.pop %v1210
        %v1212 = vmul.f32 %v1112, 1.442695
        %v1213 = vpow.pop %v1212
        %v1214 = vmul.f32 %v1113, 1.442695
        %v1215 = vpow.pop %v1214
        %v1216 = vmul.f32 %v1114, 1.442695
        %v1217 = vpow.pop %v1216
        %v1218 = vmul.f32 %v1115, 1.442695
        %v1219 = vpow.pop %v1218
        %v1220 = vmul.f32 %v1116, 1.442695
        %v1221 = vpow.pop %v1220
        %v1222 = vmul.f32 %v1117, 1.442695
        %v1223 = vpow.pop %v1222
        %v1224 = vmul.f32 %v1118, 1.442695
        %v1225 = vpow.pop %v1224
        %v1226 = vmul.f32 %v1119, 1.442695
        %v1227 = vpow.pop %v1226
        %v1228 = vmul.f32 %v1120, 1.442695
        %v1229 = vpow.pop %v1228
        %v1230 = vmul.f32 %v1121, 1.442695
        %v1231 = vpow.pop %v1230
        %v1232 = vmul.f32 %v1122, 1.442695
        %v1233 = vpow.pop %v1232
        %v1234 = vmul.f32 %v1123, 1.442695
        %v1235 = vpow.pop %v1234
        %v1236 = vmul.f32 %v1124, 1.442695
        %v1237 = vpow.pop %v1236
        %v1238 = vmul.f32 %v1125, 1.442695
        %v1239 = vpow.pop %v1238
        %v1240 = vmul.f32 %v1126, 1.442695
        %v1241 = vpow.pop %v1240
        %v1242 = vmul.f32 %v1127, 1.442695
        %v1243 = vpow.pop %v1242
        %v1244 = vmul.f32 %v1128, 1.442695
        %v1245 = vpow.pop %v1244
        %v1246 = vmul.f32 %v1129, 1.442695
        %v1247 = vpow.pop %v1246
        %v1248 = vmul.f32 %v1130, 1.442695
        %v1249 = vpow.pop %v1248
        %v1250 = vmul.f32 %v1131, 1.442695
        %v1251 = vpow.pop %v1250
        %v1252 = vmul.f32 %v1132, 1.442695
        %v1253 = vpow.pop %v1252
        %v1254 = vmul.f32 %v1133, 1.442695
        %v1255 = vpow.pop %v1254
        %v1256 = vmul.f32 %v1134, 1.442695
        %v1257 = vpow.pop %v1256
        %v1258 = vmul.f32 %v1135, 1.442695
        %v1259 = vpow.pop %v1258
        %v1260 = vmul.f32 %v1136, 1.442695
        %v1261 = vpow.pop %v1260
        %v1262 = vmul.f32 %v1137, 1.442695
        %v1263 = vpow.pop %v1262
        %v1264 = vmul.f32 %v1138, 1.442695
        %v1265 = vpow.pop %v1264
        %v1266 = vmul.f32 %v1139, 1.442695
        %v1267 = vpow.pop %v1266
        %1268 = vmatpush.xpose.msra.mxu0 %v1201
        %1269 = vmatpush.xpose.msra.mxu0 %v1197
        %1270 = vmatpush.xpose.msra.mxu0 %v1193
        %1271 = vmatpush.xpose.msra.mxu0 %v1189
        %1272 = vmatpush.xpose.msra.mxu0 %v1185
        %1273 = vmatpush.xpose.msra.mxu0 %v1181
        %1274 = vmatpush.xpose.msra.mxu0 %v1177
        %1275 = vmatpush.xpose.msra.mxu0 %v1173
        %1276 = vmatpush.xpose.msra.mxu0 %v1169
        %1277 = vmatpush.xpose.msra.mxu0 %v1165
        %1278 = vmatpush.xpose.msra.mxu0 %v1161
        %1279 = vmatpush.xpose.msra.mxu0 %v1157
        %1280 = vmatpush.xpose.msra.mxu0 %v1153
        %1281 = vmatpush.xpose.msra.mxu0 %v1149
        %1282 = vmatpush.xpose.msra.mxu0 %v1145
        %1283 = vmatpush.xpose.msra.mxu0 %v1141
        %1284 = vmatmul.f32.gmra.mxu0 %v585
        %v1285 = vpop.f32.mrf.mxu0
        %v1286 = vadd.f32 0.0, %v1285
        %1287 = vdwg.mxu0
        %1288 = vmatpush.xpose.msra.mxu0 %v1203
        %1289 = vmatpush.xpose.msra.mxu0 %v1199
        %1290 = vmatpush.xpose.msra.mxu0 %v1195
        %1291 = vmatpush.xpose.msra.mxu0 %v1191
        %1292 = vmatpush.xpose.msra.mxu0 %v1187
        %1293 = vmatpush.xpose.msra.mxu0 %v1183
        %1294 = vmatpush.xpose.msra.mxu0 %v1179
        %1295 = vmatpush.xpose.msra.mxu0 %v1175
        %1296 = vmatpush.xpose.msra.mxu0 %v1171
        %1297 = vmatpush.xpose.msra.mxu0 %v1167
        %1298 = vmatpush.xpose.msra.mxu0 %v1163
        %1299 = vmatpush.xpose.msra.mxu0 %v1159
        %1300 = vmatpush.xpose.msra.mxu0 %v1155
        %1301 = vmatpush.xpose.msra.mxu0 %v1151
        %1302 = vmatpush.xpose.msra.mxu0 %v1147
        %1303 = vmatpush.xpose.msra.mxu0 %v1143
        %1304 = vmatmul.f32.gmra.mxu0 %v586
        %v1305 = vpop.f32.mrf.mxu0
        %v1306 = vadd.f32 %v1286, %v1305
        %1307 = vdwg.mxu0
        %1308 = vmatpush.xpose.msra.mxu0 %v1265
        %1309 = vmatpush.xpose.msra.mxu0 %v1261
        %1310 = vmatpush.xpose.msra.mxu0 %v1257
        %1311 = vmatpush.xpose.msra.mxu0 %v1253
        %1312 = vmatpush.xpose.msra.mxu0 %v1249
        %1313 = vmatpush.xpose.msra.mxu0 %v1245
        %1314 = vmatpush.xpose.msra.mxu0 %v1241
        %1315 = vmatpush.xpose.msra.mxu0 %v1237
        %1316 = vmatpush.xpose.msra.mxu0 %v1233
        %1317 = vmatpush.xpose.msra.mxu0 %v1229
        %1318 = vmatpush.xpose.msra.mxu0 %v1225
        %1319 = vmatpush.xpose.msra.mxu0 %v1221
        %1320 = vmatpush.xpose.msra.mxu0 %v1217
        %1321 = vmatpush.xpose.msra.mxu0 %v1213
        %1322 = vmatpush.xpose.msra.mxu0 %v1209
        %1323 = vmatpush.xpose.msra.mxu0 %v1205
        %1324 = vmatmul.f32.gmra.mxu0 %v585
        %v1325 = vpop.f32.mrf.mxu0
        %v1326 = vadd.f32 0.0, %v1325
        %1327 = vdwg.mxu0
        %1328 = vmatpush.xpose.msra.mxu0 %v1267
        %1329 = vmatpush.xpose.msra.mxu0 %v1263
        %1330 = vmatpush.xpose.msra.mxu0 %v1259
        %1331 = vmatpush.xpose.msra.mxu0 %v1255
        %1332 = vmatpush.xpose.msra.mxu0 %v1251
        %1333 = vmatpush.xpose.msra.mxu0 %v1247
        %1334 = vmatpush.xpose.msra.mxu0 %v1243
        %1335 = vmatpush.xpose.msra.mxu0 %v1239
        %1336 = vmatpush.xpose.msra.mxu0 %v1235
        %1337 = vmatpush.xpose.msra.mxu0 %v1231
        %1338 = vmatpush.xpose.msra.mxu0 %v1227
        %1339 = vmatpush.xpose.msra.mxu0 %v1223
        %1340 = vmatpush.xpose.msra.mxu0 %v1219
        %1341 = vmatpush.xpose.msra.mxu0 %v1215
        %1342 = vmatpush.xpose.msra.mxu0 %v1211
        %1343 = vmatpush.xpose.msra.mxu0 %v1207
        %1344 = vmatmul.f32.gmra.mxu0 %v586
        %v1345 = vpop.f32.mrf.mxu0
        %v1346 = vadd.f32 %v1326, %v1345
        %1347 = vdwg.mxu0
        %v1348 = vrcp.pop %v1306
        %v1349 = vmul.f32 %v1306, %v1348
        %v1350 = vsub.f32 1.0, %v1349
        %v1351 = vmul.f32 %v1348, %v1350
        %v1352 = vadd.f32 %v1348, %v1351
        %vm1353 = vweird.f32 %v1306
        %vm1354 = vweird.f32 %v1348
        %vm1355 = vmor %vm1353, %vm1354
        %v1356 = vsel %vm1355, %v1348, %v1352
        %v1357 = vand.u32 2147483647, %v1306
        %vm1358 = vcmp.eq.f32.partialorder %v1357, 8.507059e+37
        %v1359 = vand.u32 %v1306, 2147483648
        %v1360 = vor.u32 1.1754944e-38, %v1359
        %v1361 = vsel %vm1358, %v1360, %v1356
        %v1362 = vrcp.pop %v1346
        %v1363 = vmul.f32 %v1346, %v1362
        %v1364 = vsub.f32 1.0, %v1363
        %v1365 = vmul.f32 %v1362, %v1364
        %v1366 = vadd.f32 %v1362, %v1365
        %vm1367 = vweird.f32 %v1346
        %vm1368 = vweird.f32 %v1362
        %vm1369 = vmor %vm1367, %vm1368
        %v1370 = vsel %vm1369, %v1362, %v1366
        %v1371 = vand.u32 2147483647, %v1346
        %vm1372 = vcmp.eq.f32.partialorder %v1371, 8.507059e+37
        %v1373 = vand.u32 %v1346, 2147483648
        %v1374 = vor.u32 1.1754944e-38, %v1373
        %v1375 = vsel %vm1372, %v1374, %v1370
        %v1376 = vperm.slane %v1361, 2
        %v1377 = vperm.slane %v1375, 2
        %v1378 = vmul.f32 %v1306, %v1376
        %v1379 = vmul.f32 %v1346, %v1377
        %1380 = vst [vmem:[#allocation2] sm:$0x3] %v1378
        %1381 = vst [vmem:[#allocation2 + $0x8] sm:$0x3] %v1379
        %v1384 = vrot.slane %v548, 2
        %v1385 = vrot.slane %v571, 2
        %v1388 = vsel %vm584, %v1384, 1.0
        %v1389 = vsel %vm584, %v1385, 1.0
        %v1392 = vrot.slane %v483, 2
        %v1393 = vrot.slane %v503, 2
        %1396 = vxpose.xlu0.b32.start [1/16] %v1392, 128
        %1397 = vxpose.xlu0.b32.cont [2/16] 0.0, 128
        %1398 = vxpose.xlu0.b32.cont [3/16] 0.0, 128
        %1399 = vxpose.xlu0.b32.cont [4/16] 0.0, 128
        %1400 = vxpose.xlu0.b32.cont [5/16] 0.0, 128
        %1401 = vxpose.xlu0.b32.cont [6/16] 0.0, 128
        %1402 = vxpose.xlu0.b32.cont [7/16] 0.0, 128
        %1403 = vxpose.xlu0.b32.cont [8/16] 0.0, 128
        %1404 = vxpose.xlu0.b32.cont [9/16] 0.0, 128
        %1405 = vxpose.xlu0.b32.cont [10/16] 0.0, 128
        %1406 = vxpose.xlu0.b32.cont [11/16] 0.0, 128
        %1407 = vxpose.xlu0.b32.cont [12/16] 0.0, 128
        %1408 = vxpose.xlu0.b32.cont [13/16] 0.0, 128
        %1409 = vxpose.xlu0.b32.cont [14/16] 0.0, 128
        %1410 = vxpose.xlu0.b32.cont [15/16] 0.0, 128
        %1411 = vxpose.xlu0.b32.end [16/16] 0.0, 128
        %v1412 = vpop.trf.xlu0
        %v1413 = vpop.trf.xlu0
        %v1414 = vpop.trf.xlu0
        %v1415 = vpop.trf.xlu0
        %v1416 = vpop.trf.xlu0
        %v1417 = vpop.trf.xlu0
        %v1418 = vpop.trf.xlu0
        %v1419 = vpop.trf.xlu0
        %v1420 = vpop.trf.xlu0
        %v1421 = vpop.trf.xlu0
        %v1422 = vpop.trf.xlu0
        %v1423 = vpop.trf.xlu0
        %v1424 = vpop.trf.xlu0
        %v1425 = vpop.trf.xlu0
        %v1426 = vpop.trf.xlu0
        %v1427 = vpop.trf.xlu0
        %1428 = vxpose.xlu0.b32.start [1/16] %v1393, 128
        %1429 = vxpose.xlu0.b32.cont [2/16] 0.0, 128
        %1430 = vxpose.xlu0.b32.cont [3/16] 0.0, 128
        %1431 = vxpose.xlu0.b32.cont [4/16] 0.0, 128
        %1432 = vxpose.xlu0.b32.cont [5/16] 0.0, 128
        %1433 = vxpose.xlu0.b32.cont [6/16] 0.0, 128
        %1434 = vxpose.xlu0.b32.cont [7/16] 0.0, 128
        %1435 = vxpose.xlu0.b32.cont [8/16] 0.0, 128
        %1436 = vxpose.xlu0.b32.cont [9/16] 0.0, 128
        %1437 = vxpose.xlu0.b32.cont [10/16] 0.0, 128
        %1438 = vxpose.xlu0.b32.cont [11/16] 0.0, 128
        %1439 = vxpose.xlu0.b32.cont [12/16] 0.0, 128
        %1440 = vxpose.xlu0.b32.cont [13/16] 0.0, 128
        %1441 = vxpose.xlu0.b32.cont [14/16] 0.0, 128
        %1442 = vxpose.xlu0.b32.cont [15/16] 0.0, 128
        %1443 = vxpose.xlu0.b32.end [16/16] 0.0, 128
        %v1444 = vpop.trf.xlu0
        %v1445 = vpop.trf.xlu0
        %v1446 = vpop.trf.xlu0
        %v1447 = vpop.trf.xlu0
        %v1448 = vpop.trf.xlu0
        %v1449 = vpop.trf.xlu0
        %v1450 = vpop.trf.xlu0
        %v1451 = vpop.trf.xlu0
        %v1452 = vpop.trf.xlu0
        %v1453 = vpop.trf.xlu0
        %v1454 = vpop.trf.xlu0
        %v1455 = vpop.trf.xlu0
        %v1456 = vpop.trf.xlu0
        %v1457 = vpop.trf.xlu0
        %v1458 = vpop.trf.xlu0
        %v1459 = vpop.trf.xlu0
        %v1460 = vrot.slane %v545, 2
        %v1461 = vrot.slane %v568, 2
        %v1463 = vsel %vm651, %v1412, 0
        %v1466 = vsel %vm651, %v1413, 0
        %v1469 = vsel %vm651, %v1414, 0
        %v1472 = vsel %vm651, %v1415, 0
        %v1475 = vsel %vm651, %v1416, 0
        %v1478 = vsel %vm651, %v1417, 0
        %v1481 = vsel %vm651, %v1418, 0
        %v1484 = vsel %vm651, %v1419, 0
        %v1487 = vsel %vm651, %v1420, 0
        %v1490 = vsel %vm651, %v1421, 0
        %v1493 = vsel %vm651, %v1422, 0
        %v1496 = vsel %vm651, %v1423, 0
        %v1499 = vsel %vm651, %v1424, 0
        %v1502 = vsel %vm651, %v1425, 0
        %v1505 = vsel %vm651, %v1426, 0
        %v1508 = vsel %vm651, %v1427, 0
        %v1511 = vsel %vm651, %v1444, 0
        %v1514 = vsel %vm651, %v1445, 0
        %v1517 = vsel %vm651, %v1446, 0
        %v1520 = vsel %vm651, %v1447, 0
        %v1523 = vsel %vm651, %v1448, 0
        %v1526 = vsel %vm651, %v1449, 0
        %v1529 = vsel %vm651, %v1450, 0
        %v1532 = vsel %vm651, %v1451, 0
        %v1535 = vsel %vm651, %v1452, 0
        %v1538 = vsel %vm651, %v1453, 0
        %v1541 = vsel %vm651, %v1454, 0
        %v1544 = vsel %vm651, %v1455, 0
        %v1547 = vsel %vm651, %v1456, 0
        %v1550 = vsel %vm651, %v1457, 0
        %v1553 = vsel %vm651, %v1458, 0
        %v1556 = vsel %vm651, %v1459, 0
        %v1558 = vsel %vm584, %v1460, 0
        %v1560 = vsel %vm584, %v1461, 0
        %1562 = vmatpush.msra.mxu0 0.0
        %1563 = vmatpush.msra.mxu0 0.0
        %1564 = vmatpush.msra.mxu0 0.0
        %1565 = vmatpush.msra.mxu0 0.0
        %1566 = vmatpush.msra.mxu0 0.0
        %1567 = vmatpush.msra.mxu0 0.0
        %1568 = vmatpush.msra.mxu0 0.0
        %1569 = vmatpush.msra.mxu0 0.0
        %1570 = vmatpush.msra.mxu0 0.0
        %1571 = vmatpush.msra.mxu0 0.0
        %1572 = vmatpush.msra.mxu0 0.0
        %1573 = vmatpush.msra.mxu0 0.0
        %1574 = vmatpush.msra.mxu0 0.0
        %1575 = vmatpush.msra.mxu0 0.0
        %1576 = vmatpush.msra.mxu0 0.0
        %1577 = vmatpush.msra.mxu0 %v1558
        %1578 = vmatmul.f32.gmra.mxu0 %v1463
        %v1579 = vpop.f32.mrf.mxu0
        %v1580 = vadd.f32 0.0, %v1579
        %1581 = vmatmul.f32.gmra.mxu0 %v1466
        %v1582 = vpop.f32.mrf.mxu0
        %v1583 = vadd.f32 0.0, %v1582
        %1584 = vmatmul.f32.gmra.mxu0 %v1469
        %v1585 = vpop.f32.mrf.mxu0
        %v1586 = vadd.f32 0.0, %v1585
        %1587 = vmatmul.f32.gmra.mxu0 %v1472
        %v1588 = vpop.f32.mrf.mxu0
        %v1589 = vadd.f32 0.0, %v1588
        %1590 = vmatmul.f32.gmra.mxu0 %v1475
        %v1591 = vpop.f32.mrf.mxu0
        %v1592 = vadd.f32 0.0, %v1591
        %1593 = vmatmul.f32.gmra.mxu0 %v1478
        %v1594 = vpop.f32.mrf.mxu0
        %v1595 = vadd.f32 0.0, %v1594
        %1596 = vmatmul.f32.gmra.mxu0 %v1481
        %v1597 = vpop.f32.mrf.mxu0
        %v1598 = vadd.f32 0.0, %v1597
        %1599 = vmatmul.f32.gmra.mxu0 %v1484
        %v1600 = vpop.f32.mrf.mxu0
        %v1601 = vadd.f32 0.0, %v1600
        %1602 = vmatmul.f32.gmra.mxu0 %v1487
        %v1603 = vpop.f32.mrf.mxu0
        %v1604 = vadd.f32 0.0, %v1603
        %1605 = vmatmul.f32.gmra.mxu0 %v1490
        %v1606 = vpop.f32.mrf.mxu0
        %v1607 = vadd.f32 0.0, %v1606
        %1608 = vmatmul.f32.gmra.mxu0 %v1493
        %v1609 = vpop.f32.mrf.mxu0
        %v1610 = vadd.f32 0.0, %v1609
        %1611 = vmatmul.f32.gmra.mxu0 %v1496
        %v1612 = vpop.f32.mrf.mxu0
        %v1613 = vadd.f32 0.0, %v1612
        %1614 = vmatmul.f32.gmra.mxu0 %v1499
        %v1615 = vpop.f32.mrf.mxu0
        %v1616 = vadd.f32 0.0, %v1615
        %1617 = vmatmul.f32.gmra.mxu0 %v1502
        %v1618 = vpop.f32.mrf.mxu0
        %v1619 = vadd.f32 0.0, %v1618
        %1620 = vmatmul.f32.gmra.mxu0 %v1505
        %v1621 = vpop.f32.mrf.mxu0
        %v1622 = vadd.f32 0.0, %v1621
        %1623 = vmatmul.f32.gmra.mxu0 %v1508
        %v1624 = vpop.f32.mrf.mxu0
        %v1625 = vadd.f32 0.0, %v1624
        %1626 = vmatmul.f32.gmra.mxu0 %v1511
        %v1627 = vpop.f32.mrf.mxu0
        %v1628 = vadd.f32 0.0, %v1627
        %1629 = vmatmul.f32.gmra.mxu0 %v1514
        %v1630 = vpop.f32.mrf.mxu0
        %v1631 = vadd.f32 0.0, %v1630
        %1632 = vmatmul.f32.gmra.mxu0 %v1517
        %v1633 = vpop.f32.mrf.mxu0
        %v1634 = vadd.f32 0.0, %v1633
        %1635 = vmatmul.f32.gmra.mxu0 %v1520
        %v1636 = vpop.f32.mrf.mxu0
        %v1637 = vadd.f32 0.0, %v1636
        %1638 = vmatmul.f32.gmra.mxu0 %v1523
        %v1639 = vpop.f32.mrf.mxu0
        %v1640 = vadd.f32 0.0, %v1639
        %1641 = vmatmul.f32.gmra.mxu0 %v1526
        %v1642 = vpop.f32.mrf.mxu0
        %v1643 = vadd.f32 0.0, %v1642
        %1644 = vmatmul.f32.gmra.mxu0 %v1529
        %v1645 = vpop.f32.mrf.mxu0
        %v1646 = vadd.f32 0.0, %v1645
        %1647 = vmatmul.f32.gmra.mxu0 %v1532
        %v1648 = vpop.f32.mrf.mxu0
        %v1649 = vadd.f32 0.0, %v1648
        %1650 = vmatmul.f32.gmra.mxu0 %v1535
        %v1651 = vpop.f32.mrf.mxu0
        %v1652 = vadd.f32 0.0, %v1651
        %1653 = vmatmul.f32.gmra.mxu0 %v1538
        %v1654 = vpop.f32.mrf.mxu0
        %v1655 = vadd.f32 0.0, %v1654
        %1656 = vmatmul.f32.gmra.mxu0 %v1541
        %v1657 = vpop.f32.mrf.mxu0
        %v1658 = vadd.f32 0.0, %v1657
        %1659 = vmatmul.f32.gmra.mxu0 %v1544
        %v1660 = vpop.f32.mrf.mxu0
        %v1661 = vadd.f32 0.0, %v1660
        %1662 = vmatmul.f32.gmra.mxu0 %v1547
        %v1663 = vpop.f32.mrf.mxu0
        %v1664 = vadd.f32 0.0, %v1663
        %1665 = vmatmul.f32.gmra.mxu0 %v1550
        %v1666 = vpop.f32.mrf.mxu0
        %v1667 = vadd.f32 0.0, %v1666
        %1668 = vmatmul.f32.gmra.mxu0 %v1553
        %v1669 = vpop.f32.mrf.mxu0
        %v1670 = vadd.f32 0.0, %v1669
        %1671 = vmatmul.f32.gmra.mxu0 %v1556
        %v1672 = vpop.f32.mrf.mxu0
        %v1673 = vadd.f32 0.0, %v1672
        %1674 = vdwg.mxu0
        %1675 = vmatpush.msra.mxu0 0.0
        %1676 = vmatpush.msra.mxu0 0.0
        %1677 = vmatpush.msra.mxu0 0.0
        %1678 = vmatpush.msra.mxu0 0.0
        %1679 = vmatpush.msra.mxu0 0.0
        %1680 = vmatpush.msra.mxu0 0.0
        %1681 = vmatpush.msra.mxu0 0.0
        %1682 = vmatpush.msra.mxu0 0.0
        %1683 = vmatpush.msra.mxu0 0.0
        %1684 = vmatpush.msra.mxu0 0.0
        %1685 = vmatpush.msra.mxu0 0.0
        %1686 = vmatpush.msra.mxu0 0.0
        %1687 = vmatpush.msra.mxu0 0.0
        %1688 = vmatpush.msra.mxu0 0.0
        %1689 = vmatpush.msra.mxu0 0.0
        %1690 = vmatpush.msra.mxu0 %v1560
        %1691 = vmatmul.f32.gmra.mxu0 %v1463
        %v1692 = vpop.f32.mrf.mxu0
        %v1693 = vadd.f32 0.0, %v1692
        %1694 = vmatmul.f32.gmra.mxu0 %v1466
        %v1695 = vpop.f32.mrf.mxu0
        %v1696 = vadd.f32 0.0, %v1695
        %1697 = vmatmul.f32.gmra.mxu0 %v1469
        %v1698 = vpop.f32.mrf.mxu0
        %v1699 = vadd.f32 0.0, %v1698
        %1700 = vmatmul.f32.gmra.mxu0 %v1472
        %v1701 = vpop.f32.mrf.mxu0
        %v1702 = vadd.f32 0.0, %v1701
        %1703 = vmatmul.f32.gmra.mxu0 %v1475
        %v1704 = vpop.f32.mrf.mxu0
        %v1705 = vadd.f32 0.0, %v1704
        %1706 = vmatmul.f32.gmra.mxu0 %v1478
        %v1707 = vpop.f32.mrf.mxu0
        %v1708 = vadd.f32 0.0, %v1707
        %1709 = vmatmul.f32.gmra.mxu0 %v1481
        %v1710 = vpop.f32.mrf.mxu0
        %v1711 = vadd.f32 0.0, %v1710
        %1712 = vmatmul.f32.gmra.mxu0 %v1484
        %v1713 = vpop.f32.mrf.mxu0
        %v1714 = vadd.f32 0.0, %v1713
        %1715 = vmatmul.f32.gmra.mxu0 %v1487
        %v1716 = vpop.f32.mrf.mxu0
        %v1717 = vadd.f32 0.0, %v1716
        %1718 = vmatmul.f32.gmra.mxu0 %v1490
        %v1719 = vpop.f32.mrf.mxu0
        %v1720 = vadd.f32 0.0, %v1719
        %1721 = vmatmul.f32.gmra.mxu0 %v1493
        %v1722 = vpop.f32.mrf.mxu0
        %v1723 = vadd.f32 0.0, %v1722
        %1724 = vmatmul.f32.gmra.mxu0 %v1496
        %v1725 = vpop.f32.mrf.mxu0
        %v1726 = vadd.f32 0.0, %v1725
        %1727 = vmatmul.f32.gmra.mxu0 %v1499
        %v1728 = vpop.f32.mrf.mxu0
        %v1729 = vadd.f32 0.0, %v1728
        %1730 = vmatmul.f32.gmra.mxu0 %v1502
        %v1731 = vpop.f32.mrf.mxu0
        %v1732 = vadd.f32 0.0, %v1731
        %1733 = vmatmul.f32.gmra.mxu0 %v1505
        %v1734 = vpop.f32.mrf.mxu0
        %v1735 = vadd.f32 0.0, %v1734
        %1736 = vmatmul.f32.gmra.mxu0 %v1508
        %v1737 = vpop.f32.mrf.mxu0
        %v1738 = vadd.f32 0.0, %v1737
        %1739 = vmatmul.f32.gmra.mxu0 %v1511
        %v1740 = vpop.f32.mrf.mxu0
        %v1741 = vadd.f32 0.0, %v1740
        %1742 = vmatmul.f32.gmra.mxu0 %v1514
        %v1743 = vpop.f32.mrf.mxu0
        %v1744 = vadd.f32 0.0, %v1743
        %1745 = vmatmul.f32.gmra.mxu0 %v1517
        %v1746 = vpop.f32.mrf.mxu0
        %v1747 = vadd.f32 0.0, %v1746
        %1748 = vmatmul.f32.gmra.mxu0 %v1520
        %v1749 = vpop.f32.mrf.mxu0
        %v1750 = vadd.f32 0.0, %v1749
        %1751 = vmatmul.f32.gmra.mxu0 %v1523
        %v1752 = vpop.f32.mrf.mxu0
        %v1753 = vadd.f32 0.0, %v1752
        %1754 = vmatmul.f32.gmra.mxu0 %v1526
        %v1755 = vpop.f32.mrf.mxu0
        %v1756 = vadd.f32 0.0, %v1755
        %1757 = vmatmul.f32.gmra.mxu0 %v1529
        %v1758 = vpop.f32.mrf.mxu0
        %v1759 = vadd.f32 0.0, %v1758
        %1760 = vmatmul.f32.gmra.mxu0 %v1532
        %v1761 = vpop.f32.mrf.mxu0
        %v1762 = vadd.f32 0.0, %v1761
        %1763 = vmatmul.f32.gmra.mxu0 %v1535
        %v1764 = vpop.f32.mrf.mxu0
        %v1765 = vadd.f32 0.0, %v1764
        %1766 = vmatmul.f32.gmra.mxu0 %v1538
        %v1767 = vpop.f32.mrf.mxu0
        %v1768 = vadd.f32 0.0, %v1767
        %1769 = vmatmul.f32.gmra.mxu0 %v1541
        %v1770 = vpop.f32.mrf.mxu0
        %v1771 = vadd.f32 0.0, %v1770
        %1772 = vmatmul.f32.gmra.mxu0 %v1544
        %v1773 = vpop.f32.mrf.mxu0
        %v1774 = vadd.f32 0.0, %v1773
        %1775 = vmatmul.f32.gmra.mxu0 %v1547
        %v1776 = vpop.f32.mrf.mxu0
        %v1777 = vadd.f32 0.0, %v1776
        %1778 = vmatmul.f32.gmra.mxu0 %v1550
        %v1779 = vpop.f32.mrf.mxu0
        %v1780 = vadd.f32 0.0, %v1779
        %1781 = vmatmul.f32.gmra.mxu0 %v1553
        %v1782 = vpop.f32.mrf.mxu0
        %v1783 = vadd.f32 0.0, %v1782
        %1784 = vmatmul.f32.gmra.mxu0 %v1556
        %v1785 = vpop.f32.mrf.mxu0
        %v1786 = vadd.f32 0.0, %v1785
        %1787 = vdwg.mxu0
        %v1788 = vmax.f32 %v1580, %v1693
        %1789 = vmax.xlane.f32.xlu0 %v1788
        %v1790 = vpop.xlane.xlu0 %1789
        %v1791 = vmax.f32 %v1583, %v1696
        %1792 = vmax.xlane.f32.xlu0 %v1791
        %v1793 = vpop.xlane.xlu0 %1792
        %v1794 = vmax.f32 %v1586, %v1699
        %1795 = vmax.xlane.f32.xlu0 %v1794
        %v1796 = vpop.xlane.xlu0 %1795
        %v1797 = vmax.f32 %v1589, %v1702
        %1798 = vmax.xlane.f32.xlu0 %v1797
        %v1799 = vpop.xlane.xlu0 %1798
        %v1800 = vmax.f32 %v1592, %v1705
        %1801 = vmax.xlane.f32.xlu0 %v1800
        %v1802 = vpop.xlane.xlu0 %1801
        %v1803 = vmax.f32 %v1595, %v1708
        %1804 = vmax.xlane.f32.xlu0 %v1803
        %v1805 = vpop.xlane.xlu0 %1804
        %v1806 = vmax.f32 %v1598, %v1711
        %1807 = vmax.xlane.f32.xlu0 %v1806
        %v1808 = vpop.xlane.xlu0 %1807
        %v1809 = vmax.f32 %v1601, %v1714
        %1810 = vmax.xlane.f32.xlu0 %v1809
        %v1811 = vpop.xlane.xlu0 %1810
        %v1812 = vmax.f32 %v1604, %v1717
        %1813 = vmax.xlane.f32.xlu0 %v1812
        %v1814 = vpop.xlane.xlu0 %1813
        %v1815 = vmax.f32 %v1607, %v1720
        %1816 = vmax.xlane.f32.xlu0 %v1815
        %v1817 = vpop.xlane.xlu0 %1816
        %v1818 = vmax.f32 %v1610, %v1723
        %1819 = vmax.xlane.f32.xlu0 %v1818
        %v1820 = vpop.xlane.xlu0 %1819
        %v1821 = vmax.f32 %v1613, %v1726
        %1822 = vmax.xlane.f32.xlu0 %v1821
        %v1823 = vpop.xlane.xlu0 %1822
        %v1824 = vmax.f32 %v1616, %v1729
        %1825 = vmax.xlane.f32.xlu0 %v1824
        %v1826 = vpop.xlane.xlu0 %1825
        %v1827 = vmax.f32 %v1619, %v1732
        %1828 = vmax.xlane.f32.xlu0 %v1827
        %v1829 = vpop.xlane.xlu0 %1828
        %v1830 = vmax.f32 %v1622, %v1735
        %1831 = vmax.xlane.f32.xlu0 %v1830
        %v1832 = vpop.xlane.xlu0 %1831
        %v1833 = vmax.f32 %v1625, %v1738
        %1834 = vmax.xlane.f32.xlu0 %v1833
        %v1835 = vpop.xlane.xlu0 %1834
        %v1836 = vmax.f32 %v1628, %v1741
        %1837 = vmax.xlane.f32.xlu0 %v1836
        %v1838 = vpop.xlane.xlu0 %1837
        %v1839 = vmax.f32 %v1631, %v1744
        %1840 = vmax.xlane.f32.xlu0 %v1839
        %v1841 = vpop.xlane.xlu0 %1840
        %v1842 = vmax.f32 %v1634, %v1747
        %1843 = vmax.xlane.f32.xlu0 %v1842
        %v1844 = vpop.xlane.xlu0 %1843
        %v1845 = vmax.f32 %v1637, %v1750
        %1846 = vmax.xlane.f32.xlu0 %v1845
        %v1847 = vpop.xlane.xlu0 %1846
        %v1848 = vmax.f32 %v1640, %v1753
        %1849 = vmax.xlane.f32.xlu0 %v1848
        %v1850 = vpop.xlane.xlu0 %1849
        %v1851 = vmax.f32 %v1643, %v1756
        %1852 = vmax.xlane.f32.xlu0 %v1851
        %v1853 = vpop.xlane.xlu0 %1852
        %v1854 = vmax.f32 %v1646, %v1759
        %1855 = vmax.xlane.f32.xlu0 %v1854
        %v1856 = vpop.xlane.xlu0 %1855
        %v1857 = vmax.f32 %v1649, %v1762
        %1858 = vmax.xlane.f32.xlu0 %v1857
        %v1859 = vpop.xlane.xlu0 %1858
        %v1860 = vmax.f32 %v1652, %v1765
        %1861 = vmax.xlane.f32.xlu0 %v1860
        %v1862 = vpop.xlane.xlu0 %1861
        %v1863 = vmax.f32 %v1655, %v1768
        %1864 = vmax.xlane.f32.xlu0 %v1863
        %v1865 = vpop.xlane.xlu0 %1864
        %v1866 = vmax.f32 %v1658, %v1771
        %1867 = vmax.xlane.f32.xlu0 %v1866
        %v1868 = vpop.xlane.xlu0 %1867
        %v1869 = vmax.f32 %v1661, %v1774
        %1870 = vmax.xlane.f32.xlu0 %v1869
        %v1871 = vpop.xlane.xlu0 %1870
        %v1872 = vmax.f32 %v1664, %v1777
        %1873 = vmax.xlane.f32.xlu0 %v1872
        %v1874 = vpop.xlane.xlu0 %1873
        %v1875 = vmax.f32 %v1667, %v1780
        %1876 = vmax.xlane.f32.xlu0 %v1875
        %v1877 = vpop.xlane.xlu0 %1876
        %v1878 = vmax.f32 %v1670, %v1783
        %1879 = vmax.xlane.f32.xlu0 %v1878
        %v1880 = vpop.xlane.xlu0 %1879
        %v1881 = vmax.f32 %v1673, %v1786
        %1882 = vmax.xlane.f32.xlu0 %v1881
        %v1883 = vpop.xlane.xlu0 %1882
        %v1884 = vsub.f32 %v1580, %v1790
        %v1885 = vsub.f32 %v1693, %v1790
        %v1886 = vsub.f32 %v1583, %v1793
        %v1887 = vsub.f32 %v1696, %v1793
        %v1888 = vsub.f32 %v1586, %v1796
        %v1889 = vsub.f32 %v1699, %v1796
        %v1890 = vsub.f32 %v1589, %v1799
        %v1891 = vsub.f32 %v1702, %v1799
        %v1892 = vsub.f32 %v1592, %v1802
        %v1893 = vsub.f32 %v1705, %v1802
        %v1894 = vsub.f32 %v1595, %v1805
        %v1895 = vsub.f32 %v1708, %v1805
        %v1896 = vsub.f32 %v1598, %v1808
        %v1897 = vsub.f32 %v1711, %v1808
        %v1898 = vsub.f32 %v1601, %v1811
        %v1899 = vsub.f32 %v1714, %v1811
        %v1900 = vsub.f32 %v1604, %v1814
        %v1901 = vsub.f32 %v1717, %v1814
        %v1902 = vsub.f32 %v1607, %v1817
        %v1903 = vsub.f32 %v1720, %v1817
        %v1904 = vsub.f32 %v1610, %v1820
        %v1905 = vsub.f32 %v1723, %v1820
        %v1906 = vsub.f32 %v1613, %v1823
        %v1907 = vsub.f32 %v1726, %v1823
        %v1908 = vsub.f32 %v1616, %v1826
        %v1909 = vsub.f32 %v1729, %v1826
        %v1910 = vsub.f32 %v1619, %v1829
        %v1911 = vsub.f32 %v1732, %v1829
        %v1912 = vsub.f32 %v1622, %v1832
        %v1913 = vsub.f32 %v1735, %v1832
        %v1914 = vsub.f32 %v1625, %v1835
        %v1915 = vsub.f32 %v1738, %v1835
        %v1916 = vsub.f32 %v1628, %v1838
        %v1917 = vsub.f32 %v1741, %v1838
        %v1918 = vsub.f32 %v1631, %v1841
        %v1919 = vsub.f32 %v1744, %v1841
        %v1920 = vsub.f32 %v1634, %v1844
        %v1921 = vsub.f32 %v1747, %v1844
        %v1922 = vsub.f32 %v1637, %v1847
        %v1923 = vsub.f32 %v1750, %v1847
        %v1924 = vsub.f32 %v1640, %v1850
        %v1925 = vsub.f32 %v1753, %v1850
        %v1926 = vsub.f32 %v1643, %v1853
        %v1927 = vsub.f32 %v1756, %v1853
        %v1928 = vsub.f32 %v1646, %v1856
        %v1929 = vsub.f32 %v1759, %v1856
        %v1930 = vsub.f32 %v1649, %v1859
        %v1931 = vsub.f32 %v1762, %v1859
        %v1932 = vsub.f32 %v1652, %v1862
        %v1933 = vsub.f32 %v1765, %v1862
        %v1934 = vsub.f32 %v1655, %v1865
        %v1935 = vsub.f32 %v1768, %v1865
        %v1936 = vsub.f32 %v1658, %v1868
        %v1937 = vsub.f32 %v1771, %v1868
        %v1938 = vsub.f32 %v1661, %v1871
        %v1939 = vsub.f32 %v1774, %v1871
        %v1940 = vsub.f32 %v1664, %v1874
        %v1941 = vsub.f32 %v1777, %v1874
        %v1942 = vsub.f32 %v1667, %v1877
        %v1943 = vsub.f32 %v1780, %v1877
        %v1944 = vsub.f32 %v1670, %v1880
        %v1945 = vsub.f32 %v1783, %v1880
        %v1946 = vsub.f32 %v1673, %v1883
        %v1947 = vsub.f32 %v1786, %v1883
        %v1948 = vmul.f32 %v1884, 1.442695
        %v1949 = vpow.pop %v1948
        %v1950 = vmul.f32 %v1885, 1.442695
        %v1951 = vpow.pop %v1950
        %v1952 = vmul.f32 %v1886, 1.442695
        %v1953 = vpow.pop %v1952
        %v1954 = vmul.f32 %v1887, 1.442695
        %v1955 = vpow.pop %v1954
        %v1956 = vmul.f32 %v1888, 1.442695
        %v1957 = vpow.pop %v1956
        %v1958 = vmul.f32 %v1889, 1.442695
        %v1959 = vpow.pop %v1958
        %v1960 = vmul.f32 %v1890, 1.442695
        %v1961 = vpow.pop %v1960
        %v1962 = vmul.f32 %v1891, 1.442695
        %v1963 = vpow.pop %v1962
        %v1964 = vmul.f32 %v1892, 1.442695
        %v1965 = vpow.pop %v1964
        %v1966 = vmul.f32 %v1893, 1.442695
        %v1967 = vpow.pop %v1966
        %v1968 = vmul.f32 %v1894, 1.442695
        %v1969 = vpow.pop %v1968
        %v1970 = vmul.f32 %v1895, 1.442695
        %v1971 = vpow.pop %v1970
        %v1972 = vmul.f32 %v1896, 1.442695
        %v1973 = vpow.pop %v1972
        %v1974 = vmul.f32 %v1897, 1.442695
        %v1975 = vpow.pop %v1974
        %v1976 = vmul.f32 %v1898, 1.442695
        %v1977 = vpow.pop %v1976
        %v1978 = vmul.f32 %v1899, 1.442695
        %v1979 = vpow.pop %v1978
        %v1980 = vmul.f32 %v1900, 1.442695
        %v1981 = vpow.pop %v1980
        %v1982 = vmul.f32 %v1901, 1.442695
        %v1983 = vpow.pop %v1982
        %v1984 = vmul.f32 %v1902, 1.442695
        %v1985 = vpow.pop %v1984
        %v1986 = vmul.f32 %v1903, 1.442695
        %v1987 = vpow.pop %v1986
        %v1988 = vmul.f32 %v1904, 1.442695
        %v1989 = vpow.pop %v1988
        %v1990 = vmul.f32 %v1905, 1.442695
        %v1991 = vpow.pop %v1990
        %v1992 = vmul.f32 %v1906, 1.442695
        %v1993 = vpow.pop %v1992
        %v1994 = vmul.f32 %v1907, 1.442695
        %v1995 = vpow.pop %v1994
        %v1996 = vmul.f32 %v1908, 1.442695
        %v1997 = vpow.pop %v1996
        %v1998 = vmul.f32 %v1909, 1.442695
        %v1999 = vpow.pop %v1998
        %v2000 = vmul.f32 %v1910, 1.442695
        %v2001 = vpow.pop %v2000
        %v2002 = vmul.f32 %v1911, 1.442695
        %v2003 = vpow.pop %v2002
        %v2004 = vmul.f32 %v1912, 1.442695
        %v2005 = vpow.pop %v2004
        %v2006 = vmul.f32 %v1913, 1.442695
        %v2007 = vpow.pop %v2006
        %v2008 = vmul.f32 %v1914, 1.442695
        %v2009 = vpow.pop %v2008
        %v2010 = vmul.f32 %v1915, 1.442695
        %v2011 = vpow.pop %v2010
        %v2012 = vmul.f32 %v1916, 1.442695
        %v2013 = vpow.pop %v2012
        %v2014 = vmul.f32 %v1917, 1.442695
        %v2015 = vpow.pop %v2014
        %v2016 = vmul.f32 %v1918, 1.442695
        %v2017 = vpow.pop %v2016
        %v2018 = vmul.f32 %v1919, 1.442695
        %v2019 = vpow.pop %v2018
        %v2020 = vmul.f32 %v1920, 1.442695
        %v2021 = vpow.pop %v2020
        %v2022 = vmul.f32 %v1921, 1.442695
        %v2023 = vpow.pop %v2022
        %v2024 = vmul.f32 %v1922, 1.442695
        %v2025 = vpow.pop %v2024
        %v2026 = vmul.f32 %v1923, 1.442695
        %v2027 = vpow.pop %v2026
        %v2028 = vmul.f32 %v1924, 1.442695
        %v2029 = vpow.pop %v2028
        %v2030 = vmul.f32 %v1925, 1.442695
        %v2031 = vpow.pop %v2030
        %v2032 = vmul.f32 %v1926, 1.442695
        %v2033 = vpow.pop %v2032
        %v2034 = vmul.f32 %v1927, 1.442695
        %v2035 = vpow.pop %v2034
        %v2036 = vmul.f32 %v1928, 1.442695
        %v2037 = vpow.pop %v2036
        %v2038 = vmul.f32 %v1929, 1.442695
        %v2039 = vpow.pop %v2038
        %v2040 = vmul.f32 %v1930, 1.442695
        %v2041 = vpow.pop %v2040
        %v2042 = vmul.f32 %v1931, 1.442695
        %v2043 = vpow.pop %v2042
        %v2044 = vmul.f32 %v1932, 1.442695
        %v2045 = vpow.pop %v2044
        %v2046 = vmul.f32 %v1933, 1.442695
        %v2047 = vpow.pop %v2046
        %v2048 = vmul.f32 %v1934, 1.442695
        %v2049 = vpow.pop %v2048
        %v2050 = vmul.f32 %v1935, 1.442695
        %v2051 = vpow.pop %v2050
        %v2052 = vmul.f32 %v1936, 1.442695
        %v2053 = vpow.pop %v2052
        %v2054 = vmul.f32 %v1937, 1.442695
        %v2055 = vpow.pop %v2054
        %v2056 = vmul.f32 %v1938, 1.442695
        %v2057 = vpow.pop %v2056
        %v2058 = vmul.f32 %v1939, 1.442695
        %v2059 = vpow.pop %v2058
        %v2060 = vmul.f32 %v1940, 1.442695
        %v2061 = vpow.pop %v2060
        %v2062 = vmul.f32 %v1941, 1.442695
        %v2063 = vpow.pop %v2062
        %v2064 = vmul.f32 %v1942, 1.442695
        %v2065 = vpow.pop %v2064
        %v2066 = vmul.f32 %v1943, 1.442695
        %v2067 = vpow.pop %v2066
        %v2068 = vmul.f32 %v1944, 1.442695
        %v2069 = vpow.pop %v2068
        %v2070 = vmul.f32 %v1945, 1.442695
        %v2071 = vpow.pop %v2070
        %v2072 = vmul.f32 %v1946, 1.442695
        %v2073 = vpow.pop %v2072
        %v2074 = vmul.f32 %v1947, 1.442695
        %v2075 = vpow.pop %v2074
        %2076 = vmatpush.xpose.msra.mxu0 %v2009
        %2077 = vmatpush.xpose.msra.mxu0 %v2005
        %2078 = vmatpush.xpose.msra.mxu0 %v2001
        %2079 = vmatpush.xpose.msra.mxu0 %v1997
        %2080 = vmatpush.xpose.msra.mxu0 %v1993
        %2081 = vmatpush.xpose.msra.mxu0 %v1989
        %2082 = vmatpush.xpose.msra.mxu0 %v1985
        %2083 = vmatpush.xpose.msra.mxu0 %v1981
        %2084 = vmatpush.xpose.msra.mxu0 %v1977
        %2085 = vmatpush.xpose.msra.mxu0 %v1973
        %2086 = vmatpush.xpose.msra.mxu0 %v1969
        %2087 = vmatpush.xpose.msra.mxu0 %v1965
        %2088 = vmatpush.xpose.msra.mxu0 %v1961
        %2089 = vmatpush.xpose.msra.mxu0 %v1957
        %2090 = vmatpush.xpose.msra.mxu0 %v1953
        %2091 = vmatpush.xpose.msra.mxu0 %v1949
        %2092 = vmatmul.f32.gmra.mxu0 %v1388
        %v2093 = vpop.f32.mrf.mxu0
        %v2094 = vadd.f32 0.0, %v2093
        %2095 = vdwg.mxu0
        %2096 = vmatpush.xpose.msra.mxu0 %v2011
        %2097 = vmatpush.xpose.msra.mxu0 %v2007
        %2098 = vmatpush.xpose.msra.mxu0 %v2003
        %2099 = vmatpush.xpose.msra.mxu0 %v1999
        %2100 = vmatpush.xpose.msra.mxu0 %v1995
        %2101 = vmatpush.xpose.msra.mxu0 %v1991
        %2102 = vmatpush.xpose.msra.mxu0 %v1987
        %2103 = vmatpush.xpose.msra.mxu0 %v1983
        %2104 = vmatpush.xpose.msra.mxu0 %v1979
        %2105 = vmatpush.xpose.msra.mxu0 %v1975
        %2106 = vmatpush.xpose.msra.mxu0 %v1971
        %2107 = vmatpush.xpose.msra.mxu0 %v1967
        %2108 = vmatpush.xpose.msra.mxu0 %v1963
        %2109 = vmatpush.xpose.msra.mxu0 %v1959
        %2110 = vmatpush.xpose.msra.mxu0 %v1955
        %2111 = vmatpush.xpose.msra.mxu0 %v1951
        %2112 = vmatmul.f32.gmra.mxu0 %v1389
        %v2113 = vpop.f32.mrf.mxu0
        %v2114 = vadd.f32 %v2094, %v2113
        %2115 = vdwg.mxu0
        %2116 = vmatpush.xpose.msra.mxu0 %v2073
        %2117 = vmatpush.xpose.msra.mxu0 %v2069
        %2118 = vmatpush.xpose.msra.mxu0 %v2065
        %2119 = vmatpush.xpose.msra.mxu0 %v2061
        %2120 = vmatpush.xpose.msra.mxu0 %v2057
        %2121 = vmatpush.xpose.msra.mxu0 %v2053
        %2122 = vmatpush.xpose.msra.mxu0 %v2049
        %2123 = vmatpush.xpose.msra.mxu0 %v2045
        %2124 = vmatpush.xpose.msra.mxu0 %v2041
        %2125 = vmatpush.xpose.msra.mxu0 %v2037
        %2126 = vmatpush.xpose.msra.mxu0 %v2033
        %2127 = vmatpush.xpose.msra.mxu0 %v2029
        %2128 = vmatpush.xpose.msra.mxu0 %v2025
        %2129 = vmatpush.xpose.msra.mxu0 %v2021
        %2130 = vmatpush.xpose.msra.mxu0 %v2017
        %2131 = vmatpush.xpose.msra.mxu0 %v2013
        %2132 = vmatmul.f32.gmra.mxu0 %v1388
        %v2133 = vpop.f32.mrf.mxu0
        %v2134 = vadd.f32 0.0, %v2133
        %2135 = vdwg.mxu0
        %2136 = vmatpush.xpose.msra.mxu0 %v2075
        %2137 = vmatpush.xpose.msra.mxu0 %v2071
        %2138 = vmatpush.xpose.msra.mxu0 %v2067
        %2139 = vmatpush.xpose.msra.mxu0 %v2063
        %2140 = vmatpush.xpose.msra.mxu0 %v2059
        %2141 = vmatpush.xpose.msra.mxu0 %v2055
        %2142 = vmatpush.xpose.msra.mxu0 %v2051
        %2143 = vmatpush.xpose.msra.mxu0 %v2047
        %2144 = vmatpush.xpose.msra.mxu0 %v2043
        %2145 = vmatpush.xpose.msra.mxu0 %v2039
        %2146 = vmatpush.xpose.msra.mxu0 %v2035
        %2147 = vmatpush.xpose.msra.mxu0 %v2031
        %2148 = vmatpush.xpose.msra.mxu0 %v2027
        %2149 = vmatpush.xpose.msra.mxu0 %v2023
        %2150 = vmatpush.xpose.msra.mxu0 %v2019
        %2151 = vmatpush.xpose.msra.mxu0 %v2015
        %2152 = vmatmul.f32.gmra.mxu0 %v1389
        %v2153 = vpop.f32.mrf.mxu0
        %v2154 = vadd.f32 %v2134, %v2153
        %2155 = vdwg.mxu0
        %v2156 = vrcp.pop %v2114
        %v2157 = vmul.f32 %v2114, %v2156
        %v2158 = vsub.f32 1.0, %v2157
        %v2159 = vmul.f32 %v2156, %v2158
        %v2160 = vadd.f32 %v2156, %v2159
        %vm2161 = vweird.f32 %v2114
        %vm2162 = vweird.f32 %v2156
        %vm2163 = vmor %vm2161, %vm2162
        %v2164 = vsel %vm2163, %v2156, %v2160
        %v2165 = vand.u32 2147483647, %v2114
        %vm2166 = vcmp.eq.f32.partialorder %v2165, 8.507059e+37
        %v2167 = vand.u32 %v2114, 2147483648
        %v2168 = vor.u32 1.1754944e-38, %v2167
        %v2169 = vsel %vm2166, %v2168, %v2164
        %v2170 = vrcp.pop %v2154
        %v2171 = vmul.f32 %v2154, %v2170
        %v2172 = vsub.f32 1.0, %v2171
        %v2173 = vmul.f32 %v2170, %v2172
        %v2174 = vadd.f32 %v2170, %v2173
        %vm2175 = vweird.f32 %v2154
        %vm2176 = vweird.f32 %v2170
        %vm2177 = vmor %vm2175, %vm2176
        %v2178 = vsel %vm2177, %v2170, %v2174
        %v2179 = vand.u32 2147483647, %v2154
        %vm2180 = vcmp.eq.f32.partialorder %v2179, 8.507059e+37
        %v2181 = vand.u32 %v2154, 2147483648
        %v2182 = vor.u32 1.1754944e-38, %v2181
        %v2183 = vsel %vm2180, %v2182, %v2178
        %v2184 = vperm.slane %v2169, 2
        %v2185 = vperm.slane %v2183, 2
        %v2186 = vmul.f32 %v2114, %v2184
        %v2187 = vmul.f32 %v2154, %v2185
        %v2190 = vrot.slane %v2186, 6
        %v2191 = vrot.slane %v2187, 6
        %2194 = vst [vmem:[#allocation2] sm:$0xc] %v2190
        %2195 = vst [vmem:[#allocation2 + $0x8] sm:$0xc] %v2191
        %v2196 = vrot.slane %v548, 4
        %v2197 = vrot.slane %v571, 4
        %v2200 = vsel %vm584, %v2196, 1.0
        %v2201 = vsel %vm584, %v2197, 1.0
        %v2202 = vrot.slane %v483, 4
        %v2203 = vrot.slane %v503, 4
        %2206 = vxpose.xlu0.b32.start [1/16] %v2202, 128
        %2207 = vxpose.xlu0.b32.cont [2/16] 0.0, 128
        %2208 = vxpose.xlu0.b32.cont [3/16] 0.0, 128
        %2209 = vxpose.xlu0.b32.cont [4/16] 0.0, 128
        %2210 = vxpose.xlu0.b32.cont [5/16] 0.0, 128
        %2211 = vxpose.xlu0.b32.cont [6/16] 0.0, 128
        %2212 = vxpose.xlu0.b32.cont [7/16] 0.0, 128
        %2213 = vxpose.xlu0.b32.cont [8/16] 0.0, 128
        %2214 = vxpose.xlu0.b32.cont [9/16] 0.0, 128
        %2215 = vxpose.xlu0.b32.cont [10/16] 0.0, 128
        %2216 = vxpose.xlu0.b32.cont [11/16] 0.0, 128
        %2217 = vxpose.xlu0.b32.cont [12/16] 0.0, 128
        %2218 = vxpose.xlu0.b32.cont [13/16] 0.0, 128
        %2219 = vxpose.xlu0.b32.cont [14/16] 0.0, 128
        %2220 = vxpose.xlu0.b32.cont [15/16] 0.0, 128
        %2221 = vxpose.xlu0.b32.end [16/16] 0.0, 128
        %v2222 = vpop.trf.xlu0
        %v2223 = vpop.trf.xlu0
        %v2224 = vpop.trf.xlu0
        %v2225 = vpop.trf.xlu0
        %v2226 = vpop.trf.xlu0
        %v2227 = vpop.trf.xlu0
        %v2228 = vpop.trf.xlu0
        %v2229 = vpop.trf.xlu0
        %v2230 = vpop.trf.xlu0
        %v2231 = vpop.trf.xlu0
        %v2232 = vpop.trf.xlu0
        %v2233 = vpop.trf.xlu0
        %v2234 = vpop.trf.xlu0
        %v2235 = vpop.trf.xlu0
        %v2236 = vpop.trf.xlu0
        %v2237 = vpop.trf.xlu0
        %2238 = vxpose.xlu0.b32.start [1/16] %v2203, 128
        %2239 = vxpose.xlu0.b32.cont [2/16] 0.0, 128
        %2240 = vxpose.xlu0.b32.cont [3/16] 0.0, 128
        %2241 = vxpose.xlu0.b32.cont [4/16] 0.0, 128
        %2242 = vxpose.xlu0.b32.cont [5/16] 0.0, 128
        %2243 = vxpose.xlu0.b32.cont [6/16] 0.0, 128
        %2244 = vxpose.xlu0.b32.cont [7/16] 0.0, 128
        %2245 = vxpose.xlu0.b32.cont [8/16] 0.0, 128
        %2246 = vxpose.xlu0.b32.cont [9/16] 0.0, 128
        %2247 = vxpose.xlu0.b32.cont [10/16] 0.0, 128
        %2248 = vxpose.xlu0.b32.cont [11/16] 0.0, 128
        %2249 = vxpose.xlu0.b32.cont [12/16] 0.0, 128
        %2250 = vxpose.xlu0.b32.cont [13/16] 0.0, 128
        %2251 = vxpose.xlu0.b32.cont [14/16] 0.0, 128
        %2252 = vxpose.xlu0.b32.cont [15/16] 0.0, 128
        %2253 = vxpose.xlu0.b32.end [16/16] 0.0, 128
        %v2254 = vpop.trf.xlu0
        %v2255 = vpop.trf.xlu0
        %v2256 = vpop.trf.xlu0
        %v2257 = vpop.trf.xlu0
        %v2258 = vpop.trf.xlu0
        %v2259 = vpop.trf.xlu0
        %v2260 = vpop.trf.xlu0
        %v2261 = vpop.trf.xlu0
        %v2262 = vpop.trf.xlu0
        %v2263 = vpop.trf.xlu0
        %v2264 = vpop.trf.xlu0
        %v2265 = vpop.trf.xlu0
        %v2266 = vpop.trf.xlu0
        %v2267 = vpop.trf.xlu0
        %v2268 = vpop.trf.xlu0
        %v2269 = vpop.trf.xlu0
        %v2270 = vrot.slane %v545, 4
        %v2271 = vrot.slane %v568, 4
        %v2273 = vsel %vm651, %v2222, 0
        %v2276 = vsel %vm651, %v2223, 0
        %v2279 = vsel %vm651, %v2224, 0
        %v2282 = vsel %vm651, %v2225, 0
        %v2285 = vsel %vm651, %v2226, 0
        %v2288 = vsel %vm651, %v2227, 0
        %v2291 = vsel %vm651, %v2228, 0
        %v2294 = vsel %vm651, %v2229, 0
        %v2297 = vsel %vm651, %v2230, 0
        %v2300 = vsel %vm651, %v2231, 0
        %v2303 = vsel %vm651, %v2232, 0
        %v2306 = vsel %vm651, %v2233, 0
        %v2309 = vsel %vm651, %v2234, 0
        %v2312 = vsel %vm651, %v2235, 0
        %v2315 = vsel %vm651, %v2236, 0
        %v2318 = vsel %vm651, %v2237, 0
        %v2321 = vsel %vm651, %v2254, 0
        %v2324 = vsel %vm651, %v2255, 0
        %v2327 = vsel %vm651, %v2256, 0
        %v2330 = vsel %vm651, %v2257, 0
        %v2333 = vsel %vm651, %v2258, 0
        %v2336 = vsel %vm651, %v2259, 0
        %v2339 = vsel %vm651, %v2260, 0
        %v2342 = vsel %vm651, %v2261, 0
        %v2345 = vsel %vm651, %v2262, 0
        %v2348 = vsel %vm651, %v2263, 0
        %v2351 = vsel %vm651, %v2264, 0
        %v2354 = vsel %vm651, %v2265, 0
        %v2357 = vsel %vm651, %v2266, 0
        %v2360 = vsel %vm651, %v2267, 0
        %v2363 = vsel %vm651, %v2268, 0
        %v2366 = vsel %vm651, %v2269, 0
        %v2368 = vsel %vm584, %v2270, 0
        %v2370 = vsel %vm584, %v2271, 0
        %2372 = vmatpush.msra.mxu0 0.0
        %2373 = vmatpush.msra.mxu0 0.0
        %2374 = vmatpush.msra.mxu0 0.0
        %2375 = vmatpush.msra.mxu0 0.0
        %2376 = vmatpush.msra.mxu0 0.0
        %2377 = vmatpush.msra.mxu0 0.0
        %2378 = vmatpush.msra.mxu0 0.0
        %2379 = vmatpush.msra.mxu0 0.0
        %2380 = vmatpush.msra.mxu0 0.0
        %2381 = vmatpush.msra.mxu0 0.0
        %2382 = vmatpush.msra.mxu0 0.0
        %2383 = vmatpush.msra.mxu0 0.0
        %2384 = vmatpush.msra.mxu0 0.0
        %2385 = vmatpush.msra.mxu0 0.0
        %2386 = vmatpush.msra.mxu0 0.0
        %2387 = vmatpush.msra.mxu0 %v2368
        %2388 = vmatmul.f32.gmra.mxu0 %v2273
        %v2389 = vpop.f32.mrf.mxu0
        %v2390 = vadd.f32 0.0, %v2389
        %2391 = vmatmul.f32.gmra.mxu0 %v2276
        %v2392 = vpop.f32.mrf.mxu0
        %v2393 = vadd.f32 0.0, %v2392
        %2394 = vmatmul.f32.gmra.mxu0 %v2279
        %v2395 = vpop.f32.mrf.mxu0
        %v2396 = vadd.f32 0.0, %v2395
        %2397 = vmatmul.f32.gmra.mxu0 %v2282
        %v2398 = vpop.f32.mrf.mxu0
        %v2399 = vadd.f32 0.0, %v2398
        %2400 = vmatmul.f32.gmra.mxu0 %v2285
        %v2401 = vpop.f32.mrf.mxu0
        %v2402 = vadd.f32 0.0, %v2401
        %2403 = vmatmul.f32.gmra.mxu0 %v2288
        %v2404 = vpop.f32.mrf.mxu0
        %v2405 = vadd.f32 0.0, %v2404
        %2406 = vmatmul.f32.gmra.mxu0 %v2291
        %v2407 = vpop.f32.mrf.mxu0
        %v2408 = vadd.f32 0.0, %v2407
        %2409 = vmatmul.f32.gmra.mxu0 %v2294
        %v2410 = vpop.f32.mrf.mxu0
        %v2411 = vadd.f32 0.0, %v2410
        %2412 = vmatmul.f32.gmra.mxu0 %v2297
        %v2413 = vpop.f32.mrf.mxu0
        %v2414 = vadd.f32 0.0, %v2413
        %2415 = vmatmul.f32.gmra.mxu0 %v2300
        %v2416 = vpop.f32.mrf.mxu0
        %v2417 = vadd.f32 0.0, %v2416
        %2418 = vmatmul.f32.gmra.mxu0 %v2303
        %v2419 = vpop.f32.mrf.mxu0
        %v2420 = vadd.f32 0.0, %v2419
        %2421 = vmatmul.f32.gmra.mxu0 %v2306
        %v2422 = vpop.f32.mrf.mxu0
        %v2423 = vadd.f32 0.0, %v2422
        %2424 = vmatmul.f32.gmra.mxu0 %v2309
        %v2425 = vpop.f32.mrf.mxu0
        %v2426 = vadd.f32 0.0, %v2425
        %2427 = vmatmul.f32.gmra.mxu0 %v2312
        %v2428 = vpop.f32.mrf.mxu0
        %v2429 = vadd.f32 0.0, %v2428
        %2430 = vmatmul.f32.gmra.mxu0 %v2315
        %v2431 = vpop.f32.mrf.mxu0
        %v2432 = vadd.f32 0.0, %v2431
        %2433 = vmatmul.f32.gmra.mxu0 %v2318
        %v2434 = vpop.f32.mrf.mxu0
        %v2435 = vadd.f32 0.0, %v2434
        %2436 = vmatmul.f32.gmra.mxu0 %v2321
        %v2437 = vpop.f32.mrf.mxu0
        %v2438 = vadd.f32 0.0, %v2437
        %2439 = vmatmul.f32.gmra.mxu0 %v2324
        %v2440 = vpop.f32.mrf.mxu0
        %v2441 = vadd.f32 0.0, %v2440
        %2442 = vmatmul.f32.gmra.mxu0 %v2327
        %v2443 = vpop.f32.mrf.mxu0
        %v2444 = vadd.f32 0.0, %v2443
        %2445 = vmatmul.f32.gmra.mxu0 %v2330
        %v2446 = vpop.f32.mrf.mxu0
        %v2447 = vadd.f32 0.0, %v2446
        %2448 = vmatmul.f32.gmra.mxu0 %v2333
        %v2449 = vpop.f32.mrf.mxu0
        %v2450 = vadd.f32 0.0, %v2449
        %2451 = vmatmul.f32.gmra.mxu0 %v2336
        %v2452 = vpop.f32.mrf.mxu0
        %v2453 = vadd.f32 0.0, %v2452
        %2454 = vmatmul.f32.gmra.mxu0 %v2339
        %v2455 = vpop.f32.mrf.mxu0
        %v2456 = vadd.f32 0.0, %v2455
        %2457 = vmatmul.f32.gmra.mxu0 %v2342
        %v2458 = vpop.f32.mrf.mxu0
        %v2459 = vadd.f32 0.0, %v2458
        %2460 = vmatmul.f32.gmra.mxu0 %v2345
        %v2461 = vpop.f32.mrf.mxu0
        %v2462 = vadd.f32 0.0, %v2461
        %2463 = vmatmul.f32.gmra.mxu0 %v2348
        %v2464 = vpop.f32.mrf.mxu0
        %v2465 = vadd.f32 0.0, %v2464
        %2466 = vmatmul.f32.gmra.mxu0 %v2351
        %v2467 = vpop.f32.mrf.mxu0
        %v2468 = vadd.f32 0.0, %v2467
        %2469 = vmatmul.f32.gmra.mxu0 %v2354
        %v2470 = vpop.f32.mrf.mxu0
        %v2471 = vadd.f32 0.0, %v2470
        %2472 = vmatmul.f32.gmra.mxu0 %v2357
        %v2473 = vpop.f32.mrf.mxu0
        %v2474 = vadd.f32 0.0, %v2473
        %2475 = vmatmul.f32.gmra.mxu0 %v2360
        %v2476 = vpop.f32.mrf.mxu0
        %v2477 = vadd.f32 0.0, %v2476
        %2478 = vmatmul.f32.gmra.mxu0 %v2363
        %v2479 = vpop.f32.mrf.mxu0
        %v2480 = vadd.f32 0.0, %v2479
        %2481 = vmatmul.f32.gmra.mxu0 %v2366
        %v2482 = vpop.f32.mrf.mxu0
        %v2483 = vadd.f32 0.0, %v2482
        %2484 = vdwg.mxu0
        %2485 = vmatpush.msra.mxu0 0.0
        %2486 = vmatpush.msra.mxu0 0.0
        %2487 = vmatpush.msra.mxu0 0.0
        %2488 = vmatpush.msra.mxu0 0.0
        %2489 = vmatpush.msra.mxu0 0.0
        %2490 = vmatpush.msra.mxu0 0.0
        %2491 = vmatpush.msra.mxu0 0.0
        %2492 = vmatpush.msra.mxu0 0.0
        %2493 = vmatpush.msra.mxu0 0.0
        %2494 = vmatpush.msra.mxu0 0.0
        %2495 = vmatpush.msra.mxu0 0.0
        %2496 = vmatpush.msra.mxu0 0.0
        %2497 = vmatpush.msra.mxu0 0.0
        %2498 = vmatpush.msra.mxu0 0.0
        %2499 = vmatpush.msra.mxu0 0.0
        %2500 = vmatpush.msra.mxu0 %v2370
        %2501 = vmatmul.f32.gmra.mxu0 %v2273
        %v2502 = vpop.f32.mrf.mxu0
        %v2503 = vadd.f32 0.0, %v2502
        %2504 = vmatmul.f32.gmra.mxu0 %v2276
        %v2505 = vpop.f32.mrf.mxu0
        %v2506 = vadd.f32 0.0, %v2505
        %2507 = vmatmul.f32.gmra.mxu0 %v2279
        %v2508 = vpop.f32.mrf.mxu0
        %v2509 = vadd.f32 0.0, %v2508
        %2510 = vmatmul.f32.gmra.mxu0 %v2282
        %v2511 = vpop.f32.mrf.mxu0
        %v2512 = vadd.f32 0.0, %v2511
        %2513 = vmatmul.f32.gmra.mxu0 %v2285
        %v2514 = vpop.f32.mrf.mxu0
        %v2515 = vadd.f32 0.0, %v2514
        %2516 = vmatmul.f32.gmra.mxu0 %v2288
        %v2517 = vpop.f32.mrf.mxu0
        %v2518 = vadd.f32 0.0, %v2517
        %2519 = vmatmul.f32.gmra.mxu0 %v2291
        %v2520 = vpop.f32.mrf.mxu0
        %v2521 = vadd.f32 0.0, %v2520
        %2522 = vmatmul.f32.gmra.mxu0 %v2294
        %v2523 = vpop.f32.mrf.mxu0
        %v2524 = vadd.f32 0.0, %v2523
        %2525 = vmatmul.f32.gmra.mxu0 %v2297
        %v2526 = vpop.f32.mrf.mxu0
        %v2527 = vadd.f32 0.0, %v2526
        %2528 = vmatmul.f32.gmra.mxu0 %v2300
        %v2529 = vpop.f32.mrf.mxu0
        %v2530 = vadd.f32 0.0, %v2529
        %2531 = vmatmul.f32.gmra.mxu0 %v2303
        %v2532 = vpop.f32.mrf.mxu0
        %v2533 = vadd.f32 0.0, %v2532
        %2534 = vmatmul.f32.gmra.mxu0 %v2306
        %v2535 = vpop.f32.mrf.mxu0
        %v2536 = vadd.f32 0.0, %v2535
        %2537 = vmatmul.f32.gmra.mxu0 %v2309
        %v2538 = vpop.f32.mrf.mxu0
        %v2539 = vadd.f32 0.0, %v2538
        %2540 = vmatmul.f32.gmra.mxu0 %v2312
        %v2541 = vpop.f32.mrf.mxu0
        %v2542 = vadd.f32 0.0, %v2541
        %2543 = vmatmul.f32.gmra.mxu0 %v2315
        %v2544 = vpop.f32.mrf.mxu0
        %v2545 = vadd.f32 0.0, %v2544
        %2546 = vmatmul.f32.gmra.mxu0 %v2318
        %v2547 = vpop.f32.mrf.mxu0
        %v2548 = vadd.f32 0.0, %v2547
        %2549 = vmatmul.f32.gmra.mxu0 %v2321
        %v2550 = vpop.f32.mrf.mxu0
        %v2551 = vadd.f32 0.0, %v2550
        %2552 = vmatmul.f32.gmra.mxu0 %v2324
        %v2553 = vpop.f32.mrf.mxu0
        %v2554 = vadd.f32 0.0, %v2553
        %2555 = vmatmul.f32.gmra.mxu0 %v2327
        %v2556 = vpop.f32.mrf.mxu0
        %v2557 = vadd.f32 0.0, %v2556
        %2558 = vmatmul.f32.gmra.mxu0 %v2330
        %v2559 = vpop.f32.mrf.mxu0
        %v2560 = vadd.f32 0.0, %v2559
        %2561 = vmatmul.f32.gmra.mxu0 %v2333
        %v2562 = vpop.f32.mrf.mxu0
        %v2563 = vadd.f32 0.0, %v2562
        %2564 = vmatmul.f32.gmra.mxu0 %v2336
        %v2565 = vpop.f32.mrf.mxu0
        %v2566 = vadd.f32 0.0, %v2565
        %2567 = vmatmul.f32.gmra.mxu0 %v2339
        %v2568 = vpop.f32.mrf.mxu0
        %v2569 = vadd.f32 0.0, %v2568
        %2570 = vmatmul.f32.gmra.mxu0 %v2342
        %v2571 = vpop.f32.mrf.mxu0
        %v2572 = vadd.f32 0.0, %v2571
        %2573 = vmatmul.f32.gmra.mxu0 %v2345
        %v2574 = vpop.f32.mrf.mxu0
        %v2575 = vadd.f32 0.0, %v2574
        %2576 = vmatmul.f32.gmra.mxu0 %v2348
        %v2577 = vpop.f32.mrf.mxu0
        %v2578 = vadd.f32 0.0, %v2577
        %2579 = vmatmul.f32.gmra.mxu0 %v2351
        %v2580 = vpop.f32.mrf.mxu0
        %v2581 = vadd.f32 0.0, %v2580
        %2582 = vmatmul.f32.gmra.mxu0 %v2354
        %v2583 = vpop.f32.mrf.mxu0
        %v2584 = vadd.f32 0.0, %v2583
        %2585 = vmatmul.f32.gmra.mxu0 %v2357
        %v2586 = vpop.f32.mrf.mxu0
        %v2587 = vadd.f32 0.0, %v2586
        %2588 = vmatmul.f32.gmra.mxu0 %v2360
        %v2589 = vpop.f32.mrf.mxu0
        %v2590 = vadd.f32 0.0, %v2589
        %2591 = vmatmul.f32.gmra.mxu0 %v2363
        %v2592 = vpop.f32.mrf.mxu0
        %v2593 = vadd.f32 0.0, %v2592
        %2594 = vmatmul.f32.gmra.mxu0 %v2366
        %v2595 = vpop.f32.mrf.mxu0
        %v2596 = vadd.f32 0.0, %v2595
        %2597 = vdwg.mxu0
        %v2598 = vmax.f32 %v2390, %v2503
        %2599 = vmax.xlane.f32.xlu0 %v2598
        %v2600 = vpop.xlane.xlu0 %2599
        %v2601 = vmax.f32 %v2393, %v2506
        %2602 = vmax.xlane.f32.xlu0 %v2601
        %v2603 = vpop.xlane.xlu0 %2602
        %v2604 = vmax.f32 %v2396, %v2509
        %2605 = vmax.xlane.f32.xlu0 %v2604
        %v2606 = vpop.xlane.xlu0 %2605
        %v2607 = vmax.f32 %v2399, %v2512
        %2608 = vmax.xlane.f32.xlu0 %v2607
        %v2609 = vpop.xlane.xlu0 %2608
        %v2610 = vmax.f32 %v2402, %v2515
        %2611 = vmax.xlane.f32.xlu0 %v2610
        %v2612 = vpop.xlane.xlu0 %2611
        %v2613 = vmax.f32 %v2405, %v2518
        %2614 = vmax.xlane.f32.xlu0 %v2613
        %v2615 = vpop.xlane.xlu0 %2614
        %v2616 = vmax.f32 %v2408, %v2521
        %2617 = vmax.xlane.f32.xlu0 %v2616
        %v2618 = vpop.xlane.xlu0 %2617
        %v2619 = vmax.f32 %v2411, %v2524
        %2620 = vmax.xlane.f32.xlu0 %v2619
        %v2621 = vpop.xlane.xlu0 %2620
        %v2622 = vmax.f32 %v2414, %v2527
        %2623 = vmax.xlane.f32.xlu0 %v2622
        %v2624 = vpop.xlane.xlu0 %2623
        %v2625 = vmax.f32 %v2417, %v2530
        %2626 = vmax.xlane.f32.xlu0 %v2625
        %v2627 = vpop.xlane.xlu0 %2626
        %v2628 = vmax.f32 %v2420, %v2533
        %2629 = vmax.xlane.f32.xlu0 %v2628
        %v2630 = vpop.xlane.xlu0 %2629
        %v2631 = vmax.f32 %v2423, %v2536
        %2632 = vmax.xlane.f32.xlu0 %v2631
        %v2633 = vpop.xlane.xlu0 %2632
        %v2634 = vmax.f32 %v2426, %v2539
        %2635 = vmax.xlane.f32.xlu0 %v2634
        %v2636 = vpop.xlane.xlu0 %2635
        %v2637 = vmax.f32 %v2429, %v2542
        %2638 = vmax.xlane.f32.xlu0 %v2637
        %v2639 = vpop.xlane.xlu0 %2638
        %v2640 = vmax.f32 %v2432, %v2545
        %2641 = vmax.xlane.f32.xlu0 %v2640
        %v2642 = vpop.xlane.xlu0 %2641
        %v2643 = vmax.f32 %v2435, %v2548
        %2644 = vmax.xlane.f32.xlu0 %v2643
        %v2645 = vpop.xlane.xlu0 %2644
        %v2646 = vmax.f32 %v2438, %v2551
        %2647 = vmax.xlane.f32.xlu0 %v2646
        %v2648 = vpop.xlane.xlu0 %2647
        %v2649 = vmax.f32 %v2441, %v2554
        %2650 = vmax.xlane.f32.xlu0 %v2649
        %v2651 = vpop.xlane.xlu0 %2650
        %v2652 = vmax.f32 %v2444, %v2557
        %2653 = vmax.xlane.f32.xlu0 %v2652
        %v2654 = vpop.xlane.xlu0 %2653
        %v2655 = vmax.f32 %v2447, %v2560
        %2656 = vmax.xlane.f32.xlu0 %v2655
        %v2657 = vpop.xlane.xlu0 %2656
        %v2658 = vmax.f32 %v2450, %v2563
        %2659 = vmax.xlane.f32.xlu0 %v2658
        %v2660 = vpop.xlane.xlu0 %2659
        %v2661 = vmax.f32 %v2453, %v2566
        %2662 = vmax.xlane.f32.xlu0 %v2661
        %v2663 = vpop.xlane.xlu0 %2662
        %v2664 = vmax.f32 %v2456, %v2569
        %2665 = vmax.xlane.f32.xlu0 %v2664
        %v2666 = vpop.xlane.xlu0 %2665
        %v2667 = vmax.f32 %v2459, %v2572
        %2668 = vmax.xlane.f32.xlu0 %v2667
        %v2669 = vpop.xlane.xlu0 %2668
        %v2670 = vmax.f32 %v2462, %v2575
        %2671 = vmax.xlane.f32.xlu0 %v2670
        %v2672 = vpop.xlane.xlu0 %2671
        %v2673 = vmax.f32 %v2465, %v2578
        %2674 = vmax.xlane.f32.xlu0 %v2673
        %v2675 = vpop.xlane.xlu0 %2674
        %v2676 = vmax.f32 %v2468, %v2581
        %2677 = vmax.xlane.f32.xlu0 %v2676
        %v2678 = vpop.xlane.xlu0 %2677
        %v2679 = vmax.f32 %v2471, %v2584
        %2680 = vmax.xlane.f32.xlu0 %v2679
        %v2681 = vpop.xlane.xlu0 %2680
        %v2682 = vmax.f32 %v2474, %v2587
        %2683 = vmax.xlane.f32.xlu0 %v2682
        %v2684 = vpop.xlane.xlu0 %2683
        %v2685 = vmax.f32 %v2477, %v2590
        %2686 = vmax.xlane.f32.xlu0 %v2685
        %v2687 = vpop.xlane.xlu0 %2686
        %v2688 = vmax.f32 %v2480, %v2593
        %2689 = vmax.xlane.f32.xlu0 %v2688
        %v2690 = vpop.xlane.xlu0 %2689
        %v2691 = vmax.f32 %v2483, %v2596
        %2692 = vmax.xlane.f32.xlu0 %v2691
        %v2693 = vpop.xlane.xlu0 %2692
        %v2694 = vsub.f32 %v2390, %v2600
        %v2695 = vsub.f32 %v2503, %v2600
        %v2696 = vsub.f32 %v2393, %v2603
        %v2697 = vsub.f32 %v2506, %v2603
        %v2698 = vsub.f32 %v2396, %v2606
        %v2699 = vsub.f32 %v2509, %v2606
        %v2700 = vsub.f32 %v2399, %v2609
        %v2701 = vsub.f32 %v2512, %v2609
        %v2702 = vsub.f32 %v2402, %v2612
        %v2703 = vsub.f32 %v2515, %v2612
        %v2704 = vsub.f32 %v2405, %v2615
        %v2705 = vsub.f32 %v2518, %v2615
        %v2706 = vsub.f32 %v2408, %v2618
        %v2707 = vsub.f32 %v2521, %v2618
        %v2708 = vsub.f32 %v2411, %v2621
        %v2709 = vsub.f32 %v2524, %v2621
        %v2710 = vsub.f32 %v2414, %v2624
        %v2711 = vsub.f32 %v2527, %v2624
        %v2712 = vsub.f32 %v2417, %v2627
        %v2713 = vsub.f32 %v2530, %v2627
        %v2714 = vsub.f32 %v2420, %v2630
        %v2715 = vsub.f32 %v2533, %v2630
        %v2716 = vsub.f32 %v2423, %v2633
        %v2717 = vsub.f32 %v2536, %v2633
        %v2718 = vsub.f32 %v2426, %v2636
        %v2719 = vsub.f32 %v2539, %v2636
        %v2720 = vsub.f32 %v2429, %v2639
        %v2721 = vsub.f32 %v2542, %v2639
        %v2722 = vsub.f32 %v2432, %v2642
        %v2723 = vsub.f32 %v2545, %v2642
        %v2724 = vsub.f32 %v2435, %v2645
        %v2725 = vsub.f32 %v2548, %v2645
        %v2726 = vsub.f32 %v2438, %v2648
        %v2727 = vsub.f32 %v2551, %v2648
        %v2728 = vsub.f32 %v2441, %v2651
        %v2729 = vsub.f32 %v2554, %v2651
        %v2730 = vsub.f32 %v2444, %v2654
        %v2731 = vsub.f32 %v2557, %v2654
        %v2732 = vsub.f32 %v2447, %v2657
        %v2733 = vsub.f32 %v2560, %v2657
        %v2734 = vsub.f32 %v2450, %v2660
        %v2735 = vsub.f32 %v2563, %v2660
        %v2736 = vsub.f32 %v2453, %v2663
        %v2737 = vsub.f32 %v2566, %v2663
        %v2738 = vsub.f32 %v2456, %v2666
        %v2739 = vsub.f32 %v2569, %v2666
        %v2740 = vsub.f32 %v2459, %v2669
        %v2741 = vsub.f32 %v2572, %v2669
        %v2742 = vsub.f32 %v2462, %v2672
        %v2743 = vsub.f32 %v2575, %v2672
        %v2744 = vsub.f32 %v2465, %v2675
        %v2745 = vsub.f32 %v2578, %v2675
        %v2746 = vsub.f32 %v2468, %v2678
        %v2747 = vsub.f32 %v2581, %v2678
        %v2748 = vsub.f32 %v2471, %v2681
        %v2749 = vsub.f32 %v2584, %v2681
        %v2750 = vsub.f32 %v2474, %v2684
        %v2751 = vsub.f32 %v2587, %v2684
        %v2752 = vsub.f32 %v2477, %v2687
        %v2753 = vsub.f32 %v2590, %v2687
        %v2754 = vsub.f32 %v2480, %v2690
        %v2755 = vsub.f32 %v2593, %v2690
        %v2756 = vsub.f32 %v2483, %v2693
        %v2757 = vsub.f32 %v2596, %v2693
        %v2758 = vmul.f32 %v2694, 1.442695
        %v2759 = vpow.pop %v2758
        %v2760 = vmul.f32 %v2695, 1.442695
        %v2761 = vpow.pop %v2760
        %v2762 = vmul.f32 %v2696, 1.442695
        %v2763 = vpow.pop %v2762
        %v2764 = vmul.f32 %v2697, 1.442695
        %v2765 = vpow.pop %v2764
        %v2766 = vmul.f32 %v2698, 1.442695
        %v2767 = vpow.pop %v2766
        %v2768 = vmul.f32 %v2699, 1.442695
        %v2769 = vpow.pop %v2768
        %v2770 = vmul.f32 %v2700, 1.442695
        %v2771 = vpow.pop %v2770
        %v2772 = vmul.f32 %v2701, 1.442695
        %v2773 = vpow.pop %v2772
        %v2774 = vmul.f32 %v2702, 1.442695
        %v2775 = vpow.pop %v2774
        %v2776 = vmul.f32 %v2703, 1.442695
        %v2777 = vpow.pop %v2776
        %v2778 = vmul.f32 %v2704, 1.442695
        %v2779 = vpow.pop %v2778
        %v2780 = vmul.f32 %v2705, 1.442695
        %v2781 = vpow.pop %v2780
        %v2782 = vmul.f32 %v2706, 1.442695
        %v2783 = vpow.pop %v2782
        %v2784 = vmul.f32 %v2707, 1.442695
        %v2785 = vpow.pop %v2784
        %v2786 = vmul.f32 %v2708, 1.442695
        %v2787 = vpow.pop %v2786
        %v2788 = vmul.f32 %v2709, 1.442695
        %v2789 = vpow.pop %v2788
        %v2790 = vmul.f32 %v2710, 1.442695
        %v2791 = vpow.pop %v2790
        %v2792 = vmul.f32 %v2711, 1.442695
        %v2793 = vpow.pop %v2792
        %v2794 = vmul.f32 %v2712, 1.442695
        %v2795 = vpow.pop %v2794
        %v2796 = vmul.f32 %v2713, 1.442695
        %v2797 = vpow.pop %v2796
        %v2798 = vmul.f32 %v2714, 1.442695
        %v2799 = vpow.pop %v2798
        %v2800 = vmul.f32 %v2715, 1.442695
        %v2801 = vpow.pop %v2800
        %v2802 = vmul.f32 %v2716, 1.442695
        %v2803 = vpow.pop %v2802
        %v2804 = vmul.f32 %v2717, 1.442695
        %v2805 = vpow.pop %v2804
        %v2806 = vmul.f32 %v2718, 1.442695
        %v2807 = vpow.pop %v2806
        %v2808 = vmul.f32 %v2719, 1.442695
        %v2809 = vpow.pop %v2808
        %v2810 = vmul.f32 %v2720, 1.442695
        %v2811 = vpow.pop %v2810
        %v2812 = vmul.f32 %v2721, 1.442695
        %v2813 = vpow.pop %v2812
        %v2814 = vmul.f32 %v2722, 1.442695
        %v2815 = vpow.pop %v2814
        %v2816 = vmul.f32 %v2723, 1.442695
        %v2817 = vpow.pop %v2816
        %v2818 = vmul.f32 %v2724, 1.442695
        %v2819 = vpow.pop %v2818
        %v2820 = vmul.f32 %v2725, 1.442695
        %v2821 = vpow.pop %v2820
        %v2822 = vmul.f32 %v2726, 1.442695
        %v2823 = vpow.pop %v2822
        %v2824 = vmul.f32 %v2727, 1.442695
        %v2825 = vpow.pop %v2824
        %v2826 = vmul.f32 %v2728, 1.442695
        %v2827 = vpow.pop %v2826
        %v2828 = vmul.f32 %v2729, 1.442695
        %v2829 = vpow.pop %v2828
        %v2830 = vmul.f32 %v2730, 1.442695
        %v2831 = vpow.pop %v2830
        %v2832 = vmul.f32 %v2731, 1.442695
        %v2833 = vpow.pop %v2832
        %v2834 = vmul.f32 %v2732, 1.442695
        %v2835 = vpow.pop %v2834
        %v2836 = vmul.f32 %v2733, 1.442695
        %v2837 = vpow.pop %v2836
        %v2838 = vmul.f32 %v2734, 1.442695
        %v2839 = vpow.pop %v2838
        %v2840 = vmul.f32 %v2735, 1.442695
        %v2841 = vpow.pop %v2840
        %v2842 = vmul.f32 %v2736, 1.442695
        %v2843 = vpow.pop %v2842
        %v2844 = vmul.f32 %v2737, 1.442695
        %v2845 = vpow.pop %v2844
        %v2846 = vmul.f32 %v2738, 1.442695
        %v2847 = vpow.pop %v2846
        %v2848 = vmul.f32 %v2739, 1.442695
        %v2849 = vpow.pop %v2848
        %v2850 = vmul.f32 %v2740, 1.442695
        %v2851 = vpow.pop %v2850
        %v2852 = vmul.f32 %v2741, 1.442695
        %v2853 = vpow.pop %v2852
        %v2854 = vmul.f32 %v2742, 1.442695
        %v2855 = vpow.pop %v2854
        %v2856 = vmul.f32 %v2743, 1.442695
        %v2857 = vpow.pop %v2856
        %v2858 = vmul.f32 %v2744, 1.442695
        %v2859 = vpow.pop %v2858
        %v2860 = vmul.f32 %v2745, 1.442695
        %v2861 = vpow.pop %v2860
        %v2862 = vmul.f32 %v2746, 1.442695
        %v2863 = vpow.pop %v2862
        %v2864 = vmul.f32 %v2747, 1.442695
        %v2865 = vpow.pop %v2864
        %v2866 = vmul.f32 %v2748, 1.442695
        %v2867 = vpow.pop %v2866
        %v2868 = vmul.f32 %v2749, 1.442695
        %v2869 = vpow.pop %v2868
        %v2870 = vmul.f32 %v2750, 1.442695
        %v2871 = vpow.pop %v2870
        %v2872 = vmul.f32 %v2751, 1.442695
        %v2873 = vpow.pop %v2872
        %v2874 = vmul.f32 %v2752, 1.442695
        %v2875 = vpow.pop %v2874
        %v2876 = vmul.f32 %v2753, 1.442695
        %v2877 = vpow.pop %v2876
        %v2878 = vmul.f32 %v2754, 1.442695
        %v2879 = vpow.pop %v2878
        %v2880 = vmul.f32 %v2755, 1.442695
        %v2881 = vpow.pop %v2880
        %v2882 = vmul.f32 %v2756, 1.442695
        %v2883 = vpow.pop %v2882
        %v2884 = vmul.f32 %v2757, 1.442695
        %v2885 = vpow.pop %v2884
        %2886 = vmatpush.xpose.msra.mxu0 %v2819
        %2887 = vmatpush.xpose.msra.mxu0 %v2815
        %2888 = vmatpush.xpose.msra.mxu0 %v2811
        %2889 = vmatpush.xpose.msra.mxu0 %v2807
        %2890 = vmatpush.xpose.msra.mxu0 %v2803
        %2891 = vmatpush.xpose.msra.mxu0 %v2799
        %2892 = vmatpush.xpose.msra.mxu0 %v2795
        %2893 = vmatpush.xpose.msra.mxu0 %v2791
        %2894 = vmatpush.xpose.msra.mxu0 %v2787
        %2895 = vmatpush.xpose.msra.mxu0 %v2783
        %2896 = vmatpush.xpose.msra.mxu0 %v2779
        %2897 = vmatpush.xpose.msra.mxu0 %v2775
        %2898 = vmatpush.xpose.msra.mxu0 %v2771
        %2899 = vmatpush.xpose.msra.mxu0 %v2767
        %2900 = vmatpush.xpose.msra.mxu0 %v2763
        %2901 = vmatpush.xpose.msra.mxu0 %v2759
        %2902 = vmatmul.f32.gmra.mxu0 %v2200
        %v2903 = vpop.f32.mrf.mxu0
        %v2904 = vadd.f32 0.0, %v2903
        %2905 = vdwg.mxu0
        %2906 = vmatpush.xpose.msra.mxu0 %v2821
        %2907 = vmatpush.xpose.msra.mxu0 %v2817
        %2908 = vmatpush.xpose.msra.mxu0 %v2813
        %2909 = vmatpush.xpose.msra.mxu0 %v2809
        %2910 = vmatpush.xpose.msra.mxu0 %v2805
        %2911 = vmatpush.xpose.msra.mxu0 %v2801
        %2912 = vmatpush.xpose.msra.mxu0 %v2797
        %2913 = vmatpush.xpose.msra.mxu0 %v2793
        %2914 = vmatpush.xpose.msra.mxu0 %v2789
        %2915 = vmatpush.xpose.msra.mxu0 %v2785
        %2916 = vmatpush.xpose.msra.mxu0 %v2781
        %2917 = vmatpush.xpose.msra.mxu0 %v2777
        %2918 = vmatpush.xpose.msra.mxu0 %v2773
        %2919 = vmatpush.xpose.msra.mxu0 %v2769
        %2920 = vmatpush.xpose.msra.mxu0 %v2765
        %2921 = vmatpush.xpose.msra.mxu0 %v2761
        %2922 = vmatmul.f32.gmra.mxu0 %v2201
        %v2923 = vpop.f32.mrf.mxu0
        %v2924 = vadd.f32 %v2904, %v2923
        %2925 = vdwg.mxu0
        %2926 = vmatpush.xpose.msra.mxu0 %v2883
        %2927 = vmatpush.xpose.msra.mxu0 %v2879
        %2928 = vmatpush.xpose.msra.mxu0 %v2875
        %2929 = vmatpush.xpose.msra.mxu0 %v2871
        %2930 = vmatpush.xpose.msra.mxu0 %v2867
        %2931 = vmatpush.xpose.msra.mxu0 %v2863
        %2932 = vmatpush.xpose.msra.mxu0 %v2859
        %2933 = vmatpush.xpose.msra.mxu0 %v2855
        %2934 = vmatpush.xpose.msra.mxu0 %v2851
        %2935 = vmatpush.xpose.msra.mxu0 %v2847
        %2936 = vmatpush.xpose.msra.mxu0 %v2843
        %2937 = vmatpush.xpose.msra.mxu0 %v2839
        %2938 = vmatpush.xpose.msra.mxu0 %v2835
        %2939 = vmatpush.xpose.msra.mxu0 %v2831
        %2940 = vmatpush.xpose.msra.mxu0 %v2827
        %2941 = vmatpush.xpose.msra.mxu0 %v2823
        %2942 = vmatmul.f32.gmra.mxu0 %v2200
        %v2943 = vpop.f32.mrf.mxu0
        %v2944 = vadd.f32 0.0, %v2943
        %2945 = vdwg.mxu0
        %2946 = vmatpush.xpose.msra.mxu0 %v2885
        %2947 = vmatpush.xpose.msra.mxu0 %v2881
        %2948 = vmatpush.xpose.msra.mxu0 %v2877
        %2949 = vmatpush.xpose.msra.mxu0 %v2873
        %2950 = vmatpush.xpose.msra.mxu0 %v2869
        %2951 = vmatpush.xpose.msra.mxu0 %v2865
        %2952 = vmatpush.xpose.msra.mxu0 %v2861
        %2953 = vmatpush.xpose.msra.mxu0 %v2857
        %2954 = vmatpush.xpose.msra.mxu0 %v2853
        %2955 = vmatpush.xpose.msra.mxu0 %v2849
        %2956 = vmatpush.xpose.msra.mxu0 %v2845
        %2957 = vmatpush.xpose.msra.mxu0 %v2841
        %2958 = vmatpush.xpose.msra.mxu0 %v2837
        %2959 = vmatpush.xpose.msra.mxu0 %v2833
        %2960 = vmatpush.xpose.msra.mxu0 %v2829
        %2961 = vmatpush.xpose.msra.mxu0 %v2825
        %2962 = vmatmul.f32.gmra.mxu0 %v2201
        %v2963 = vpop.f32.mrf.mxu0
        %v2964 = vadd.f32 %v2944, %v2963
        %2965 = vdwg.mxu0
        %v2966 = vrcp.pop %v2924
        %v2967 = vmul.f32 %v2924, %v2966
        %v2968 = vsub.f32 1.0, %v2967
        %v2969 = vmul.f32 %v2966, %v2968
        %v2970 = vadd.f32 %v2966, %v2969
        %vm2971 = vweird.f32 %v2924
        %vm2972 = vweird.f32 %v2966
        %vm2973 = vmor %vm2971, %vm2972
        %v2974 = vsel %vm2973, %v2966, %v2970
        %v2975 = vand.u32 2147483647, %v2924
        %vm2976 = vcmp.eq.f32.partialorder %v2975, 8.507059e+37
        %v2977 = vand.u32 %v2924, 2147483648
        %v2978 = vor.u32 1.1754944e-38, %v2977
        %v2979 = vsel %vm2976, %v2978, %v2974
        %v2980 = vrcp.pop %v2964
        %v2981 = vmul.f32 %v2964, %v2980
        %v2982 = vsub.f32 1.0, %v2981
        %v2983 = vmul.f32 %v2980, %v2982
        %v2984 = vadd.f32 %v2980, %v2983
        %vm2985 = vweird.f32 %v2964
        %vm2986 = vweird.f32 %v2980
        %vm2987 = vmor %vm2985, %vm2986
        %v2988 = vsel %vm2987, %v2980, %v2984
        %v2989 = vand.u32 2147483647, %v2964
        %vm2990 = vcmp.eq.f32.partialorder %v2989, 8.507059e+37
        %v2991 = vand.u32 %v2964, 2147483648
        %v2992 = vor.u32 1.1754944e-38, %v2991
        %v2993 = vsel %vm2990, %v2992, %v2988
        %v2994 = vperm.slane %v2979, 2
        %v2995 = vperm.slane %v2993, 2
        %v2996 = vmul.f32 %v2924, %v2994
        %v2997 = vmul.f32 %v2964, %v2995
        %v3000 = vrot.slane %v2996, 4
        %v3001 = vrot.slane %v2997, 4
        %3004 = vst [vmem:[#allocation2] sm:$0x30] %v3000
        %3005 = vst [vmem:[#allocation2 + $0x8] sm:$0x30] %v3001
        %v3006 = vrot.slane %v548, 6
        %v3007 = vrot.slane %v571, 6
        %v3010 = vsel %vm584, %v3006, 1.0
        %v3011 = vsel %vm584, %v3007, 1.0
        %v3012 = vrot.slane %v483, 6
        %v3013 = vrot.slane %v503, 6
        %3016 = vxpose.xlu0.b32.start [1/16] %v3012, 128
        %3017 = vxpose.xlu0.b32.cont [2/16] 0.0, 128
        %3018 = vxpose.xlu0.b32.cont [3/16] 0.0, 128
        %3019 = vxpose.xlu0.b32.cont [4/16] 0.0, 128
        %3020 = vxpose.xlu0.b32.cont [5/16] 0.0, 128
        %3021 = vxpose.xlu0.b32.cont [6/16] 0.0, 128
        %3022 = vxpose.xlu0.b32.cont [7/16] 0.0, 128
        %3023 = vxpose.xlu0.b32.cont [8/16] 0.0, 128
        %3024 = vxpose.xlu0.b32.cont [9/16] 0.0, 128
        %3025 = vxpose.xlu0.b32.cont [10/16] 0.0, 128
        %3026 = vxpose.xlu0.b32.cont [11/16] 0.0, 128
        %3027 = vxpose.xlu0.b32.cont [12/16] 0.0, 128
        %3028 = vxpose.xlu0.b32.cont [13/16] 0.0, 128
        %3029 = vxpose.xlu0.b32.cont [14/16] 0.0, 128
        %3030 = vxpose.xlu0.b32.cont [15/16] 0.0, 128
        %3031 = vxpose.xlu0.b32.end [16/16] 0.0, 128
        %v3032 = vpop.trf.xlu0
        %v3033 = vpop.trf.xlu0
        %v3034 = vpop.trf.xlu0
        %v3035 = vpop.trf.xlu0
        %v3036 = vpop.trf.xlu0
        %v3037 = vpop.trf.xlu0
        %v3038 = vpop.trf.xlu0
        %v3039 = vpop.trf.xlu0
        %v3040 = vpop.trf.xlu0
        %v3041 = vpop.trf.xlu0
        %v3042 = vpop.trf.xlu0
        %v3043 = vpop.trf.xlu0
        %v3044 = vpop.trf.xlu0
        %v3045 = vpop.trf.xlu0
        %v3046 = vpop.trf.xlu0
        %v3047 = vpop.trf.xlu0
        %3048 = vxpose.xlu0.b32.start [1/16] %v3013, 128
        %3049 = vxpose.xlu0.b32.cont [2/16] 0.0, 128
        %3050 = vxpose.xlu0.b32.cont [3/16] 0.0, 128
        %3051 = vxpose.xlu0.b32.cont [4/16] 0.0, 128
        %3052 = vxpose.xlu0.b32.cont [5/16] 0.0, 128
        %3053 = vxpose.xlu0.b32.cont [6/16] 0.0, 128
        %3054 = vxpose.xlu0.b32.cont [7/16] 0.0, 128
        %3055 = vxpose.xlu0.b32.cont [8/16] 0.0, 128
        %3056 = vxpose.xlu0.b32.cont [9/16] 0.0, 128
        %3057 = vxpose.xlu0.b32.cont [10/16] 0.0, 128
        %3058 = vxpose.xlu0.b32.cont [11/16] 0.0, 128
        %3059 = vxpose.xlu0.b32.cont [12/16] 0.0, 128
        %3060 = vxpose.xlu0.b32.cont [13/16] 0.0, 128
        %3061 = vxpose.xlu0.b32.cont [14/16] 0.0, 128
        %3062 = vxpose.xlu0.b32.cont [15/16] 0.0, 128
        %3063 = vxpose.xlu0.b32.end [16/16] 0.0, 128
        %v3064 = vpop.trf.xlu0
        %v3065 = vpop.trf.xlu0
        %v3066 = vpop.trf.xlu0
        %v3067 = vpop.trf.xlu0
        %v3068 = vpop.trf.xlu0
        %v3069 = vpop.trf.xlu0
        %v3070 = vpop.trf.xlu0
        %v3071 = vpop.trf.xlu0
        %v3072 = vpop.trf.xlu0
        %v3073 = vpop.trf.xlu0
        %v3074 = vpop.trf.xlu0
        %v3075 = vpop.trf.xlu0
        %v3076 = vpop.trf.xlu0
        %v3077 = vpop.trf.xlu0
        %v3078 = vpop.trf.xlu0
        %v3079 = vpop.trf.xlu0
        %v3080 = vrot.slane %v545, 6
        %v3081 = vrot.slane %v568, 6
        %v3083 = vsel %vm651, %v3032, 0
        %v3086 = vsel %vm651, %v3033, 0
        %v3089 = vsel %vm651, %v3034, 0
        %v3092 = vsel %vm651, %v3035, 0
        %v3095 = vsel %vm651, %v3036, 0
        %v3098 = vsel %vm651, %v3037, 0
        %v3101 = vsel %vm651, %v3038, 0
        %v3104 = vsel %vm651, %v3039, 0
        %v3107 = vsel %vm651, %v3040, 0
        %v3110 = vsel %vm651, %v3041, 0
        %v3113 = vsel %vm651, %v3042, 0
        %v3116 = vsel %vm651, %v3043, 0
        %v3119 = vsel %vm651, %v3044, 0
        %v3122 = vsel %vm651, %v3045, 0
        %v3125 = vsel %vm651, %v3046, 0
        %v3128 = vsel %vm651, %v3047, 0
        %v3131 = vsel %vm651, %v3064, 0
        %v3134 = vsel %vm651, %v3065, 0
        %v3137 = vsel %vm651, %v3066, 0
        %v3140 = vsel %vm651, %v3067, 0
        %v3143 = vsel %vm651, %v3068, 0
        %v3146 = vsel %vm651, %v3069, 0
        %v3149 = vsel %vm651, %v3070, 0
        %v3152 = vsel %vm651, %v3071, 0
        %v3155 = vsel %vm651, %v3072, 0
        %v3158 = vsel %vm651, %v3073, 0
        %v3161 = vsel %vm651, %v3074, 0
        %v3164 = vsel %vm651, %v3075, 0
        %v3167 = vsel %vm651, %v3076, 0
        %v3170 = vsel %vm651, %v3077, 0
        %v3173 = vsel %vm651, %v3078, 0
        %v3176 = vsel %vm651, %v3079, 0
        %v3178 = vsel %vm584, %v3080, 0
        %v3180 = vsel %vm584, %v3081, 0
        %3182 = vmatpush.msra.mxu0 0.0
        %3183 = vmatpush.msra.mxu0 0.0
        %3184 = vmatpush.msra.mxu0 0.0
        %3185 = vmatpush.msra.mxu0 0.0
        %3186 = vmatpush.msra.mxu0 0.0
        %3187 = vmatpush.msra.mxu0 0.0
        %3188 = vmatpush.msra.mxu0 0.0
        %3189 = vmatpush.msra.mxu0 0.0
        %3190 = vmatpush.msra.mxu0 0.0
        %3191 = vmatpush.msra.mxu0 0.0
        %3192 = vmatpush.msra.mxu0 0.0
        %3193 = vmatpush.msra.mxu0 0.0
        %3194 = vmatpush.msra.mxu0 0.0
        %3195 = vmatpush.msra.mxu0 0.0
        %3196 = vmatpush.msra.mxu0 0.0
        %3197 = vmatpush.msra.mxu0 %v3178
        %3198 = vmatmul.f32.gmra.mxu0 %v3083
        %v3199 = vpop.f32.mrf.mxu0
        %v3200 = vadd.f32 0.0, %v3199
        %3201 = vmatmul.f32.gmra.mxu0 %v3086
        %v3202 = vpop.f32.mrf.mxu0
        %v3203 = vadd.f32 0.0, %v3202
        %3204 = vmatmul.f32.gmra.mxu0 %v3089
        %v3205 = vpop.f32.mrf.mxu0
        %v3206 = vadd.f32 0.0, %v3205
        %3207 = vmatmul.f32.gmra.mxu0 %v3092
        %v3208 = vpop.f32.mrf.mxu0
        %v3209 = vadd.f32 0.0, %v3208
        %3210 = vmatmul.f32.gmra.mxu0 %v3095
        %v3211 = vpop.f32.mrf.mxu0
        %v3212 = vadd.f32 0.0, %v3211
        %3213 = vmatmul.f32.gmra.mxu0 %v3098
        %v3214 = vpop.f32.mrf.mxu0
        %v3215 = vadd.f32 0.0, %v3214
        %3216 = vmatmul.f32.gmra.mxu0 %v3101
        %v3217 = vpop.f32.mrf.mxu0
        %v3218 = vadd.f32 0.0, %v3217
        %3219 = vmatmul.f32.gmra.mxu0 %v3104
        %v3220 = vpop.f32.mrf.mxu0
        %v3221 = vadd.f32 0.0, %v3220
        %3222 = vmatmul.f32.gmra.mxu0 %v3107
        %v3223 = vpop.f32.mrf.mxu0
        %v3224 = vadd.f32 0.0, %v3223
        %3225 = vmatmul.f32.gmra.mxu0 %v3110
        %v3226 = vpop.f32.mrf.mxu0
        %v3227 = vadd.f32 0.0, %v3226
        %3228 = vmatmul.f32.gmra.mxu0 %v3113
        %v3229 = vpop.f32.mrf.mxu0
        %v3230 = vadd.f32 0.0, %v3229
        %3231 = vmatmul.f32.gmra.mxu0 %v3116
        %v3232 = vpop.f32.mrf.mxu0
        %v3233 = vadd.f32 0.0, %v3232
        %3234 = vmatmul.f32.gmra.mxu0 %v3119
        %v3235 = vpop.f32.mrf.mxu0
        %v3236 = vadd.f32 0.0, %v3235
        %3237 = vmatmul.f32.gmra.mxu0 %v3122
        %v3238 = vpop.f32.mrf.mxu0
        %v3239 = vadd.f32 0.0, %v3238
        %3240 = vmatmul.f32.gmra.mxu0 %v3125
        %v3241 = vpop.f32.mrf.mxu0
        %v3242 = vadd.f32 0.0, %v3241
        %3243 = vmatmul.f32.gmra.mxu0 %v3128
        %v3244 = vpop.f32.mrf.mxu0
        %v3245 = vadd.f32 0.0, %v3244
        %3246 = vmatmul.f32.gmra.mxu0 %v3131
        %v3247 = vpop.f32.mrf.mxu0
        %v3248 = vadd.f32 0.0, %v3247
        %3249 = vmatmul.f32.gmra.mxu0 %v3134
        %v3250 = vpop.f32.mrf.mxu0
        %v3251 = vadd.f32 0.0, %v3250
        %3252 = vmatmul.f32.gmra.mxu0 %v3137
        %v3253 = vpop.f32.mrf.mxu0
        %v3254 = vadd.f32 0.0, %v3253
        %3255 = vmatmul.f32.gmra.mxu0 %v3140
        %v3256 = vpop.f32.mrf.mxu0
        %v3257 = vadd.f32 0.0, %v3256
        %3258 = vmatmul.f32.gmra.mxu0 %v3143
        %v3259 = vpop.f32.mrf.mxu0
        %v3260 = vadd.f32 0.0, %v3259
        %3261 = vmatmul.f32.gmra.mxu0 %v3146
        %v3262 = vpop.f32.mrf.mxu0
        %v3263 = vadd.f32 0.0, %v3262
        %3264 = vmatmul.f32.gmra.mxu0 %v3149
        %v3265 = vpop.f32.mrf.mxu0
        %v3266 = vadd.f32 0.0, %v3265
        %3267 = vmatmul.f32.gmra.mxu0 %v3152
        %v3268 = vpop.f32.mrf.mxu0
        %v3269 = vadd.f32 0.0, %v3268
        %3270 = vmatmul.f32.gmra.mxu0 %v3155
        %v3271 = vpop.f32.mrf.mxu0
        %v3272 = vadd.f32 0.0, %v3271
        %3273 = vmatmul.f32.gmra.mxu0 %v3158
        %v3274 = vpop.f32.mrf.mxu0
        %v3275 = vadd.f32 0.0, %v3274
        %3276 = vmatmul.f32.gmra.mxu0 %v3161
        %v3277 = vpop.f32.mrf.mxu0
        %v3278 = vadd.f32 0.0, %v3277
        %3279 = vmatmul.f32.gmra.mxu0 %v3164
        %v3280 = vpop.f32.mrf.mxu0
        %v3281 = vadd.f32 0.0, %v3280
        %3282 = vmatmul.f32.gmra.mxu0 %v3167
        %v3283 = vpop.f32.mrf.mxu0
        %v3284 = vadd.f32 0.0, %v3283
        %3285 = vmatmul.f32.gmra.mxu0 %v3170
        %v3286 = vpop.f32.mrf.mxu0
        %v3287 = vadd.f32 0.0, %v3286
        %3288 = vmatmul.f32.gmra.mxu0 %v3173
        %v3289 = vpop.f32.mrf.mxu0
        %v3290 = vadd.f32 0.0, %v3289
        %3291 = vmatmul.f32.gmra.mxu0 %v3176
        %v3292 = vpop.f32.mrf.mxu0
        %v3293 = vadd.f32 0.0, %v3292
        %3294 = vdwg.mxu0
        %3295 = vmatpush.msra.mxu0 0.0
        %3296 = vmatpush.msra.mxu0 0.0
        %3297 = vmatpush.msra.mxu0 0.0
        %3298 = vmatpush.msra.mxu0 0.0
        %3299 = vmatpush.msra.mxu0 0.0
        %3300 = vmatpush.msra.mxu0 0.0
        %3301 = vmatpush.msra.mxu0 0.0
        %3302 = vmatpush.msra.mxu0 0.0
        %3303 = vmatpush.msra.mxu0 0.0
        %3304 = vmatpush.msra.mxu0 0.0
        %3305 = vmatpush.msra.mxu0 0.0
        %3306 = vmatpush.msra.mxu0 0.0
        %3307 = vmatpush.msra.mxu0 0.0
        %3308 = vmatpush.msra.mxu0 0.0
        %3309 = vmatpush.msra.mxu0 0.0
        %3310 = vmatpush.msra.mxu0 %v3180
        %3311 = vmatmul.f32.gmra.mxu0 %v3083
        %v3312 = vpop.f32.mrf.mxu0
        %v3313 = vadd.f32 0.0, %v3312
        %3314 = vmatmul.f32.gmra.mxu0 %v3086
        %v3315 = vpop.f32.mrf.mxu0
        %v3316 = vadd.f32 0.0, %v3315
        %3317 = vmatmul.f32.gmra.mxu0 %v3089
        %v3318 = vpop.f32.mrf.mxu0
        %v3319 = vadd.f32 0.0, %v3318
        %3320 = vmatmul.f32.gmra.mxu0 %v3092
        %v3321 = vpop.f32.mrf.mxu0
        %v3322 = vadd.f32 0.0, %v3321
        %3323 = vmatmul.f32.gmra.mxu0 %v3095
        %v3324 = vpop.f32.mrf.mxu0
        %v3325 = vadd.f32 0.0, %v3324
        %3326 = vmatmul.f32.gmra.mxu0 %v3098
        %v3327 = vpop.f32.mrf.mxu0
        %v3328 = vadd.f32 0.0, %v3327
        %3329 = vmatmul.f32.gmra.mxu0 %v3101
        %v3330 = vpop.f32.mrf.mxu0
        %v3331 = vadd.f32 0.0, %v3330
        %3332 = vmatmul.f32.gmra.mxu0 %v3104
        %v3333 = vpop.f32.mrf.mxu0
        %v3334 = vadd.f32 0.0, %v3333
        %3335 = vmatmul.f32.gmra.mxu0 %v3107
        %v3336 = vpop.f32.mrf.mxu0
        %v3337 = vadd.f32 0.0, %v3336
        %3338 = vmatmul.f32.gmra.mxu0 %v3110
        %v3339 = vpop.f32.mrf.mxu0
        %v3340 = vadd.f32 0.0, %v3339
        %3341 = vmatmul.f32.gmra.mxu0 %v3113
        %v3342 = vpop.f32.mrf.mxu0
        %v3343 = vadd.f32 0.0, %v3342
        %3344 = vmatmul.f32.gmra.mxu0 %v3116
        %v3345 = vpop.f32.mrf.mxu0
        %v3346 = vadd.f32 0.0, %v3345
        %3347 = vmatmul.f32.gmra.mxu0 %v3119
        %v3348 = vpop.f32.mrf.mxu0
        %v3349 = vadd.f32 0.0, %v3348
        %3350 = vmatmul.f32.gmra.mxu0 %v3122
        %v3351 = vpop.f32.mrf.mxu0
        %v3352 = vadd.f32 0.0, %v3351
        %3353 = vmatmul.f32.gmra.mxu0 %v3125
        %v3354 = vpop.f32.mrf.mxu0
        %v3355 = vadd.f32 0.0, %v3354
        %3356 = vmatmul.f32.gmra.mxu0 %v3128
        %v3357 = vpop.f32.mrf.mxu0
        %v3358 = vadd.f32 0.0, %v3357
        %3359 = vmatmul.f32.gmra.mxu0 %v3131
        %v3360 = vpop.f32.mrf.mxu0
        %v3361 = vadd.f32 0.0, %v3360
        %3362 = vmatmul.f32.gmra.mxu0 %v3134
        %v3363 = vpop.f32.mrf.mxu0
        %v3364 = vadd.f32 0.0, %v3363
        %3365 = vmatmul.f32.gmra.mxu0 %v3137
        %v3366 = vpop.f32.mrf.mxu0
        %v3367 = vadd.f32 0.0, %v3366
        %3368 = vmatmul.f32.gmra.mxu0 %v3140
        %v3369 = vpop.f32.mrf.mxu0
        %v3370 = vadd.f32 0.0, %v3369
        %3371 = vmatmul.f32.gmra.mxu0 %v3143
        %v3372 = vpop.f32.mrf.mxu0
        %v3373 = vadd.f32 0.0, %v3372
        %3374 = vmatmul.f32.gmra.mxu0 %v3146
        %v3375 = vpop.f32.mrf.mxu0
        %v3376 = vadd.f32 0.0, %v3375
        %3377 = vmatmul.f32.gmra.mxu0 %v3149
        %v3378 = vpop.f32.mrf.mxu0
        %v3379 = vadd.f32 0.0, %v3378
        %3380 = vmatmul.f32.gmra.mxu0 %v3152
        %v3381 = vpop.f32.mrf.mxu0
        %v3382 = vadd.f32 0.0, %v3381
        %3383 = vmatmul.f32.gmra.mxu0 %v3155
        %v3384 = vpop.f32.mrf.mxu0
        %v3385 = vadd.f32 0.0, %v3384
        %3386 = vmatmul.f32.gmra.mxu0 %v3158
        %v3387 = vpop.f32.mrf.mxu0
        %v3388 = vadd.f32 0.0, %v3387
        %3389 = vmatmul.f32.gmra.mxu0 %v3161
        %v3390 = vpop.f32.mrf.mxu0
        %v3391 = vadd.f32 0.0, %v3390
        %3392 = vmatmul.f32.gmra.mxu0 %v3164
        %v3393 = vpop.f32.mrf.mxu0
        %v3394 = vadd.f32 0.0, %v3393
        %3395 = vmatmul.f32.gmra.mxu0 %v3167
        %v3396 = vpop.f32.mrf.mxu0
        %v3397 = vadd.f32 0.0, %v3396
        %3398 = vmatmul.f32.gmra.mxu0 %v3170
        %v3399 = vpop.f32.mrf.mxu0
        %v3400 = vadd.f32 0.0, %v3399
        %3401 = vmatmul.f32.gmra.mxu0 %v3173
        %v3402 = vpop.f32.mrf.mxu0
        %v3403 = vadd.f32 0.0, %v3402
        %3404 = vmatmul.f32.gmra.mxu0 %v3176
        %v3405 = vpop.f32.mrf.mxu0
        %v3406 = vadd.f32 0.0, %v3405
        %3407 = vdwg.mxu0
        %v3408 = vmax.f32 %v3200, %v3313
        %3409 = vmax.xlane.f32.xlu0 %v3408
        %v3410 = vpop.xlane.xlu0 %3409
        %v3411 = vmax.f32 %v3203, %v3316
        %3412 = vmax.xlane.f32.xlu0 %v3411
        %v3413 = vpop.xlane.xlu0 %3412
        %v3414 = vmax.f32 %v3206, %v3319
        %3415 = vmax.xlane.f32.xlu0 %v3414
        %v3416 = vpop.xlane.xlu0 %3415
        %v3417 = vmax.f32 %v3209, %v3322
        %3418 = vmax.xlane.f32.xlu0 %v3417
        %v3419 = vpop.xlane.xlu0 %3418
        %v3420 = vmax.f32 %v3212, %v3325
        %3421 = vmax.xlane.f32.xlu0 %v3420
        %v3422 = vpop.xlane.xlu0 %3421
        %v3423 = vmax.f32 %v3215, %v3328
        %3424 = vmax.xlane.f32.xlu0 %v3423
        %v3425 = vpop.xlane.xlu0 %3424
        %v3426 = vmax.f32 %v3218, %v3331
        %3427 = vmax.xlane.f32.xlu0 %v3426
        %v3428 = vpop.xlane.xlu0 %3427
        %v3429 = vmax.f32 %v3221, %v3334
        %3430 = vmax.xlane.f32.xlu0 %v3429
        %v3431 = vpop.xlane.xlu0 %3430
        %v3432 = vmax.f32 %v3224, %v3337
        %3433 = vmax.xlane.f32.xlu0 %v3432
        %v3434 = vpop.xlane.xlu0 %3433
        %v3435 = vmax.f32 %v3227, %v3340
        %3436 = vmax.xlane.f32.xlu0 %v3435
        %v3437 = vpop.xlane.xlu0 %3436
        %v3438 = vmax.f32 %v3230, %v3343
        %3439 = vmax.xlane.f32.xlu0 %v3438
        %v3440 = vpop.xlane.xlu0 %3439
        %v3441 = vmax.f32 %v3233, %v3346
        %3442 = vmax.xlane.f32.xlu0 %v3441
        %v3443 = vpop.xlane.xlu0 %3442
        %v3444 = vmax.f32 %v3236, %v3349
        %3445 = vmax.xlane.f32.xlu0 %v3444
        %v3446 = vpop.xlane.xlu0 %3445
        %v3447 = vmax.f32 %v3239, %v3352
        %3448 = vmax.xlane.f32.xlu0 %v3447
        %v3449 = vpop.xlane.xlu0 %3448
        %v3450 = vmax.f32 %v3242, %v3355
        %3451 = vmax.xlane.f32.xlu0 %v3450
        %v3452 = vpop.xlane.xlu0 %3451
        %v3453 = vmax.f32 %v3245, %v3358
        %3454 = vmax.xlane.f32.xlu0 %v3453
        %v3455 = vpop.xlane.xlu0 %3454
        %v3456 = vmax.f32 %v3248, %v3361
        %3457 = vmax.xlane.f32.xlu0 %v3456
        %v3458 = vpop.xlane.xlu0 %3457
        %v3459 = vmax.f32 %v3251, %v3364
        %3460 = vmax.xlane.f32.xlu0 %v3459
        %v3461 = vpop.xlane.xlu0 %3460
        %v3462 = vmax.f32 %v3254, %v3367
        %3463 = vmax.xlane.f32.xlu0 %v3462
        %v3464 = vpop.xlane.xlu0 %3463
        %v3465 = vmax.f32 %v3257, %v3370
        %3466 = vmax.xlane.f32.xlu0 %v3465
        %v3467 = vpop.xlane.xlu0 %3466
        %v3468 = vmax.f32 %v3260, %v3373
        %3469 = vmax.xlane.f32.xlu0 %v3468
        %v3470 = vpop.xlane.xlu0 %3469
        %v3471 = vmax.f32 %v3263, %v3376
        %3472 = vmax.xlane.f32.xlu0 %v3471
        %v3473 = vpop.xlane.xlu0 %3472
        %v3474 = vmax.f32 %v3266, %v3379
        %3475 = vmax.xlane.f32.xlu0 %v3474
        %v3476 = vpop.xlane.xlu0 %3475
        %v3477 = vmax.f32 %v3269, %v3382
        %3478 = vmax.xlane.f32.xlu0 %v3477
        %v3479 = vpop.xlane.xlu0 %3478
        %v3480 = vmax.f32 %v3272, %v3385
        %3481 = vmax.xlane.f32.xlu0 %v3480
        %v3482 = vpop.xlane.xlu0 %3481
        %v3483 = vmax.f32 %v3275, %v3388
        %3484 = vmax.xlane.f32.xlu0 %v3483
        %v3485 = vpop.xlane.xlu0 %3484
        %v3486 = vmax.f32 %v3278, %v3391
        %3487 = vmax.xlane.f32.xlu0 %v3486
        %v3488 = vpop.xlane.xlu0 %3487
        %v3489 = vmax.f32 %v3281, %v3394
        %3490 = vmax.xlane.f32.xlu0 %v3489
        %v3491 = vpop.xlane.xlu0 %3490
        %v3492 = vmax.f32 %v3284, %v3397
        %3493 = vmax.xlane.f32.xlu0 %v3492
        %v3494 = vpop.xlane.xlu0 %3493
        %v3495 = vmax.f32 %v3287, %v3400
        %3496 = vmax.xlane.f32.xlu0 %v3495
        %v3497 = vpop.xlane.xlu0 %3496
        %v3498 = vmax.f32 %v3290, %v3403
        %3499 = vmax.xlane.f32.xlu0 %v3498
        %v3500 = vpop.xlane.xlu0 %3499
        %v3501 = vmax.f32 %v3293, %v3406
        %3502 = vmax.xlane.f32.xlu0 %v3501
        %v3503 = vpop.xlane.xlu0 %3502
        %v3504 = vsub.f32 %v3200, %v3410
        %v3505 = vsub.f32 %v3313, %v3410
        %v3506 = vsub.f32 %v3203, %v3413
        %v3507 = vsub.f32 %v3316, %v3413
        %v3508 = vsub.f32 %v3206, %v3416
        %v3509 = vsub.f32 %v3319, %v3416
        %v3510 = vsub.f32 %v3209, %v3419
        %v3511 = vsub.f32 %v3322, %v3419
        %v3512 = vsub.f32 %v3212, %v3422
        %v3513 = vsub.f32 %v3325, %v3422
        %v3514 = vsub.f32 %v3215, %v3425
        %v3515 = vsub.f32 %v3328, %v3425
        %v3516 = vsub.f32 %v3218, %v3428
        %v3517 = vsub.f32 %v3331, %v3428
        %v3518 = vsub.f32 %v3221, %v3431
        %v3519 = vsub.f32 %v3334, %v3431
        %v3520 = vsub.f32 %v3224, %v3434
        %v3521 = vsub.f32 %v3337, %v3434
        %v3522 = vsub.f32 %v3227, %v3437
        %v3523 = vsub.f32 %v3340, %v3437
        %v3524 = vsub.f32 %v3230, %v3440
        %v3525 = vsub.f32 %v3343, %v3440
        %v3526 = vsub.f32 %v3233, %v3443
        %v3527 = vsub.f32 %v3346, %v3443
        %v3528 = vsub.f32 %v3236, %v3446
        %v3529 = vsub.f32 %v3349, %v3446
        %v3530 = vsub.f32 %v3239, %v3449
        %v3531 = vsub.f32 %v3352, %v3449
        %v3532 = vsub.f32 %v3242, %v3452
        %v3533 = vsub.f32 %v3355, %v3452
        %v3534 = vsub.f32 %v3245, %v3455
        %v3535 = vsub.f32 %v3358, %v3455
        %v3536 = vsub.f32 %v3248, %v3458
        %v3537 = vsub.f32 %v3361, %v3458
        %v3538 = vsub.f32 %v3251, %v3461
        %v3539 = vsub.f32 %v3364, %v3461
        %v3540 = vsub.f32 %v3254, %v3464
        %v3541 = vsub.f32 %v3367, %v3464
        %v3542 = vsub.f32 %v3257, %v3467
        %v3543 = vsub.f32 %v3370, %v3467
        %v3544 = vsub.f32 %v3260, %v3470
        %v3545 = vsub.f32 %v3373, %v3470
        %v3546 = vsub.f32 %v3263, %v3473
        %v3547 = vsub.f32 %v3376, %v3473
        %v3548 = vsub.f32 %v3266, %v3476
        %v3549 = vsub.f32 %v3379, %v3476
        %v3550 = vsub.f32 %v3269, %v3479
        %v3551 = vsub.f32 %v3382, %v3479
        %v3552 = vsub.f32 %v3272, %v3482
        %v3553 = vsub.f32 %v3385, %v3482
        %v3554 = vsub.f32 %v3275, %v3485
        %v3555 = vsub.f32 %v3388, %v3485
        %v3556 = vsub.f32 %v3278, %v3488
        %v3557 = vsub.f32 %v3391, %v3488
        %v3558 = vsub.f32 %v3281, %v3491
        %v3559 = vsub.f32 %v3394, %v3491
        %v3560 = vsub.f32 %v3284, %v3494
        %v3561 = vsub.f32 %v3397, %v3494
        %v3562 = vsub.f32 %v3287, %v3497
        %v3563 = vsub.f32 %v3400, %v3497
        %v3564 = vsub.f32 %v3290, %v3500
        %v3565 = vsub.f32 %v3403, %v3500
        %v3566 = vsub.f32 %v3293, %v3503
        %v3567 = vsub.f32 %v3406, %v3503
        %v3568 = vmul.f32 %v3504, 1.442695
        %v3569 = vpow.pop %v3568
        %v3570 = vmul.f32 %v3505, 1.442695
        %v3571 = vpow.pop %v3570
        %v3572 = vmul.f32 %v3506, 1.442695
        %v3573 = vpow.pop %v3572
        %v3574 = vmul.f32 %v3507, 1.442695
        %v3575 = vpow.pop %v3574
        %v3576 = vmul.f32 %v3508, 1.442695
        %v3577 = vpow.pop %v3576
        %v3578 = vmul.f32 %v3509, 1.442695
        %v3579 = vpow.pop %v3578
        %v3580 = vmul.f32 %v3510, 1.442695
        %v3581 = vpow.pop %v3580
        %v3582 = vmul.f32 %v3511, 1.442695
        %v3583 = vpow.pop %v3582
        %v3584 = vmul.f32 %v3512, 1.442695
        %v3585 = vpow.pop %v3584
        %v3586 = vmul.f32 %v3513, 1.442695
        %v3587 = vpow.pop %v3586
        %v3588 = vmul.f32 %v3514, 1.442695
        %v3589 = vpow.pop %v3588
        %v3590 = vmul.f32 %v3515, 1.442695
        %v3591 = vpow.pop %v3590
        %v3592 = vmul.f32 %v3516, 1.442695
        %v3593 = vpow.pop %v3592
        %v3594 = vmul.f32 %v3517, 1.442695
        %v3595 = vpow.pop %v3594
        %v3596 = vmul.f32 %v3518, 1.442695
        %v3597 = vpow.pop %v3596
        %v3598 = vmul.f32 %v3519, 1.442695
        %v3599 = vpow.pop %v3598
        %v3600 = vmul.f32 %v3520, 1.442695
        %v3601 = vpow.pop %v3600
        %v3602 = vmul.f32 %v3521, 1.442695
        %v3603 = vpow.pop %v3602
        %v3604 = vmul.f32 %v3522, 1.442695
        %v3605 = vpow.pop %v3604
        %v3606 = vmul.f32 %v3523, 1.442695
        %v3607 = vpow.pop %v3606
        %v3608 = vmul.f32 %v3524, 1.442695
        %v3609 = vpow.pop %v3608
        %v3610 = vmul.f32 %v3525, 1.442695
        %v3611 = vpow.pop %v3610
        %v3612 = vmul.f32 %v3526, 1.442695
        %v3613 = vpow.pop %v3612
        %v3614 = vmul.f32 %v3527, 1.442695
        %v3615 = vpow.pop %v3614
        %v3616 = vmul.f32 %v3528, 1.442695
        %v3617 = vpow.pop %v3616
        %v3618 = vmul.f32 %v3529, 1.442695
        %v3619 = vpow.pop %v3618
        %v3620 = vmul.f32 %v3530, 1.442695
        %v3621 = vpow.pop %v3620
        %v3622 = vmul.f32 %v3531, 1.442695
        %v3623 = vpow.pop %v3622
        %v3624 = vmul.f32 %v3532, 1.442695
        %v3625 = vpow.pop %v3624
        %v3626 = vmul.f32 %v3533, 1.442695
        %v3627 = vpow.pop %v3626
        %v3628 = vmul.f32 %v3534, 1.442695
        %v3629 = vpow.pop %v3628
        %v3630 = vmul.f32 %v3535, 1.442695
        %v3631 = vpow.pop %v3630
        %v3632 = vmul.f32 %v3536, 1.442695
        %v3633 = vpow.pop %v3632
        %v3634 = vmul.f32 %v3537, 1.442695
        %v3635 = vpow.pop %v3634
        %v3636 = vmul.f32 %v3538, 1.442695
        %v3637 = vpow.pop %v3636
        %v3638 = vmul.f32 %v3539, 1.442695
        %v3639 = vpow.pop %v3638
        %v3640 = vmul.f32 %v3540, 1.442695
        %v3641 = vpow.pop %v3640
        %v3642 = vmul.f32 %v3541, 1.442695
        %v3643 = vpow.pop %v3642
        %v3644 = vmul.f32 %v3542, 1.442695
        %v3645 = vpow.pop %v3644
        %v3646 = vmul.f32 %v3543, 1.442695
        %v3647 = vpow.pop %v3646
        %v3648 = vmul.f32 %v3544, 1.442695
        %v3649 = vpow.pop %v3648
        %v3650 = vmul.f32 %v3545, 1.442695
        %v3651 = vpow.pop %v3650
        %v3652 = vmul.f32 %v3546, 1.442695
        %v3653 = vpow.pop %v3652
        %v3654 = vmul.f32 %v3547, 1.442695
        %v3655 = vpow.pop %v3654
        %v3656 = vmul.f32 %v3548, 1.442695
        %v3657 = vpow.pop %v3656
        %v3658 = vmul.f32 %v3549, 1.442695
        %v3659 = vpow.pop %v3658
        %v3660 = vmul.f32 %v3550, 1.442695
        %v3661 = vpow.pop %v3660
        %v3662 = vmul.f32 %v3551, 1.442695
        %v3663 = vpow.pop %v3662
        %v3664 = vmul.f32 %v3552, 1.442695
        %v3665 = vpow.pop %v3664
        %v3666 = vmul.f32 %v3553, 1.442695
        %v3667 = vpow.pop %v3666
        %v3668 = vmul.f32 %v3554, 1.442695
        %v3669 = vpow.pop %v3668
        %v3670 = vmul.f32 %v3555, 1.442695
        %v3671 = vpow.pop %v3670
        %v3672 = vmul.f32 %v3556, 1.442695
        %v3673 = vpow.pop %v3672
        %v3674 = vmul.f32 %v3557, 1.442695
        %v3675 = vpow.pop %v3674
        %v3676 = vmul.f32 %v3558, 1.442695
        %v3677 = vpow.pop %v3676
        %v3678 = vmul.f32 %v3559, 1.442695
        %v3679 = vpow.pop %v3678
        %v3680 = vmul.f32 %v3560, 1.442695
        %v3681 = vpow.pop %v3680
        %v3682 = vmul.f32 %v3561, 1.442695
        %v3683 = vpow.pop %v3682
        %v3684 = vmul.f32 %v3562, 1.442695
        %v3685 = vpow.pop %v3684
        %v3686 = vmul.f32 %v3563, 1.442695
        %v3687 = vpow.pop %v3686
        %v3688 = vmul.f32 %v3564, 1.442695
        %v3689 = vpow.pop %v3688
        %v3690 = vmul.f32 %v3565, 1.442695
        %v3691 = vpow.pop %v3690
        %v3692 = vmul.f32 %v3566, 1.442695
        %v3693 = vpow.pop %v3692
        %v3694 = vmul.f32 %v3567, 1.442695
        %v3695 = vpow.pop %v3694
        %3696 = vmatpush.xpose.msra.mxu0 %v3629
        %3697 = vmatpush.xpose.msra.mxu0 %v3625
        %3698 = vmatpush.xpose.msra.mxu0 %v3621
        %3699 = vmatpush.xpose.msra.mxu0 %v3617
        %3700 = vmatpush.xpose.msra.mxu0 %v3613
        %3701 = vmatpush.xpose.msra.mxu0 %v3609
        %3702 = vmatpush.xpose.msra.mxu0 %v3605
        %3703 = vmatpush.xpose.msra.mxu0 %v3601
        %3704 = vmatpush.xpose.msra.mxu0 %v3597
        %3705 = vmatpush.xpose.msra.mxu0 %v3593
        %3706 = vmatpush.xpose.msra.mxu0 %v3589
        %3707 = vmatpush.xpose.msra.mxu0 %v3585
        %3708 = vmatpush.xpose.msra.mxu0 %v3581
        %3709 = vmatpush.xpose.msra.mxu0 %v3577
        %3710 = vmatpush.xpose.msra.mxu0 %v3573
        %3711 = vmatpush.xpose.msra.mxu0 %v3569
        %3712 = vmatmul.f32.gmra.mxu0 %v3010
        %v3713 = vpop.f32.mrf.mxu0
        %v3714 = vadd.f32 0.0, %v3713
        %3715 = vdwg.mxu0
        %3716 = vmatpush.xpose.msra.mxu0 %v3631
        %3717 = vmatpush.xpose.msra.mxu0 %v3627
        %3718 = vmatpush.xpose.msra.mxu0 %v3623
        %3719 = vmatpush.xpose.msra.mxu0 %v3619
        %3720 = vmatpush.xpose.msra.mxu0 %v3615
        %3721 = vmatpush.xpose.msra.mxu0 %v3611
        %3722 = vmatpush.xpose.msra.mxu0 %v3607
        %3723 = vmatpush.xpose.msra.mxu0 %v3603
        %3724 = vmatpush.xpose.msra.mxu0 %v3599
        %3725 = vmatpush.xpose.msra.mxu0 %v3595
        %3726 = vmatpush.xpose.msra.mxu0 %v3591
        %3727 = vmatpush.xpose.msra.mxu0 %v3587
        %3728 = vmatpush.xpose.msra.mxu0 %v3583
        %3729 = vmatpush.xpose.msra.mxu0 %v3579
        %3730 = vmatpush.xpose.msra.mxu0 %v3575
        %3731 = vmatpush.xpose.msra.mxu0 %v3571
        %3732 = vmatmul.f32.gmra.mxu0 %v3011
        %v3733 = vpop.f32.mrf.mxu0
        %v3734 = vadd.f32 %v3714, %v3733
        %3735 = vdwg.mxu0
        %3736 = vmatpush.xpose.msra.mxu0 %v3693
        %3737 = vmatpush.xpose.msra.mxu0 %v3689
        %3738 = vmatpush.xpose.msra.mxu0 %v3685
        %3739 = vmatpush.xpose.msra.mxu0 %v3681
        %3740 = vmatpush.xpose.msra.mxu0 %v3677
        %3741 = vmatpush.xpose.msra.mxu0 %v3673
        %3742 = vmatpush.xpose.msra.mxu0 %v3669
        %3743 = vmatpush.xpose.msra.mxu0 %v3665
        %3744 = vmatpush.xpose.msra.mxu0 %v3661
        %3745 = vmatpush.xpose.msra.mxu0 %v3657
        %3746 = vmatpush.xpose.msra.mxu0 %v3653
        %3747 = vmatpush.xpose.msra.mxu0 %v3649
        %3748 = vmatpush.xpose.msra.mxu0 %v3645
        %3749 = vmatpush.xpose.msra.mxu0 %v3641
        %3750 = vmatpush.xpose.msra.mxu0 %v3637
        %3751 = vmatpush.xpose.msra.mxu0 %v3633
        %3752 = vmatmul.f32.gmra.mxu0 %v3010
        %v3753 = vpop.f32.mrf.mxu0
        %v3754 = vadd.f32 0.0, %v3753
        %3755 = vdwg.mxu0
        %3756 = vmatpush.xpose.msra.mxu0 %v3695
        %3757 = vmatpush.xpose.msra.mxu0 %v3691
        %3758 = vmatpush.xpose.msra.mxu0 %v3687
        %3759 = vmatpush.xpose.msra.mxu0 %v3683
        %3760 = vmatpush.xpose.msra.mxu0 %v3679
        %3761 = vmatpush.xpose.msra.mxu0 %v3675
        %3762 = vmatpush.xpose.msra.mxu0 %v3671
        %3763 = vmatpush.xpose.msra.mxu0 %v3667
        %3764 = vmatpush.xpose.msra.mxu0 %v3663
        %3765 = vmatpush.xpose.msra.mxu0 %v3659
        %3766 = vmatpush.xpose.msra.mxu0 %v3655
        %3767 = vmatpush.xpose.msra.mxu0 %v3651
        %3768 = vmatpush.xpose.msra.mxu0 %v3647
        %3769 = vmatpush.xpose.msra.mxu0 %v3643
        %3770 = vmatpush.xpose.msra.mxu0 %v3639
        %3771 = vmatpush.xpose.msra.mxu0 %v3635
        %3772 = vmatmul.f32.gmra.mxu0 %v3011
        %v3773 = vpop.f32.mrf.mxu0
        %v3774 = vadd.f32 %v3754, %v3773
        %3775 = vdwg.mxu0
        %v3776 = vrcp.pop %v3734
        %v3777 = vmul.f32 %v3734, %v3776
        %v3778 = vsub.f32 1.0, %v3777
        %v3779 = vmul.f32 %v3776, %v3778
        %v3780 = vadd.f32 %v3776, %v3779
        %vm3781 = vweird.f32 %v3734
        %vm3782 = vweird.f32 %v3776
        %vm3783 = vmor %vm3781, %vm3782
        %v3784 = vsel %vm3783, %v3776, %v3780
        %v3785 = vand.u32 2147483647, %v3734
        %vm3786 = vcmp.eq.f32.partialorder %v3785, 8.507059e+37
        %v3787 = vand.u32 %v3734, 2147483648
        %v3788 = vor.u32 1.1754944e-38, %v3787
        %v3789 = vsel %vm3786, %v3788, %v3784
        %v3790 = vrcp.pop %v3774
        %v3791 = vmul.f32 %v3774, %v3790
        %v3792 = vsub.f32 1.0, %v3791
        %v3793 = vmul.f32 %v3790, %v3792
        %v3794 = vadd.f32 %v3790, %v3793
        %vm3795 = vweird.f32 %v3774
        %vm3796 = vweird.f32 %v3790
        %vm3797 = vmor %vm3795, %vm3796
        %v3798 = vsel %vm3797, %v3790, %v3794
        %v3799 = vand.u32 2147483647, %v3774
        %vm3800 = vcmp.eq.f32.partialorder %v3799, 8.507059e+37
        %v3801 = vand.u32 %v3774, 2147483648
        %v3802 = vor.u32 1.1754944e-38, %v3801
        %v3803 = vsel %vm3800, %v3802, %v3798
        %v3804 = vperm.slane %v3789, 2
        %v3805 = vperm.slane %v3803, 2
        %v3806 = vmul.f32 %v3734, %v3804
        %v3807 = vmul.f32 %v3774, %v3805
        %v3810 = vrot.slane %v3806, 2
        %v3811 = vrot.slane %v3807, 2
        %3814 = vst [vmem:[#allocation2] sm:$0xc0] %v3810
        %3815 = vst [vmem:[#allocation2 + $0x8] sm:$0xc0] %v3811
        %v3816 = vld [vmem:[%s8] sm:$0xff]
        %v3817 = vld [vmem:[#allocation2] sm:$0xff]
        %v3818 = vld [vmem:[#allocation2 + $0x8] sm:$0xff]
        %v3819 = vld [vmem:[%s9] sm:$0xff]
        %3821 = vset.pattern.permute.xlu0 0
        %3822 = vperm.xlu0 %3821, %v3819
        %v3823 = vpop.permute.xlu0 %3822
        %v3826 = vsel %vm461, %v3816, 0
        %3828 = vmatpush.msra.mxu0 0.0
        %3829 = vmatpush.msra.mxu0 0.0
        %3830 = vmatpush.msra.mxu0 0.0
        %3831 = vmatpush.msra.mxu0 0.0
        %3832 = vmatpush.msra.mxu0 0.0
        %3833 = vmatpush.msra.mxu0 0.0
        %3834 = vmatpush.msra.mxu0 0.0
        %3835 = vmatpush.msra.mxu0 0.0
        %3836 = vmatpush.msra.mxu0 0.0
        %3837 = vmatpush.msra.mxu0 0.0
        %3838 = vmatpush.msra.mxu0 0.0
        %3839 = vmatpush.msra.mxu0 0.0
        %3840 = vmatpush.msra.mxu0 0.0
        %3841 = vmatpush.msra.mxu0 0.0
        %3842 = vmatpush.msra.mxu0 0.0
        %3843 = vmatpush.msra.mxu0 %v3817
        %3844 = vmatmul.f32.gmra.mxu0 %v3826
        %v3845 = vpop.f32.mrf.mxu0
        %v3846 = vadd.f32 %v3823, %v3845
        %3847 = vdwg.mxu0
        %3848 = vmatpush.msra.mxu0 0.0
        %3849 = vmatpush.msra.mxu0 0.0
        %3850 = vmatpush.msra.mxu0 0.0
        %3851 = vmatpush.msra.mxu0 0.0
        %3852 = vmatpush.msra.mxu0 0.0
        %3853 = vmatpush.msra.mxu0 0.0
        %3854 = vmatpush.msra.mxu0 0.0
        %3855 = vmatpush.msra.mxu0 0.0
        %3856 = vmatpush.msra.mxu0 0.0
        %3857 = vmatpush.msra.mxu0 0.0
        %3858 = vmatpush.msra.mxu0 0.0
        %3859 = vmatpush.msra.mxu0 0.0
        %3860 = vmatpush.msra.mxu0 0.0
        %3861 = vmatpush.msra.mxu0 0.0
        %3862 = vmatpush.msra.mxu0 0.0
        %3863 = vmatpush.msra.mxu0 %v3818
        %3864 = vmatmul.f32.gmra.mxu0 %v3826
        %v3865 = vpop.f32.mrf.mxu0
        %v3866 = vadd.f32 %v3823, %v3865
        %3867 = vdwg.mxu0
        %v3868 = vld [vmem:[%s6] sm:$0xff]
        %v3869 = vld [vmem:[%s7] sm:$0xff]
        %v3871 = vsel %vm461, %v3868, 0
        %3873 = vmatpush.msra.mxu0 0.0
        %3874 = vmatpush.msra.mxu0 0.0
        %3875 = vmatpush.msra.mxu0 0.0
        %3876 = vmatpush.msra.mxu0 0.0
        %3877 = vmatpush.msra.mxu0 0.0
        %3878 = vmatpush.msra.mxu0 0.0
        %3879 = vmatpush.msra.mxu0 0.0
        %3880 = vmatpush.msra.mxu0 0.0
        %3881 = vmatpush.msra.mxu0 0.0
        %3882 = vmatpush.msra.mxu0 0.0
        %3883 = vmatpush.msra.mxu0 0.0
        %3884 = vmatpush.msra.mxu0 0.0
        %3885 = vmatpush.msra.mxu0 0.0
        %3886 = vmatpush.msra.mxu0 0.0
        %3887 = vmatpush.msra.mxu0 0.0
        %3888 = vmatpush.msra.mxu0 %v583
        %3889 = vmatmul.f32.gmra.mxu0 %v3871
        %v3890 = vpop.f32.mrf.mxu0
        %v3891 = vadd.f32 %v3869, %v3890
        %3892 = vdwg.mxu0
        %v3893 = vadd.f32 %v3846, %v3866
        %3894 = vadd.xlane.f32.xlu0 %v3893
        %v3895 = vpop.xlane.xlu0 %3894
        %v3896 = vmul.f32 %v3895, %v582
        %v3897 = vld [vmem:[%s10] sm:$0xff]
        %v3898 = vld [vmem:[%s11] sm:$0xff]
        %vm3899 = vcmask 130048
        %v3901 = vsel %vm3899, %v3897, 0
        %3903 = vmatpush.msra.mxu0 0.0
        %3904 = vmatpush.msra.mxu0 0.0
        %3905 = vmatpush.msra.mxu0 0.0
        %3906 = vmatpush.msra.mxu0 0.0
        %3907 = vmatpush.msra.mxu0 0.0
        %3908 = vmatpush.msra.mxu0 0.0
        %3909 = vmatpush.msra.mxu0 0.0
        %3910 = vmatpush.msra.mxu0 0.0
        %3911 = vmatpush.msra.mxu0 0.0
        %3912 = vmatpush.msra.mxu0 0.0
        %3913 = vmatpush.msra.mxu0 0.0
        %3914 = vmatpush.msra.mxu0 0.0
        %3915 = vmatpush.msra.mxu0 0.0
        %3916 = vmatpush.msra.mxu0 0.0
        %3917 = vmatpush.msra.mxu0 %v3896
        %3918 = vmatpush.msra.mxu0 %v3891
        %3919 = vmatmul.f32.gmra.mxu0 %v3901
        %v3920 = vpop.f32.mrf.mxu0
        %v3921 = vadd.f32 %v3898, %v3920
        %3922 = vdwg.mxu0
        %v3923 = vxor.u32 %v3921, 2147483648
        %v3924 = vmul.f32 %v3923, 1.442695
        %v3925 = vpow.pop %v3924
        %v3926 = vadd.f32 %v3925, 1.0
        %v3927 = vrcp.pop %v3926
        %v3928 = vmul.f32 %v3926, %v3927
        %v3929 = vsub.f32 1.0, %v3928
        %v3930 = vmul.f32 %v3927, %v3929
        %v3931 = vadd.f32 %v3927, %v3930
        %vm3932 = vweird.f32 %v3926
        %vm3933 = vweird.f32 %v3927
        %vm3934 = vmor %vm3932, %vm3933
        %v3935 = vsel %vm3934, %v3927, %v3931
        %v3936 = vand.u32 2147483647, %v3926
        %vm3937 = vcmp.eq.f32.partialorder %v3936, 8.507059e+37
        %v3938 = vand.u32 %v3926, 2147483648
        %v3939 = vor.u32 1.1754944e-38, %v3938
        %v3940 = vsel %vm3937, %v3939, %v3935
        %v3941 = vmul.f32 1.0, %v3940
        %v3942 = vld [vmem:[%s451] sm:$0xff]
        %v3943 = vld [vmem:[%s451 + $0x8] sm:$0xff]
        %3945 = vset.pattern.permute.xlu0 0
        %3946 = vperm.xlu0 %3945, %v3941
        %v3947 = vpop.permute.xlu0 %3946
        %v3949 = vmul.f32 %v3947, %v3846
        %v3950 = vmul.f32 %v3947, %v3866
        %v3951 = vadd.f32 %v3942, %v3949
        %v3952 = vadd.f32 %v3943, %v3950
        %3953 = vst [vmem:[%s446] sm:$0xff] %v3951
        %3954 = vst [vmem:[%s446 + $0x8] sm:$0xff] %v3952
        %s3955 = sand.u32 %s299, 1
        %s3956 = scalar_lea.sflag [#allocation5], %s3955
        %s3957 = sand.u32 %s299, 1
        %s3958 = smul.addr %s3957, 16
        %s3959 = scalar_lea.vmem [#allocation6], %s3958
        // Predicated region
        $region73: #{tpu_custom_call.1} parent=67 // pred_check
          %p3960 = pneg %p309
        $region74: #{tpu_custom_call.1} parent=67 // pred_check_branch
          %3962 = sbr.rel (%p3960) target = $region76
        $region75: #{tpu_custom_call.1} parent=67 // pred_region
          %3964 = vsyncadd %s3956, 0
          %s3965 = smul.addr %s29, 2
          %s3966 = smul.addr %s3965, 8
          %s3967 = scalar_lea.hbm %s12, %s3966
          %s3969 = sshll.u32 %s3959, 4
          %s3970 = int_to_ptr.vmem [resolvable:$true] %s3969
          %s3971 = sshll.u32 %s3967, 4
          %s3972 = int_to_ptr.hbm [resolvable:$true] %s3971
          %3974 = dma.vmem_to_hbm [thread:$0]  %s3970, 256, %s3972, %s3956
        $region76: #{tpu_custom_call.1} parent=67 // pred_fallthru
          _
      $region68: #{tpu_custom_call.1} parent=5 // pred_fallthru
        _
      %p3975 = scmp.le.s32.totalorder 2, %s24
      // Predicated region
      $region77: #{tpu_custom_call.1} parent=5 // pred_check
        %p3976 = pneg %p3975
      $region78: #{tpu_custom_call.1} parent=5 // pred_check_branch
        %3978 = sbr.rel (%p3976) target = $region80
      $region79: #{tpu_custom_call.1} parent=5 // pred_region
        %s3979 = ssub.s32 %s24, 2
        // Predicated region
        $region81: #{tpu_custom_call.1} parent=79 // pred_check
          %p3980 = pneg %p315
        $region82: #{tpu_custom_call.1} parent=79 // pred_check_branch
          %3982 = sbr.rel (%p3980) target = $region84
        $region83: #{tpu_custom_call.1} parent=79 // pred_region
          %s3983 = sand.u32 %s300, 1
          %s3984 = scalar_lea.sflag [#allocation5], %s3983
          %s3985 = sand.u32 %s300, 1
          %s3986 = smul.addr %s3985, 16
          %s3987 = scalar_lea.vmem [#allocation6], %s3986
          %3989 = dma.done %s3984, 256
        $region84: #{tpu_custom_call.1} parent=79 // pred_fallthru
          _
      $region80: #{tpu_custom_call.1} parent=5 // pred_fallthru
        _
    $region6: #{tpu_custom_call.1} parent=1 // loop_footer
      %s28 = sadd.s32 1, %s24
    $region7: #{tpu_custom_call.1} parent=1 // loop_footer_branch
      %23 = sbr.rel target = $region3
    $region8: #{tpu_custom_call.1} parent=1 // loop_exit
      _
    %3990 = vsyncpa [#allocation4], 1
    %s3991 = scalar_lea.sflag [#allocation4], 1
    %3992 = vsyncpa %s3991, 1
    %3993 = vsyncpa [#allocation5], 1
    %s3994 = scalar_lea.sflag [#allocation5], 1
    %3995 = vsyncpa %s3994, 1

</llo_original>
